<compile_context>
chip_gen: v7x
topology: tpu7x:2x2x1
jax: 0.10.0
libtpu: 0.0.40
codegen_flags: <defaults>
</compile_context>

<pallas_src>
import functools
import math

import jax
import jax.numpy as jnp
import numpy as np
from jax.experimental import pallas as pl
from jax.experimental.pallas import tpu as pltpu


# ----------------------------------------------------------------------------
# Shared math helpers (used by both the kernels and the pure-JAX reference)
# ----------------------------------------------------------------------------
def _gelu_tanh(x):
    # TODO(synk): PyTorch nn.GELU defaults to the exact erf form; the tanh
    # approximation is used here (and mirrored in the reference below).
    c = math.sqrt(2.0 / math.pi)
    return 0.5 * x * (1.0 + jnp.tanh(c * (x + 0.044715 * x * x * x)))


def _layernorm(x, g, b, eps=1e-5):
    mu = jnp.mean(x, axis=-1, keepdims=True)
    var = jnp.mean(jnp.square(x - mu), axis=-1, keepdims=True)
    return (x - mu) * jax.lax.rsqrt(var + eps) * g + b


def relative_embedding(rel_params, window_size):
    """rel_params: (n_heads, 2*ws-1, 2*ws-1) -> (n_heads, ws*ws, ws*ws)."""
    ws = window_size
    cord = np.array([[i, j] for i in range(ws) for j in range(ws)])
    relation = cord[:, None, :] - cord[None, :, :] + ws - 1       # (P, P, 2)
    return rel_params[:, relation[:, :, 0], relation[:, :, 1]]    # (nh, P, P)


def generate_mask_bias(h_windows, w_windows, p, shift):
    """Additive SW-MSA bias per window: (nW, p*p, p*p); 0 allowed, -1e30 masked."""
    m = np.zeros((h_windows, w_windows, p, p, p, p), dtype=bool)
    s = p - shift
    m[-1, :, :s, :, s:, :] = True
    m[-1, :, s:, :, :s, :] = True
    m[:, -1, :, :s, :, s:] = True
    m[:, -1, :, s:, :, :s] = True
    m = m.reshape(h_windows * w_windows, p * p, p * p)
    return jnp.where(m, jnp.float32(-1e30), jnp.float32(0.0))


# ----------------------------------------------------------------------------
# BlockSpec / tile-size helpers (generation-aware VMEM budgets)
# ----------------------------------------------------------------------------
def _const_spec(shape):
    """Grid-invariant operand: constant index map + single-buffered."""
    zeros = (0,) * len(shape)
    imap = lambda *_: zeros
    try:
        return pl.BlockSpec(shape, imap, pipeline_mode=pl.Buffered(1))
    except Exception:       # pragma: no cover - older jax without pipeline_mode
        return pl.BlockSpec(shape, imap)


def _divisors(n):
    return [d for d in range(1, n + 1) if n % d == 0]


def _pick_window_tile(windows_per_image, total_windows, tokens_per_window,
                      channels, n_heads):
    """Windows per tile: divides windows_per_image, (tile*P) % 8 == 0, fits a
    conservative ~8 MiB working-set budget, aims for GEMM-M >= 256 and >= 2
    grid steps (megacore / 2 TCs)."""
    P, C = tokens_per_window, channels
    cands = [d for d in _divisors(windows_per_image) if (d * P) % 8 == 0]
    if not cands:
        # TODO(synk): window sizes whose token count never reaches a multiple
        # of 8 fall back to one image worth of windows per tile.
        cands = [windows_per_image]
    per_win = 4 * P * (10 * C + 3 * n_heads * P)      # fp32-ish working set
    bytes_cap = max(1, (8 * 1024 * 1024) // max(1, per_win))
    m_target = -(-256 // P)                           # fill MXU M dimension
    steps_cap = max(1, total_windows // 2)            # keep >= 2 grid steps
    cap = min(bytes_cap, max(m_target, steps_cap))
    ok = [d for d in cands if d <= cap]
    return max(ok) if ok else min(cands)


def _pick_hidden_tile(hidden, channels):
    """MLP hidden-dim chunk so streamed bf16 w1/w2 chunks stay a few MiB."""
    if hidden <= 1024 or hidden % 128 != 0:
        return hidden
    budget = 6 * 1024 * 1024
    per_col = 2 * 2 * channels                        # bf16 w1 col + w2 row
    cap = max(128, (budget // per_col) // 128 * 128)
    d0 = min(cap, hidden)
    for c in range(d0 - d0 % 128, 127, -128):
        if hidden % c == 0:
            return c
    return hidden


def _pick_token_tile(n_tok, channels, hidden_tile):
    if n_tok % 8 != 0:
        return n_tok                                  # single full block (legal)
    per_row = 4 * (3 * channels + hidden_tile) + 2 * (channels + hidden_tile)
    cap = max(8, (8 * 1024 * 1024) // per_row)
    cap = min(cap, 1024)
    if n_tok >= 16:
        cap = min(cap, n_tok // 2)                    # >= 2 grid steps
    for d in range(min(cap, n_tok), 7, -1):
        if n_tok % d == 0 and d % 8 == 0:
            return d
    return n_tok


_VMEM_LIMIT = 64 * 1024 * 1024


# ----------------------------------------------------------------------------
# Kernel 1: LayerNorm + windowed multi-head self-attention + residual
# ----------------------------------------------------------------------------
def _wmsa_attn_kernel(x_ref, g1_ref, b1_ref, wqkv_ref, bqkv_ref, rel_ref,
                      *rest, n_heads, head_dim, tokens_per_window, scale,
                      has_mask):
    if has_mask:
        mask_ref, wo_ref, bo_ref, o_ref = rest
    else:
        wo_ref, bo_ref, o_ref = rest

    P = tokens_per_window
    rows, C = x_ref.shape                               # rows = TG * P
    TG = rows // P

    x = x_ref[...].astype(jnp.float32)                  # (rows, C)

    # LayerNorm (ln1); statistics in fp32.
    mu = jnp.mean(x, axis=-1, keepdims=True)
    var = jnp.mean(jnp.square(x - mu), axis=-1, keepdims=True)
    xn = (x - mu) * jax.lax.rsqrt(var + 1e-5) * g1_ref[...] + b1_ref[...]

    # Fused QKV projection: one lane-dense (rows, C) x (C, 3C) GEMM.
    qkv = jnp.dot(xn.astype(jnp.bfloat16), wqkv_ref[...],
                  preferred_element_type=jnp.float32) + bqkv_ref[...]

    # Regroup to a single (n_heads*TG, P, head_dim) batch (head-major) so the
    # attention matmuls run as one batched 3-D einsum each.
    def heads(group):
        base = group * C
        parts = [qkv[:, base + h * head_dim: base + (h + 1) * head_dim]
                 for h in range(n_heads)]
        y = jnp.stack(parts, axis=0)                    # (nh, rows, hd)
        return y.reshape(n_heads * TG, P, head_dim).astype(jnp.bfloat16)

    q = heads(0)
    k = heads(1)
    v = heads(2)

    sim = jnp.einsum('bpc,bqc->bpq', q, k,
                     preferred_element_type=jnp.float32) * scale
    sim = sim.reshape(n_heads, TG, P, P)
    sim = sim + rel_ref[...][:, None]                   # (nh, 1, P, P)
    if has_mask:
        sim = sim + mask_ref[...][None]                 # (1, TG, P, P)

    # Softmax in fp32; denominator via the (free) EUP approximate reciprocal.
    m = jnp.max(sim, axis=-1, keepdims=True)
    e = jnp.exp(sim - m)
    s = jnp.sum(e, axis=-1, keepdims=True)
    probs = e * pl.reciprocal(s, approx=True)
    probs = probs.reshape(n_heads * TG, P, P).astype(jnp.bfloat16)

    ctx = jnp.einsum('bpq,bqc->bpc', probs, v,
                     preferred_element_type=jnp.float32)   # (nh*TG, P, hd)
    ctx = ctx.reshape(n_heads, rows, head_dim)
    ctx = jnp.concatenate([ctx[h] for h in range(n_heads)], axis=-1)  # (rows, C)

    # Fused output projection: one (rows, C) x (C, C) GEMM, then residual.
    out = jnp.dot(ctx.astype(jnp.bfloat16), wo_ref[...],
                  preferred_element_type=jnp.float32) + bo_ref[...]
    o_ref[...] = (x + out).astype(o_ref.dtype)


def wmsa_attention_windows(x2d, ln1_g, ln1_b, wqkv, bqkv, rel_bias, mask_nw,
                           wo, bo, *, n_heads, head_dim, windows_per_image,
                           tokens_per_window):
    """x2d: (G*P, C) windowed tokens (2-D, lane-dense). Returns x + WMSA(LN1(x))."""
    P = tokens_per_window
    rows, C = x2d.shape
    G = rows // P
    nW = windows_per_image
    has_mask = mask_nw is not None

    TG = _pick_window_tile(nW, G, P, C, n_heads)
    grid = (G // TG,)
    blocks_per_image = nW // TG
    scale = float(head_dim) ** -0.5

    in_specs = [
        pl.BlockSpec((TG * P, C), lambda g: (g, 0)),           # x (streamed)
        _const_spec((1, C)),                                   # ln1 gamma
        _const_spec((1, C)),                                   # ln1 beta
        _const_spec((C, 3 * C)),                               # fused qkv W (bf16)
        _const_spec((1, 3 * C)),                               # qkv bias
        _const_spec((n_heads, P, P)),                          # rel-pos bias
    ]
    inputs = [x2d, ln1_g.reshape(1, C), ln1_b.reshape(1, C),
              wqkv.astype(jnp.bfloat16), bqkv.reshape(1, 3 * C), rel_bias]
    if has_mask:
        in_specs.append(
            pl.BlockSpec((TG, P, P),
                         lambda g: (g % blocks_per_image, 0, 0)))  # SW mask (per image)
        inputs.append(mask_nw)
    in_specs += [_const_spec((C, C)), _const_spec((1, C))]     # proj W (bf16), b
    inputs += [wo.astype(jnp.bfloat16), bo.reshape(1, C)]

    kernel = functools.partial(
        _wmsa_attn_kernel, n_heads=n_heads, head_dim=head_dim,
        tokens_per_window=P, scale=scale, has_mask=has_mask)

    flops = (2 * G * P * C * 3 * C + 4 * G * n_heads * P * P * head_dim
             + 2 * G * P * C * C)
    bytes_accessed = (4 * 2 * G * P * C + 2 * 4 * C * C + 4 * n_heads * P * P
                      + (4 * nW * P * P if has_mask else 0) + 4 * 8 * C)
    cost = pl.CostEstimate(flops=int(flops),
                           transcendentals=int(G * n_heads * P * P),
                           bytes_accessed=int(bytes_accessed))

    return pl.pallas_call(
        kernel,
        out_shape=jax.ShapeDtypeStruct((rows, C), x2d.dtype),
        grid_spec=pltpu.PrefetchScalarGridSpec(
            num_scalar_prefetch=0,
            grid=grid,
            in_specs=in_specs,
            out_specs=pl.BlockSpec((TG * P, C), lambda g: (g, 0)),
        ),
        compiler_params=pltpu.CompilerParams(
            dimension_semantics=("parallel",),
            vmem_limit_bytes=_VMEM_LIMIT),
        cost_estimate=cost,
    )(*inputs)


# ----------------------------------------------------------------------------
# Kernel 2: LayerNorm + MLP (Linear -> GELU -> Linear) + residual,
#           hidden dimension streamed in chunks with an fp32 accumulator.
# ----------------------------------------------------------------------------
def _mlp_kernel(x_ref, g_ref, b_ref, w1_ref, b1_ref, w2_ref, b2_ref, o_ref,
                xn_ref, acc_ref):
    j = pl.program_id(1)

    @pl.when(j == 0)
    def _():
        x = x_ref[...].astype(jnp.float32)
        mu = jnp.mean(x, axis=-1, keepdims=True)
        var = jnp.mean(jnp.square(x - mu), axis=-1, keepdims=True)
        xn = (x - mu) * jax.lax.rsqrt(var + 1e-5) * g_ref[...] + b_ref[...]
        xn_ref[...] = xn.astype(xn_ref.dtype)            # bf16 matmul operand
        acc_ref[...] = jnp.zeros_like(acc_ref)

    h = jnp.dot(xn_ref[...], w1_ref[...],
                preferred_element_type=jnp.float32) + b1_ref[...]
    h = _gelu_tanh(h)                                     # fp32 GELU
    acc_ref[...] += jnp.dot(h.astype(jnp.bfloat16), w2_ref[...],
                            preferred_element_type=jnp.float32)

    @pl.when(j == pl.num_programs(1) - 1)
    def _():
        o_ref[...] = (x_ref[...].astype(jnp.float32) + acc_ref[...]
                      + b2_ref[...]).astype(o_ref.dtype)


def mlp_tokens(x_tok, ln2_g, ln2_b, w1, b1, w2, b2):
    """x_tok: (N, C). Returns x_tok + MLP(LN2(x_tok))."""
    N, C = x_tok.shape
    Ch = w1.shape[1]
    TC = _pick_hidden_tile(Ch, C)
    TM = _pick_token_tile(N, C, TC)
    grid = (N // TM, Ch // TC)

    cost = pl.CostEstimate(
        flops=int(4 * N * C * Ch), transcendentals=int(N * Ch),
        bytes_accessed=int(4 * 2 * N * C + 2 * 2 * C * Ch + 4 * (Ch + 3 * C)))

    return pl.pallas_call(
        _mlp_kernel,
        out_shape=jax.ShapeDtypeStruct((N, C), x_tok.dtype),
        grid_spec=pltpu.PrefetchScalarGridSpec(
            num_scalar_prefetch=0,
            grid=grid,
            in_specs=[
                pl.BlockSpec((TM, C), lambda i, j: (i, 0)),    # x (resident over j)
                _const_spec((1, C)),                           # ln2 gamma
                _const_spec((1, C)),                           # ln2 beta
                pl.BlockSpec((C, TC), lambda i, j: (0, j)),    # w1 chunk (bf16)
                pl.BlockSpec((1, TC), lambda i, j: (0, j)),    # b1 chunk
                pl.BlockSpec((TC, C), lambda i, j: (j, 0)),    # w2 chunk (bf16)
                _const_spec((1, C)),                           # b2
            ],
            out_specs=pl.BlockSpec((TM, C), lambda i, j: (i, 0)),
            scratch_shapes=[pltpu.VMEM((TM, C), jnp.bfloat16),  # LN(x) (reused)
                            pltpu.VMEM((TM, C), jnp.float32)],  # fp32 accumulator
        ),
        compiler_params=pltpu.CompilerParams(
            dimension_semantics=("parallel", "arbitrary"),
            vmem_limit_bytes=_VMEM_LIMIT),
        cost_estimate=cost,
    )(x_tok, ln2_g.reshape(1, C), ln2_b.reshape(1, C),
      w1.astype(jnp.bfloat16), b1.reshape(1, Ch),
      w2.astype(jnp.bfloat16), b2.reshape(1, C))


# ----------------------------------------------------------------------------
# Full Block forward (Pallas kernels + layout plumbing)
# ----------------------------------------------------------------------------
def block_forward(x, params, *, window_size, head_dim, block_type):
    """x: (B, H, W, C). Returns x + WMSA(LN1(x)), then + MLP(LN2(.))."""
    B, H, W, C = x.shape
    assert C % head_dim == 0
    n_heads = C // head_dim
    ws = window_size
    assert H % ws == 0 and W % ws == 0
    P = ws * ws
    shift = ws // 2 if block_type != 'W' else 0

    y = x
    if shift:
        y = jnp.roll(y, shift=(-shift, -shift), axis=(1, 2))
    hW, wW = H // ws, W // ws
    G = B * hW * wW
    y2d = (y.reshape(B, hW, ws, wW, ws, C)
            .transpose(0, 1, 3, 2, 4, 5)
            .reshape(G * P, C))

    rel_bias = relative_embedding(params['rel_pos'], ws)          # (nh, P, P)
    mask_nw = generate_mask_bias(hW, wW, ws, shift) if shift else None  # (nW,P,P)

    attn2d = wmsa_attention_windows(
        y2d, params['ln1_g'], params['ln1_b'], params['wqkv'], params['bqkv'],
        rel_bias, mask_nw, params['wo'], params['bo'],
        n_heads=n_heads, head_dim=head_dim, windows_per_image=hW * wW,
        tokens_per_window=P)

    z = (attn2d.reshape(B, hW, wW, ws, ws, C)
               .transpose(0, 1, 3, 2, 4, 5)
               .reshape(B, H, W, C))
    if shift:
        z = jnp.roll(z, shift=(shift, shift), axis=(1, 2))

    # drop_path == 0.0 -> identity (DropPath is a no-op for this forward).
    out = mlp_tokens(z.reshape(B * H * W, C), params['ln2_g'], params['ln2_b'],
                     params['w1'], params['b1'], params['w2'], params['b2'])
    return out.reshape(B, H, W, C)


# ----------------------------------------------------------------------------
# Pure-JAX reference (mirrors the PyTorch Block / WMSA forward)
# ----------------------------------------------------------------------------
def block_reference(x, params, *, window_size, head_dim, block_type):
    B, H, W, C = x.shape
    nh = C // head_dim
    ws = window_size
    P = ws * ws
    hp = jax.lax.Precision.HIGHEST
    shift = ws // 2 if block_type != 'W' else 0

    # --- attention branch: x + WMSA(LN1(x)) ---
    y = _layernorm(x, params['ln1_g'], params['ln1_b'])
    if shift:
        y = jnp.roll(y, shift=(-shift, -shift), axis=(1, 2))
    hW, wW = H // ws, W // ws
    y = y.reshape(B, hW, ws, wW, ws, C).transpose(0, 1, 3, 2, 4, 5)
    y = y.reshape(B, hW * wW, P, C)

    qkv = jnp.einsum('bnpc,cd->bnpd', y, params['wqkv'], precision=hp) + params['bqkv']
    qkv = qkv.reshape(B, hW * wW, P, 3, nh, head_dim)
    q, k, v = qkv[..., 0, :, :], qkv[..., 1, :, :], qkv[..., 2, :, :]

    sim = jnp.einsum('bnphd,bnqhd->bnhpq', q, k, precision=hp) * (head_dim ** -0.5)
    rel = relative_embedding(params['rel_pos'], ws)                 # (nh, P, P)
    sim = sim + rel[None, None]
    if shift:
        mask = generate_mask_bias(hW, wW, ws, shift)                # (nW, P, P)
        sim = sim + mask[None, :, None]

    probs = jax.nn.softmax(sim, axis=-1)
    out = jnp.einsum('bnhpq,bnqhd->bnphd', probs, v, precision=hp)
    out = out.reshape(B, hW * wW, P, C)
    out = jnp.einsum('bnpc,cd->bnpd', out, params['wo'], precision=hp) + params['bo']

    out = out.reshape(B, hW, wW, ws, ws, C).transpose(0, 1, 3, 2, 4, 5)
    out = out.reshape(B, H, W, C)
    if shift:
        out = jnp.roll(out, shift=(shift, shift), axis=(1, 2))
    x = x + out

    # --- MLP branch: x + MLP(LN2(x)) ---
    y2 = _layernorm(x, params['ln2_g'], params['ln2_b'])
    hdn = jnp.einsum('bhwc,cd->bhwd', y2, params['w1'], precision=hp) + params['b1']
    hdn = _gelu_tanh(hdn)
    out2 = jnp.einsum('bhwd,dc->bhwc', hdn, params['w2'], precision=hp) + params['b2']
    return x + out2


# ----------------------------------------------------------------------------
# Parameter init (deterministic, forward semantics only)
# ----------------------------------------------------------------------------
def init_block_params(key, input_dim, head_dim, window_size, mlp_ratio=4):
    C = input_dim
    n_heads = C // head_dim
    ks = jax.random.split(key, 5)

    def linear(k, fan_in, fan_out):
        kw, kb = jax.random.split(k)
        bound = 1.0 / math.sqrt(fan_in)
        w = jax.random.uniform(kw, (fan_in, fan_out), jnp.float32, -bound, bound)
        b = jax.random.uniform(kb, (fan_out,), jnp.float32, -bound, bound)
        return w, b

    wqkv, bqkv = linear(ks[0], C, 3 * C)
    wo, bo = linear(ks[1], C, C)
    w1, b1 = linear(ks[2], C, mlp_ratio * C)
    w2, b2 = linear(ks[3], mlp_ratio * C, C)
    rel = 0.02 * jax.random.normal(
        ks[4], (n_heads, 2 * window_size - 1, 2 * window_size - 1), jnp.float32)
    return dict(
        ln1_g=jnp.ones((C,), jnp.float32), ln1_b=jnp.zeros((C,), jnp.float32),
        wqkv=wqkv, bqkv=bqkv, rel_pos=rel, wo=wo, bo=bo,
        ln2_g=jnp.ones((C,), jnp.float32), ln2_b=jnp.zeros((C,), jnp.float32),
        w1=w1, b1=b1, w2=w2, b2=b2)


# ----------------------------------------------------------------------------
# Demo / correctness check
# ----------------------------------------------------------------------------
if __name__ == "__main__":
    # Small shapes consistent with the module: batch=2, 8x8 spatial tokens,
    # 32 channels, head_dim=8 (4 heads), window_size=4 (input_resolution=8>4).
    B, H, W = 2, 8, 8
    input_dim, head_dim, window_size = 32, 8, 4
    input_resolution = H

    key = jax.random.PRNGKey(0)
    kx, kp = jax.random.split(key)
    x = jax.random.normal(kx, (B, H, W, input_dim), dtype=jnp.float32)
    params = init_block_params(kp, input_dim, head_dim, window_size)

    for requested_type in ("W", "SW"):
        # Block.__init__ falls back to 'W' when input_resolution <= window_size.
        block_type = requested_type if input_resolution > window_size else "W"
        fwd = jax.jit(functools.partial(block_forward, window_size=window_size,
                                        head_dim=head_dim, block_type=block_type))
        out = jax.block_until_ready(fwd(x, params))
        ref = block_reference(x, params, window_size=window_size,
                              head_dim=head_dim, block_type=block_type)
        np.testing.assert_allclose(np.asarray(out), np.asarray(ref),
                                   rtol=2e-2, atol=2e-2)

    print("KERNEL_OK")
</pallas_src>

<mosaic_0001>
module attributes {stable_mosaic.version = 11 : i64} {
  func.func @_wmsa_attn_kernel(%arg0: i32, %arg1: memref<64x32xf32, #tpu.memory_space<vmem>>, %arg2: memref<1x32xf32, #tpu.memory_space<vmem>>, %arg3: memref<1x32xf32, #tpu.memory_space<vmem>>, %arg4: memref<32x96xbf16, #tpu.memory_space<vmem>>, %arg5: memref<1x96xf32, #tpu.memory_space<vmem>>, %arg6: memref<4x16x16xf32, #tpu.memory_space<vmem>>, %arg7: memref<32x32xbf16, #tpu.memory_space<vmem>>, %arg8: memref<1x32xf32, #tpu.memory_space<vmem>>, %arg9: memref<64x32xf32, #tpu.memory_space<vmem>>) attributes {dimension_semantics = [#tpu.dimension_semantics<parallel>], iteration_bounds = array<i64: 2>, scalar_prefetch = 0 : i64, scratch_operands = 0 : i64, tpu.core_type = #tpu.core_type<tc>, window_params = [{transform_indices = @transform_0, window_bounds = array<i64: 64, 32>}, {pipeline_mode = #tpu.pipeline_mode<synchronous>, transform_indices = @transform_1, window_bounds = array<i64: 1, 32>}, {pipeline_mode = #tpu.pipeline_mode<synchronous>, transform_indices = @transform_2, window_bounds = array<i64: 1, 32>}, {pipeline_mode = #tpu.pipeline_mode<synchronous>, transform_indices = @transform_3, window_bounds = array<i64: 32, 96>}, {pipeline_mode = #tpu.pipeline_mode<synchronous>, transform_indices = @transform_4, window_bounds = array<i64: 1, 96>}, {pipeline_mode = #tpu.pipeline_mode<synchronous>, transform_indices = @transform_5, window_bounds = array<i64: 4, 16, 16>}, {pipeline_mode = #tpu.pipeline_mode<synchronous>, transform_indices = @transform_6, window_bounds = array<i64: 32, 32>}, {pipeline_mode = #tpu.pipeline_mode<synchronous>, transform_indices = @transform_7, window_bounds = array<i64: 1, 32>}, {transform_indices = @transform_8, window_bounds = array<i64: 64, 32>}]} {
    %c0 = arith.constant 0 : index
    %c0_0 = arith.constant 0 : index
    %0 = vector.load %arg1[%c0, %c0_0] : memref<64x32xf32, #tpu.memory_space<vmem>>, vector<64x32xf32>
    %cst = arith.constant dense<0.000000e+00> : vector<64xf32>
    %1 = vector.multi_reduction <add>, %0, %cst [1] : vector<64x32xf32> to vector<64xf32>
    %2 = vector.shape_cast %1 : vector<64xf32> to vector<64x1xf32>
    %cst_1 = arith.constant 3.200000e+01 : f32
    %3 = vector.broadcast %cst_1 : f32 to vector<64x1xf32>
    %4 = arith.divf %2, %3 : vector<64x1xf32>
    %5 = vector.broadcast %4 : vector<64x1xf32> to vector<64x32xf32>
    %6 = arith.subf %0, %5 : vector<64x32xf32>
    %7 = arith.mulf %6, %6 : vector<64x32xf32>
    %cst_2 = arith.constant dense<0.000000e+00> : vector<64xf32>
    %8 = vector.multi_reduction <add>, %7, %cst_2 [1] : vector<64x32xf32> to vector<64xf32>
    %9 = vector.shape_cast %8 : vector<64xf32> to vector<64x1xf32>
    %cst_3 = arith.constant 3.200000e+01 : f32
    %10 = vector.broadcast %cst_3 : f32 to vector<64x1xf32>
    %11 = arith.divf %9, %10 : vector<64x1xf32>
    %12 = vector.broadcast %4 : vector<64x1xf32> to vector<64x32xf32>
    %13 = arith.subf %0, %12 : vector<64x32xf32>
    %cst_4 = arith.constant 9.99999974E-6 : f32
    %14 = vector.broadcast %cst_4 : f32 to vector<64x1xf32>
    %15 = arith.addf %11, %14 : vector<64x1xf32>
    %16 = math.rsqrt %15 : vector<64x1xf32>
    %17 = vector.broadcast %16 : vector<64x1xf32> to vector<64x32xf32>
    %18 = arith.mulf %13, %17 : vector<64x32xf32>
    %c0_5 = arith.constant 0 : index
    %c0_6 = arith.constant 0 : index
    %19 = vector.load %arg2[%c0_5, %c0_6] : memref<1x32xf32, #tpu.memory_space<vmem>>, vector<1x32xf32>
    %20 = vector.broadcast %19 : vector<1x32xf32> to vector<64x32xf32>
    %21 = arith.mulf %18, %20 : vector<64x32xf32>
    %c0_7 = arith.constant 0 : index
    %c0_8 = arith.constant 0 : index
    %22 = vector.load %arg3[%c0_7, %c0_8] : memref<1x32xf32, #tpu.memory_space<vmem>>, vector<1x32xf32>
    %23 = vector.broadcast %22 : vector<1x32xf32> to vector<64x32xf32>
    %24 = arith.addf %21, %23 : vector<64x32xf32>
    %25 = arith.truncf %24 : vector<64x32xf32> to vector<64x32xbf16>
    %c0_9 = arith.constant 0 : index
    %c0_10 = arith.constant 0 : index
    %26 = vector.load %arg4[%c0_9, %c0_10] : memref<32x96xbf16, #tpu.memory_space<vmem>>, vector<32x96xbf16>
    %cst_11 = arith.constant dense<0.000000e+00> : vector<64x96xf32>
    %27 = tpu.matmul %25, %26, %cst_11 {dimension_numbers = #tpu.dot_dimension_numbers<[1], [0], [0], [1], [0, 0, 1, 1], [], []>} : vector<64x32xbf16>, vector<32x96xbf16>, vector<64x96xf32> -> vector<64x96xf32>
    %c0_12 = arith.constant 0 : index
    %c0_13 = arith.constant 0 : index
    %28 = vector.load %arg5[%c0_12, %c0_13] : memref<1x96xf32, #tpu.memory_space<vmem>>, vector<1x96xf32>
    %29 = vector.broadcast %28 : vector<1x96xf32> to vector<64x96xf32>
    %30 = arith.addf %27, %29 : vector<64x96xf32>
    %31 = vector.extract_strided_slice %30 {offsets = [0, 0], sizes = [64, 8], strides = [1, 1]} : vector<64x96xf32> to vector<64x8xf32>
    %32 = vector.extract_strided_slice %30 {offsets = [0, 8], sizes = [64, 8], strides = [1, 1]} : vector<64x96xf32> to vector<64x8xf32>
    %33 = vector.extract_strided_slice %30 {offsets = [0, 16], sizes = [64, 8], strides = [1, 1]} : vector<64x96xf32> to vector<64x8xf32>
    %34 = vector.extract_strided_slice %30 {offsets = [0, 24], sizes = [64, 8], strides = [1, 1]} : vector<64x96xf32> to vector<64x8xf32>
    %35 = vector.shape_cast %31 : vector<64x8xf32> to vector<1x64x8xf32>
    %36 = vector.shape_cast %32 : vector<64x8xf32> to vector<1x64x8xf32>
    %37 = vector.shape_cast %33 : vector<64x8xf32> to vector<1x64x8xf32>
    %38 = vector.shape_cast %34 : vector<64x8xf32> to vector<1x64x8xf32>
    %39 = tpu.concatenate %35, %36, %37, %38 in 0 : vector<1x64x8xf32>, vector<1x64x8xf32>, vector<1x64x8xf32>, vector<1x64x8xf32> -> vector<4x64x8xf32>
    %40 = vector.shape_cast %39 : vector<4x64x8xf32> to vector<16x16x8xf32>
    %41 = arith.truncf %40 : vector<16x16x8xf32> to vector<16x16x8xbf16>
    %42 = vector.extract_strided_slice %30 {offsets = [0, 32], sizes = [64, 8], strides = [1, 1]} : vector<64x96xf32> to vector<64x8xf32>
    %43 = vector.extract_strided_slice %30 {offsets = [0, 40], sizes = [64, 8], strides = [1, 1]} : vector<64x96xf32> to vector<64x8xf32>
    %44 = vector.extract_strided_slice %30 {offsets = [0, 48], sizes = [64, 8], strides = [1, 1]} : vector<64x96xf32> to vector<64x8xf32>
    %45 = vector.extract_strided_slice %30 {offsets = [0, 56], sizes = [64, 8], strides = [1, 1]} : vector<64x96xf32> to vector<64x8xf32>
    %46 = vector.shape_cast %42 : vector<64x8xf32> to vector<1x64x8xf32>
    %47 = vector.shape_cast %43 : vector<64x8xf32> to vector<1x64x8xf32>
    %48 = vector.shape_cast %44 : vector<64x8xf32> to vector<1x64x8xf32>
    %49 = vector.shape_cast %45 : vector<64x8xf32> to vector<1x64x8xf32>
    %50 = tpu.concatenate %46, %47, %48, %49 in 0 : vector<1x64x8xf32>, vector<1x64x8xf32>, vector<1x64x8xf32>, vector<1x64x8xf32> -> vector<4x64x8xf32>
    %51 = vector.shape_cast %50 : vector<4x64x8xf32> to vector<16x16x8xf32>
    %52 = arith.truncf %51 : vector<16x16x8xf32> to vector<16x16x8xbf16>
    %53 = vector.extract_strided_slice %30 {offsets = [0, 64], sizes = [64, 8], strides = [1, 1]} : vector<64x96xf32> to vector<64x8xf32>
    %54 = vector.extract_strided_slice %30 {offsets = [0, 72], sizes = [64, 8], strides = [1, 1]} : vector<64x96xf32> to vector<64x8xf32>
    %55 = vector.extract_strided_slice %30 {offsets = [0, 80], sizes = [64, 8], strides = [1, 1]} : vector<64x96xf32> to vector<64x8xf32>
    %56 = vector.extract_strided_slice %30 {offsets = [0, 88], sizes = [64, 8], strides = [1, 1]} : vector<64x96xf32> to vector<64x8xf32>
    %57 = vector.shape_cast %53 : vector<64x8xf32> to vector<1x64x8xf32>
    %58 = vector.shape_cast %54 : vector<64x8xf32> to vector<1x64x8xf32>
    %59 = vector.shape_cast %55 : vector<64x8xf32> to vector<1x64x8xf32>
    %60 = vector.shape_cast %56 : vector<64x8xf32> to vector<1x64x8xf32>
    %61 = tpu.concatenate %57, %58, %59, %60 in 0 : vector<1x64x8xf32>, vector<1x64x8xf32>, vector<1x64x8xf32>, vector<1x64x8xf32> -> vector<4x64x8xf32>
    %62 = vector.shape_cast %61 : vector<4x64x8xf32> to vector<16x16x8xf32>
    %63 = arith.truncf %62 : vector<16x16x8xf32> to vector<16x16x8xbf16>
    "tpu.trace_start"() <{level = 10 : i32, message = "bpc,bqc->bpq"}> : () -> ()
    %cst_14 = arith.constant dense<0.000000e+00> : vector<16x16x16xf32>
    %64 = tpu.matmul %41, %52, %cst_14 {dimension_numbers = #tpu.dot_dimension_numbers<[2], [2], [1], [1], [0, 0, 0, 1, 1, 1], [0], [0]>} : vector<16x16x8xbf16>, vector<16x16x8xbf16>, vector<16x16x16xf32> -> vector<16x16x16xf32>
    "tpu.trace_stop"() : () -> ()
    %cst_15 = arith.constant 0.353553385 : f32
    %65 = vector.broadcast %cst_15 : f32 to vector<16x16x16xf32>
    %66 = arith.mulf %64, %65 : vector<16x16x16xf32>
    %67 = vector.shape_cast %66 : vector<16x16x16xf32> to vector<4x4x16x16xf32>
    %c0_16 = arith.constant 0 : index
    %c0_17 = arith.constant 0 : index
    %c0_18 = arith.constant 0 : index
    %68 = vector.load %arg6[%c0_16, %c0_17, %c0_18] : memref<4x16x16xf32, #tpu.memory_space<vmem>>, vector<4x16x16xf32>
    %69 = vector.shape_cast %68 : vector<4x16x16xf32> to vector<4x1x16x16xf32>
    %70 = vector.broadcast %69 : vector<4x1x16x16xf32> to vector<4x4x16x16xf32>
    %71 = arith.addf %67, %70 : vector<4x4x16x16xf32>
    %cst_19 = arith.constant dense<0xFF800000> : vector<4x4x16xf32>
    %72 = vector.multi_reduction <maximumf>, %71, %cst_19 [3] : vector<4x4x16x16xf32> to vector<4x4x16xf32>
    %73 = vector.shape_cast %72 : vector<4x4x16xf32> to vector<4x4x16x1xf32>
    %74 = vector.broadcast %73 : vector<4x4x16x1xf32> to vector<4x4x16x16xf32>
    %75 = arith.subf %71, %74 : vector<4x4x16x16xf32>
    %76 = math.exp %75 : vector<4x4x16x16xf32>
    %cst_20 = arith.constant dense<0.000000e+00> : vector<4x4x16xf32>
    %77 = vector.multi_reduction <add>, %76, %cst_20 [3] : vector<4x4x16x16xf32> to vector<4x4x16xf32>
    %78 = vector.shape_cast %77 : vector<4x4x16xf32> to vector<4x4x16x1xf32>
    %79 = tpu.reciprocal %78 {approx = true} : vector<4x4x16x1xf32> -> vector<4x4x16x1xf32>
    %80 = vector.broadcast %79 : vector<4x4x16x1xf32> to vector<4x4x16x16xf32>
    %81 = arith.mulf %76, %80 : vector<4x4x16x16xf32>
    %82 = vector.shape_cast %81 : vector<4x4x16x16xf32> to vector<16x16x16xf32>
    %83 = arith.truncf %82 : vector<16x16x16xf32> to vector<16x16x16xbf16>
    "tpu.trace_start"() <{level = 10 : i32, message = "bpq,bqc->bpc"}> : () -> ()
    %cst_21 = arith.constant dense<0.000000e+00> : vector<16x16x8xf32>
    %84 = tpu.matmul %83, %63, %cst_21 {dimension_numbers = #tpu.dot_dimension_numbers<[2], [1], [1], [2], [0, 0, 0, 1, 1, 2], [0], [0]>} : vector<16x16x16xbf16>, vector<16x16x8xbf16>, vector<16x16x8xf32> -> vector<16x16x8xf32>
    "tpu.trace_stop"() : () -> ()
    %85 = vector.shape_cast %84 : vector<16x16x8xf32> to vector<4x64x8xf32>
    %86 = vector.extract_strided_slice %85 {offsets = [0, 0, 0], sizes = [1, 64, 8], strides = [1, 1, 1]} : vector<4x64x8xf32> to vector<1x64x8xf32>
    %87 = vector.shape_cast %86 : vector<1x64x8xf32> to vector<64x8xf32>
    %88 = vector.extract_strided_slice %85 {offsets = [1, 0, 0], sizes = [1, 64, 8], strides = [1, 1, 1]} : vector<4x64x8xf32> to vector<1x64x8xf32>
    %89 = vector.shape_cast %88 : vector<1x64x8xf32> to vector<64x8xf32>
    %90 = vector.extract_strided_slice %85 {offsets = [2, 0, 0], sizes = [1, 64, 8], strides = [1, 1, 1]} : vector<4x64x8xf32> to vector<1x64x8xf32>
    %91 = vector.shape_cast %90 : vector<1x64x8xf32> to vector<64x8xf32>
    %92 = vector.extract_strided_slice %85 {offsets = [3, 0, 0], sizes = [1, 64, 8], strides = [1, 1, 1]} : vector<4x64x8xf32> to vector<1x64x8xf32>
    %93 = vector.shape_cast %92 : vector<1x64x8xf32> to vector<64x8xf32>
    %94 = tpu.concatenate %87, %89, %91, %93 in 1 : vector<64x8xf32>, vector<64x8xf32>, vector<64x8xf32>, vector<64x8xf32> -> vector<64x32xf32>
    %95 = arith.truncf %94 : vector<64x32xf32> to vector<64x32xbf16>
    %c0_22 = arith.constant 0 : index
    %c0_23 = arith.constant 0 : index
    %96 = vector.load %arg7[%c0_22, %c0_23] : memref<32x32xbf16, #tpu.memory_space<vmem>>, vector<32x32xbf16>
    %cst_24 = arith.constant dense<0.000000e+00> : vector<64x32xf32>
    %97 = tpu.matmul %95, %96, %cst_24 {dimension_numbers = #tpu.dot_dimension_numbers<[1], [0], [0], [1], [0, 0, 1, 1], [], []>} : vector<64x32xbf16>, vector<32x32xbf16>, vector<64x32xf32> -> vector<64x32xf32>
    %c0_25 = arith.constant 0 : index
    %c0_26 = arith.constant 0 : index
    %98 = vector.load %arg8[%c0_25, %c0_26] : memref<1x32xf32, #tpu.memory_space<vmem>>, vector<1x32xf32>
    %99 = vector.broadcast %98 : vector<1x32xf32> to vector<64x32xf32>
    %100 = arith.addf %97, %99 : vector<64x32xf32>
    %101 = arith.addf %0, %100 : vector<64x32xf32>
    %c0_27 = arith.constant 0 : index
    %c0_28 = arith.constant 0 : index
    %102 = vector.load %arg9[%c0_27, %c0_28] : memref<64x32xf32, #tpu.memory_space<vmem>>, vector<64x32xf32>
    tpu.vector_store %arg9[%c0_27, %c0_28], %101 {strides = array<i32>} : memref<64x32xf32, #tpu.memory_space<vmem>>, vector<64x32xf32>,
    return
  }
  func.func @transform_0(%arg0: i32) -> (i32, i32) {
    %c0_i32 = arith.constant 0 : i32
    %c0_i32_0 = arith.constant 0 : i32
    return %arg0, %c0_i32 : i32, i32
  }
  func.func @transform_1(%arg0: i32) -> (i32, i32) {
    %c0_i32 = arith.constant 0 : i32
    %c0_i32_0 = arith.constant 0 : i32
    %c0_i32_1 = arith.constant 0 : i32
    return %c0_i32, %c0_i32_0 : i32, i32
  }
  func.func @transform_2(%arg0: i32) -> (i32, i32) {
    %c0_i32 = arith.constant 0 : i32
    %c0_i32_0 = arith.constant 0 : i32
    %c0_i32_1 = arith.constant 0 : i32
    return %c0_i32, %c0_i32_0 : i32, i32
  }
  func.func @transform_3(%arg0: i32) -> (i32, i32) {
    %c0_i32 = arith.constant 0 : i32
    %c0_i32_0 = arith.constant 0 : i32
    %c0_i32_1 = arith.constant 0 : i32
    return %c0_i32, %c0_i32_0 : i32, i32
  }
  func.func @transform_4(%arg0: i32) -> (i32, i32) {
    %c0_i32 = arith.constant 0 : i32
    %c0_i32_0 = arith.constant 0 : i32
    %c0_i32_1 = arith.constant 0 : i32
    return %c0_i32, %c0_i32_0 : i32, i32
  }
  func.func @transform_5(%arg0: i32) -> (i32, i32, i32) {
    %c0_i32 = arith.constant 0 : i32
    %c0_i32_0 = arith.constant 0 : i32
    %c0_i32_1 = arith.constant 0 : i32
    %c0_i32_2 = arith.constant 0 : i32
    return %c0_i32, %c0_i32_0, %c0_i32_1 : i32, i32, i32
  }
  func.func @transform_6(%arg0: i32) -> (i32, i32) {
    %c0_i32 = arith.constant 0 : i32
    %c0_i32_0 = arith.constant 0 : i32
    %c0_i32_1 = arith.constant 0 : i32
    return %c0_i32, %c0_i32_0 : i32, i32
  }
  func.func @transform_7(%arg0: i32) -> (i32, i32) {
    %c0_i32 = arith.constant 0 : i32
    %c0_i32_0 = arith.constant 0 : i32
    %c0_i32_1 = arith.constant 0 : i32
    return %c0_i32, %c0_i32_0 : i32, i32
  }
  func.func @transform_8(%arg0: i32) -> (i32, i32) {
    %c0_i32 = arith.constant 0 : i32
    %c0_i32_0 = arith.constant 0 : i32
    return %arg0, %c0_i32 : i32, i32
  }
}

module attributes {stable_mosaic.version = 11 : i64} {
  func.func @_mlp_kernel(%arg0: i32, %arg1: i32, %arg2: memref<64x32xf32, #tpu.memory_space<vmem>>, %arg3: memref<1x32xf32, #tpu.memory_space<vmem>>, %arg4: memref<1x32xf32, #tpu.memory_space<vmem>>, %arg5: memref<32x128xbf16, #tpu.memory_space<vmem>>, %arg6: memref<1x128xf32, #tpu.memory_space<vmem>>, %arg7: memref<128x32xbf16, #tpu.memory_space<vmem>>, %arg8: memref<1x32xf32, #tpu.memory_space<vmem>>, %arg9: memref<64x32xf32, #tpu.memory_space<vmem>>, %arg10: memref<64x32xbf16, #tpu.memory_space<vmem>>, %arg11: memref<64x32xf32, #tpu.memory_space<vmem>>) attributes {dimension_semantics = [#tpu.dimension_semantics<parallel>, #tpu.dimension_semantics<arbitrary>], iteration_bounds = array<i64: 2, 1>, scalar_prefetch = 0 : i64, scratch_operands = 2 : i64, tpu.core_type = #tpu.core_type<tc>, window_params = [{transform_indices = @transform_0, window_bounds = array<i64: 64, 32>}, {pipeline_mode = #tpu.pipeline_mode<synchronous>, transform_indices = @transform_1, window_bounds = array<i64: 1, 32>}, {pipeline_mode = #tpu.pipeline_mode<synchronous>, transform_indices = @transform_2, window_bounds = array<i64: 1, 32>}, {transform_indices = @transform_3, window_bounds = array<i64: 32, 128>}, {transform_indices = @transform_4, window_bounds = array<i64: 1, 128>}, {transform_indices = @transform_5, window_bounds = array<i64: 128, 32>}, {pipeline_mode = #tpu.pipeline_mode<synchronous>, transform_indices = @transform_6, window_bounds = array<i64: 1, 32>}, {transform_indices = @transform_7, window_bounds = array<i64: 64, 32>}]} {
    %c0_i32 = arith.constant 0 : i32
    %0 = arith.cmpi eq, %arg1, %c0_i32 : i32
    %1 = arith.extui %0 : i1 to i32
    %c0_i32_0 = arith.constant 0 : i32
    %2 = arith.cmpi ne, %1, %c0_i32_0 : i32
    scf.if %2 {
      %c0_19 = arith.constant 0 : index
      %c0_20 = arith.constant 0 : index
      %31 = vector.load %arg2[%c0_19, %c0_20] : memref<64x32xf32, #tpu.memory_space<vmem>>, vector<64x32xf32>
      %cst_21 = arith.constant dense<0.000000e+00> : vector<64xf32>
      %32 = vector.multi_reduction <add>, %31, %cst_21 [1] : vector<64x32xf32> to vector<64xf32>
      %33 = vector.shape_cast %32 : vector<64xf32> to vector<64x1xf32>
      %cst_22 = arith.constant 3.200000e+01 : f32
      %34 = vector.broadcast %cst_22 : f32 to vector<64x1xf32>
      %35 = arith.divf %33, %34 : vector<64x1xf32>
      %36 = vector.broadcast %35 : vector<64x1xf32> to vector<64x32xf32>
      %37 = arith.subf %31, %36 : vector<64x32xf32>
      %38 = arith.mulf %37, %37 : vector<64x32xf32>
      %cst_23 = arith.constant dense<0.000000e+00> : vector<64xf32>
      %39 = vector.multi_reduction <add>, %38, %cst_23 [1] : vector<64x32xf32> to vector<64xf32>
      %40 = vector.shape_cast %39 : vector<64xf32> to vector<64x1xf32>
      %cst_24 = arith.constant 3.200000e+01 : f32
      %41 = vector.broadcast %cst_24 : f32 to vector<64x1xf32>
      %42 = arith.divf %40, %41 : vector<64x1xf32>
      %43 = vector.broadcast %35 : vector<64x1xf32> to vector<64x32xf32>
      %44 = arith.subf %31, %43 : vector<64x32xf32>
      %cst_25 = arith.constant 9.99999974E-6 : f32
      %45 = vector.broadcast %cst_25 : f32 to vector<64x1xf32>
      %46 = arith.addf %42, %45 : vector<64x1xf32>
      %47 = math.rsqrt %46 : vector<64x1xf32>
      %48 = vector.broadcast %47 : vector<64x1xf32> to vector<64x32xf32>
      %49 = arith.mulf %44, %48 : vector<64x32xf32>
      %c0_26 = arith.constant 0 : index
      %c0_27 = arith.constant 0 : index
      %50 = vector.load %arg3[%c0_26, %c0_27] : memref<1x32xf32, #tpu.memory_space<vmem>>, vector<1x32xf32>
      %51 = vector.broadcast %50 : vector<1x32xf32> to vector<64x32xf32>
      %52 = arith.mulf %49, %51 : vector<64x32xf32>
      %c0_28 = arith.constant 0 : index
      %c0_29 = arith.constant 0 : index
      %53 = vector.load %arg4[%c0_28, %c0_29] : memref<1x32xf32, #tpu.memory_space<vmem>>, vector<1x32xf32>
      %54 = vector.broadcast %53 : vector<1x32xf32> to vector<64x32xf32>
      %55 = arith.addf %52, %54 : vector<64x32xf32>
      %56 = arith.truncf %55 : vector<64x32xf32> to vector<64x32xbf16>
      %c0_30 = arith.constant 0 : index
      %c0_31 = arith.constant 0 : index
      %57 = vector.load %arg10[%c0_30, %c0_31] : memref<64x32xbf16, #tpu.memory_space<vmem>>, vector<64x32xbf16>
      tpu.vector_store %arg10[%c0_30, %c0_31], %56 {strides = array<i32>} : memref<64x32xbf16, #tpu.memory_space<vmem>>, vector<64x32xbf16>,
      %cst_32 = arith.constant 0.000000e+00 : f32
      %58 = vector.broadcast %cst_32 : f32 to vector<64x32xf32>
      %c0_33 = arith.constant 0 : index
      %c0_34 = arith.constant 0 : index
      %59 = vector.load %arg11[%c0_33, %c0_34] : memref<64x32xf32, #tpu.memory_space<vmem>>, vector<64x32xf32>
      tpu.vector_store %arg11[%c0_33, %c0_34], %58 {strides = array<i32>} : memref<64x32xf32, #tpu.memory_space<vmem>>, vector<64x32xf32>,
    } else {
    }
    %c0 = arith.constant 0 : index
    %c0_1 = arith.constant 0 : index
    %3 = vector.load %arg10[%c0, %c0_1] : memref<64x32xbf16, #tpu.memory_space<vmem>>, vector<64x32xbf16>
    %c0_2 = arith.constant 0 : index
    %c0_3 = arith.constant 0 : index
    %4 = vector.load %arg5[%c0_2, %c0_3] : memref<32x128xbf16, #tpu.memory_space<vmem>>, vector<32x128xbf16>
    %cst = arith.constant dense<0.000000e+00> : vector<64x128xf32>
    %5 = tpu.matmul %3, %4, %cst {dimension_numbers = #tpu.dot_dimension_numbers<[1], [0], [0], [1], [0, 0, 1, 1], [], []>} : vector<64x32xbf16>, vector<32x128xbf16>, vector<64x128xf32> -> vector<64x128xf32>
    %c0_4 = arith.constant 0 : index
    %c0_5 = arith.constant 0 : index
    %6 = vector.load %arg6[%c0_4, %c0_5] : memref<1x128xf32, #tpu.memory_space<vmem>>, vector<1x128xf32>
    %7 = vector.broadcast %6 : vector<1x128xf32> to vector<64x128xf32>
    %8 = arith.addf %5, %7 : vector<64x128xf32>
    %cst_6 = arith.constant 5.000000e-01 : f32
    %9 = vector.broadcast %cst_6 : f32 to vector<64x128xf32>
    %10 = arith.mulf %9, %8 : vector<64x128xf32>
    %cst_7 = arith.constant 4.471500e-02 : f32
    %11 = vector.broadcast %cst_7 : f32 to vector<64x128xf32>
    %12 = arith.mulf %11, %8 : vector<64x128xf32>
    %13 = arith.mulf %12, %8 : vector<64x128xf32>
    %14 = arith.mulf %13, %8 : vector<64x128xf32>
    %15 = arith.addf %8, %14 : vector<64x128xf32>
    %cst_8 = arith.constant 0.797884583 : f32
    %16 = vector.broadcast %cst_8 : f32 to vector<64x128xf32>
    %17 = arith.mulf %16, %15 : vector<64x128xf32>
    %18 = math.tanh %17 : vector<64x128xf32>
    %cst_9 = arith.constant 1.000000e+00 : f32
    %19 = vector.broadcast %cst_9 : f32 to vector<64x128xf32>
    %20 = arith.addf %19, %18 : vector<64x128xf32>
    %21 = arith.mulf %10, %20 : vector<64x128xf32>
    %c0_10 = arith.constant 0 : index
    %c0_11 = arith.constant 0 : index
    %22 = vector.load %arg11[%c0_10, %c0_11] : memref<64x32xf32, #tpu.memory_space<vmem>>, vector<64x32xf32>
    %23 = arith.truncf %21 : vector<64x128xf32> to vector<64x128xbf16>
    %c0_12 = arith.constant 0 : index
    %c0_13 = arith.constant 0 : index
    %24 = vector.load %arg7[%c0_12, %c0_13] : memref<128x32xbf16, #tpu.memory_space<vmem>>, vector<128x32xbf16>
    %cst_14 = arith.constant dense<0.000000e+00> : vector<64x32xf32>
    %25 = tpu.matmul %23, %24, %cst_14 {dimension_numbers = #tpu.dot_dimension_numbers<[1], [0], [0], [1], [0, 0, 1, 1], [], []>} : vector<64x128xbf16>, vector<128x32xbf16>, vector<64x32xf32> -> vector<64x32xf32>
    %26 = arith.addf %22, %25 : vector<64x32xf32>
    %c0_15 = arith.constant 0 : index
    %c0_16 = arith.constant 0 : index
    %27 = vector.load %arg11[%c0_15, %c0_16] : memref<64x32xf32, #tpu.memory_space<vmem>>, vector<64x32xf32>
    tpu.vector_store %arg11[%c0_15, %c0_16], %26 {strides = array<i32>} : memref<64x32xf32, #tpu.memory_space<vmem>>, vector<64x32xf32>,
    %c0_i32_17 = arith.constant 0 : i32
    %28 = arith.cmpi eq, %arg1, %c0_i32_17 : i32
    %29 = arith.extui %28 : i1 to i32
    %c0_i32_18 = arith.constant 0 : i32
    %30 = arith.cmpi ne, %29, %c0_i32_18 : i32
    scf.if %30 {
      %c0_19 = arith.constant 0 : index
      %c0_20 = arith.constant 0 : index
      %31 = vector.load %arg2[%c0_19, %c0_20] : memref<64x32xf32, #tpu.memory_space<vmem>>, vector<64x32xf32>
      %c0_21 = arith.constant 0 : index
      %c0_22 = arith.constant 0 : index
      %32 = vector.load %arg11[%c0_21, %c0_22] : memref<64x32xf32, #tpu.memory_space<vmem>>, vector<64x32xf32>
      %33 = arith.addf %31, %32 : vector<64x32xf32>
      %c0_23 = arith.constant 0 : index
      %c0_24 = arith.constant 0 : index
      %34 = vector.load %arg8[%c0_23, %c0_24] : memref<1x32xf32, #tpu.memory_space<vmem>>, vector<1x32xf32>
      %35 = vector.broadcast %34 : vector<1x32xf32> to vector<64x32xf32>
      %36 = arith.addf %33, %35 : vector<64x32xf32>
      %c0_25 = arith.constant 0 : index
      %c0_26 = arith.constant 0 : index
      %37 = vector.load %arg9[%c0_25, %c0_26] : memref<64x32xf32, #tpu.memory_space<vmem>>, vector<64x32xf32>
      tpu.vector_store %arg9[%c0_25, %c0_26], %36 {strides = array<i32>} : memref<64x32xf32, #tpu.memory_space<vmem>>, vector<64x32xf32>,
    } else {
    }
    return
  }
  func.func @transform_0(%arg0: i32, %arg1: i32) -> (i32, i32) {
    %c0_i32 = arith.constant 0 : i32
    %c0_i32_0 = arith.constant 0 : i32
    return %arg0, %c0_i32 : i32, i32
  }
  func.func @transform_1(%arg0: i32, %arg1: i32) -> (i32, i32) {
    %c0_i32 = arith.constant 0 : i32
    %c0_i32_0 = arith.constant 0 : i32
    %c0_i32_1 = arith.constant 0 : i32
    return %c0_i32, %c0_i32_0 : i32, i32
  }
  func.func @transform_2(%arg0: i32, %arg1: i32) -> (i32, i32) {
    %c0_i32 = arith.constant 0 : i32
    %c0_i32_0 = arith.constant 0 : i32
    %c0_i32_1 = arith.constant 0 : i32
    return %c0_i32, %c0_i32_0 : i32, i32
  }
  func.func @transform_3(%arg0: i32, %arg1: i32) -> (i32, i32) {
    %c0_i32 = arith.constant 0 : i32
    %c0_i32_0 = arith.constant 0 : i32
    return %c0_i32, %arg1 : i32, i32
  }
  func.func @transform_4(%arg0: i32, %arg1: i32) -> (i32, i32) {
    %c0_i32 = arith.constant 0 : i32
    %c0_i32_0 = arith.constant 0 : i32
    return %c0_i32, %arg1 : i32, i32
  }
  func.func @transform_5(%arg0: i32, %arg1: i32) -> (i32, i32) {
    %c0_i32 = arith.constant 0 : i32
    %c0_i32_0 = arith.constant 0 : i32
    return %arg1, %c0_i32 : i32, i32
  }
  func.func @transform_6(%arg0: i32, %arg1: i32) -> (i32, i32) {
    %c0_i32 = arith.constant 0 : i32
    %c0_i32_0 = arith.constant 0 : i32
    %c0_i32_1 = arith.constant 0 : i32
    return %c0_i32, %c0_i32_0 : i32, i32
  }
  func.func @transform_7(%arg0: i32, %arg1: i32) -> (i32, i32) {
    %c0_i32 = arith.constant 0 : i32
    %c0_i32_0 = arith.constant 0 : i32
    return %arg0, %c0_i32 : i32, i32
  }
}

</mosaic_0001>

<llo_original>
// kernel: block_forward.3
$region0: #{block_forward.3}
  #allocation0 [shape = 'u32[]', space=smem, size = 0x4, offset = 0x4, fixed_abs, tag = 'smem constant byte address 0x4 - core index']
  #allocation1 [shape = 'u32[144,128]{1,0:T(1,128)}', space=vmem, size = 0x12000, scoped, tag = 'internal scratch']
  #allocation2 [shape = 'bf16[64,32]{1,0:T(16,128)(2,1)}', space=vmem, size = 0x4000, scoped, tag = 'scratch operand']
  #allocation3 [shape = 'f32[64,32]{1,0:T(8,128)}', space=vmem, size = 0x8000, scoped, tag = 'scratch operand']
  %s0 = inlined_call_operand.hbm [shape: f32[128,32], index: 0, kind: input, shape index: {}]
  %s1 = inlined_call_operand.hbm [shape: f32[1,32], index: 1, kind: input, shape index: {}]
  %s2 = inlined_call_operand.hbm [shape: f32[1,32], index: 2, kind: input, shape index: {}]
  %s3 = inlined_call_operand.hbm [shape: bf16[32,128], index: 3, kind: input, shape index: {}]
  %s4 = inlined_call_operand.hbm [shape: f32[1,128], index: 4, kind: input, shape index: {}]
  %s5 = inlined_call_operand.hbm [shape: bf16[128,32], index: 5, kind: input, shape index: {}]
  %s6 = inlined_call_operand.hbm [shape: f32[1,32], index: 6, kind: input, shape index: {}]
  %s7 = inlined_call_operand.hbm [shape: f32[128,32], index: 7, kind: output, shape index: {}]
  %s8 = sld [smem:[#allocation0]]
  $region97: #{block_forward.3} parent=0
    _
  %s10 = ssub.s32 1, %s8
  %s11 = scalar_select 0, %s10, %s8
  $region1: #{block_forward.3} parent=0
    #allocation4 [shape = 'u8[65536]{0}', space=vmem, size = 0x10000, scoped, tag = 'input window, operand 0']
    #allocation5 [shape = 's32[2]{0}', space=sflag, size = 0x8, scoped, tag = 'scoped memory for block_forward.3']
    #allocation6 [shape = 's32[2]{0}', space=sflag, size = 0x8, scoped, tag = 'scoped memory for block_forward.3']
    #allocation7 [shape = 'u8[512]{0}', space=vmem, size = 0x400, scoped, tag = 'input window, operand 1, single buffered']
    #allocation8 [shape = 's32[1]{0}', space=sflag, size = 0x4, scoped, tag = 'scoped memory for block_forward.3']
    #allocation9 [shape = 'u8[512]{0}', space=vmem, size = 0x400, scoped, tag = 'input window, operand 2, single buffered']
    #allocation10 [shape = 'u8[8192]{0}', space=vmem, size = 0x2000, scoped, tag = 'input window, operand 3, single buffered']
    #allocation11 [shape = 's32[1]{0}', space=sflag, size = 0x4, scoped, tag = 'scoped memory for block_forward.3']
    #allocation12 [shape = 'u8[512]{0}', space=vmem, size = 0x400, scoped, tag = 'input window, operand 4, single buffered']
    #allocation13 [shape = 'u8[32768]{0}', space=vmem, size = 0x8000, scoped, tag = 'input window, operand 5, single buffered']
    #allocation14 [shape = 's32[1]{0}', space=sflag, size = 0x4, scoped, tag = 'scoped memory for block_forward.3']
    #allocation15 [shape = 'u8[512]{0}', space=vmem, size = 0x400, scoped, tag = 'input window, operand 6, single buffered']
    #allocation16 [shape = 'u8[65536]{0}', space=vmem, size = 0x10000, scoped, tag = 'output window, operand 0']
    %12 = vsyncpa [#allocation5], 0
    %s13 = scalar_lea.sflag [#allocation5], 1
    %14 = vsyncpa %s13, 0
    %15 = vsyncpa [#allocation8], 0
    %16 = vsyncpa [#allocation11], 0
    %17 = vsyncpa [#allocation14], 0
    %18 = vsyncpa [#allocation6], 0
    %s19 = scalar_lea.sflag [#allocation6], 1
    %20 = vsyncpa %s19, 0
    loop: start=0, step=1, limit=4
    $region2: #{block_forward.3} parent=1 // loop_pre_header
      _
    $region3: #{block_forward.3} parent=1 // loop_header
      %s22 = sphi 0, %s26
      %p23 = scmp.ge.s32.totalorder %s22, 4
      %s29 = sphi 0, %s41
      %s30 = sphi 0, %s37
      %s31 = sphi 0, %s29
      %s32 = sphi 0, %s30
      %s33 = sphi 0, %s31
      %s34 = sphi 0, %s32
      %s44 = sphi 0, %s46
      %s47 = sphi 0, %s44
      %s48 = sphi 0, %s47
      %s64 = sphi 0, %s48
      %s68 = sphi 0, %s68
      %s70 = sphi 0, %s68
      %s71 = sphi 0, %s70
      %s85 = sphi 0, %s71
      %s89 = sphi 0, %s89
      %s91 = sphi 0, %s89
      %s92 = sphi 0, %s91
      %s106 = sphi 0, %s92
      %s112 = sphi 0, %s114
      %s115 = sphi 0, %s112
      %s116 = sphi 0, %s115
      %s132 = sphi 0, %s116
      %s138 = sphi 0, %s140
      %s141 = sphi 0, %s138
      %s142 = sphi 0, %s141
      %s158 = sphi 0, %s142
      %s164 = sphi 0, %s166
      %s167 = sphi 0, %s164
      %s168 = sphi 0, %s167
      %s184 = sphi 0, %s168
      %s188 = sphi 0, %s188
      %s190 = sphi 0, %s188
      %s191 = sphi 0, %s190
      %s205 = sphi 0, %s191
      %s211 = sphi 0, %s213
      %s214 = sphi 0, %s211
      %s215 = sphi 0, %s214
      %s231 = sphi 0, %s215
    $region4: #{block_forward.3} parent=1 // loop_header_branch
      %25 = sbr.rel (%p23) target = $region8
    $region5: #{block_forward.3} parent=1 // loop_body
      %s27 = ssub.s32 %s22, 1
      %s28 = ssub.s32 %s22, 2
      %s35 = sadd.s32 1, %s30
      %p36 = scmp.ge.s32.totalorder %s35, 1
      %s37 = scalar_select %p36, 0, %s35
      %s38 = sadd.s32 1, %s29
      %s39 = scalar_select %p36, %s38, %s29
      %p40 = scmp.ge.s32.totalorder %s39, 2
      %s41 = scalar_select %p40, 0, %s39
      %s42 = ssub.s32 %s29, %s41
      %p43 = scmp.eq.s32.totalorder %s42, 0
      %s45 = sadd.s32 %s44, 1
      %s46 = scalar_select %p43, %s44, %s45
      %p49 = pneg %p43
      %p50 = scmp.eq.s32.totalorder %s22, 1
      %p51 = por %p49, %p50
      %p52 = scmp.ne.s32.totalorder %s44, %s47
      %p53 = scmp.eq.s32.totalorder %s22, 0
      %p54 = por %p52, %p53
      %p55 = scmp.ne.s32.totalorder %s44, %s47
      %p56 = scmp.eq.s32.totalorder %s27, 1
      %p57 = por %p55, %p56
      %p58 = scmp.ne.s32.totalorder %s47, %s48
      %p59 = scmp.eq.s32.totalorder %s27, 0
      %p60 = por %p58, %p59
      %p61 = scmp.ne.s32.totalorder %s47, %s48
      %p62 = scmp.eq.s32.totalorder %s28, 1
      %p63 = por %p61, %p62
      %p65 = scmp.ne.s32.totalorder %s48, %s64
      %p66 = scmp.eq.s32.totalorder %s28, 0
      %p67 = por %p65, %p66
      %s69 = sadd.s32 %s68, 1
      %p72 = scmp.eq.s32.totalorder %s22, 1
      %p73 = scmp.ne.s32.totalorder %s68, %s70
      %p74 = scmp.eq.s32.totalorder %s22, 0
      %p75 = por %p73, %p74
      %p76 = scmp.ne.s32.totalorder %s68, %s70
      %p77 = scmp.eq.s32.totalorder %s27, 1
      %p78 = por %p76, %p77
      %p79 = scmp.ne.s32.totalorder %s70, %s71
      %p80 = scmp.eq.s32.totalorder %s27, 0
      %p81 = por %p79, %p80
      %p82 = scmp.ne.s32.totalorder %s70, %s71
      %p83 = scmp.eq.s32.totalorder %s28, 1
      %p84 = por %p82, %p83
      %p86 = scmp.ne.s32.totalorder %s71, %s85
      %p87 = scmp.eq.s32.totalorder %s28, 0
      %p88 = por %p86, %p87
      %s90 = sadd.s32 %s89, 1
      %p93 = scmp.eq.s32.totalorder %s22, 1
      %p94 = scmp.ne.s32.totalorder %s89, %s91
      %p95 = scmp.eq.s32.totalorder %s22, 0
      %p96 = por %p94, %p95
      %p97 = scmp.ne.s32.totalorder %s89, %s91
      %p98 = scmp.eq.s32.totalorder %s27, 1
      %p99 = por %p97, %p98
      %p100 = scmp.ne.s32.totalorder %s91, %s92
      %p101 = scmp.eq.s32.totalorder %s27, 0
      %p102 = por %p100, %p101
      %p103 = scmp.ne.s32.totalorder %s91, %s92
      %p104 = scmp.eq.s32.totalorder %s28, 1
      %p105 = por %p103, %p104
      %p107 = scmp.ne.s32.totalorder %s92, %s106
      %p108 = scmp.eq.s32.totalorder %s28, 0
      %p109 = por %p107, %p108
      %s110 = ssub.s32 %s30, %s37
      %p111 = scmp.eq.s32.totalorder %s110, 0
      %s113 = sadd.s32 %s112, 1
      %s114 = scalar_select %p111, %s112, %s113
      %p117 = pneg %p111
      %p118 = scmp.eq.s32.totalorder %s22, 1
      %p119 = por %p117, %p118
      %p120 = scmp.ne.s32.totalorder %s112, %s115
      %p121 = scmp.eq.s32.totalorder %s22, 0
      %p122 = por %p120, %p121
      %p123 = scmp.ne.s32.totalorder %s112, %s115
      %p124 = scmp.eq.s32.totalorder %s27, 1
      %p125 = por %p123, %p124
      %p126 = scmp.ne.s32.totalorder %s115, %s116
      %p127 = scmp.eq.s32.totalorder %s27, 0
      %p128 = por %p126, %p127
      %p129 = scmp.ne.s32.totalorder %s115, %s116
      %p130 = scmp.eq.s32.totalorder %s28, 1
      %p131 = por %p129, %p130
      %p133 = scmp.ne.s32.totalorder %s116, %s132
      %p134 = scmp.eq.s32.totalorder %s28, 0
      %p135 = por %p133, %p134
      %s136 = ssub.s32 %s30, %s37
      %p137 = scmp.eq.s32.totalorder %s136, 0
      %s139 = sadd.s32 %s138, 1
      %s140 = scalar_select %p137, %s138, %s139
      %p143 = pneg %p137
      %p144 = scmp.eq.s32.totalorder %s22, 1
      %p145 = por %p143, %p144
      %p146 = scmp.ne.s32.totalorder %s138, %s141
      %p147 = scmp.eq.s32.totalorder %s22, 0
      %p148 = por %p146, %p147
      %p149 = scmp.ne.s32.totalorder %s138, %s141
      %p150 = scmp.eq.s32.totalorder %s27, 1
      %p151 = por %p149, %p150
      %p152 = scmp.ne.s32.totalorder %s141, %s142
      %p153 = scmp.eq.s32.totalorder %s27, 0
      %p154 = por %p152, %p153
      %p155 = scmp.ne.s32.totalorder %s141, %s142
      %p156 = scmp.eq.s32.totalorder %s28, 1
      %p157 = por %p155, %p156
      %p159 = scmp.ne.s32.totalorder %s142, %s158
      %p160 = scmp.eq.s32.totalorder %s28, 0
      %p161 = por %p159, %p160
      %s162 = ssub.s32 %s30, %s37
      %p163 = scmp.eq.s32.totalorder %s162, 0
      %s165 = sadd.s32 %s164, 1
      %s166 = scalar_select %p163, %s164, %s165
      %p169 = pneg %p163
      %p170 = scmp.eq.s32.totalorder %s22, 1
      %p171 = por %p169, %p170
      %p172 = scmp.ne.s32.totalorder %s164, %s167
      %p173 = scmp.eq.s32.totalorder %s22, 0
      %p174 = por %p172, %p173
      %p175 = scmp.ne.s32.totalorder %s164, %s167
      %p176 = scmp.eq.s32.totalorder %s27, 1
      %p177 = por %p175, %p176
      %p178 = scmp.ne.s32.totalorder %s167, %s168
      %p179 = scmp.eq.s32.totalorder %s27, 0
      %p180 = por %p178, %p179
      %p181 = scmp.ne.s32.totalorder %s167, %s168
      %p182 = scmp.eq.s32.totalorder %s28, 1
      %p183 = por %p181, %p182
      %p185 = scmp.ne.s32.totalorder %s168, %s184
      %p186 = scmp.eq.s32.totalorder %s28, 0
      %p187 = por %p185, %p186
      %s189 = sadd.s32 %s188, 1
      %p192 = scmp.eq.s32.totalorder %s22, 1
      %p193 = scmp.ne.s32.totalorder %s188, %s190
      %p194 = scmp.eq.s32.totalorder %s22, 0
      %p195 = por %p193, %p194
      %p196 = scmp.ne.s32.totalorder %s188, %s190
      %p197 = scmp.eq.s32.totalorder %s27, 1
      %p198 = por %p196, %p197
      %p199 = scmp.ne.s32.totalorder %s190, %s191
      %p200 = scmp.eq.s32.totalorder %s27, 0
      %p201 = por %p199, %p200
      %p202 = scmp.ne.s32.totalorder %s190, %s191
      %p203 = scmp.eq.s32.totalorder %s28, 1
      %p204 = por %p202, %p203
      %p206 = scmp.ne.s32.totalorder %s191, %s205
      %p207 = scmp.eq.s32.totalorder %s28, 0
      %p208 = por %p206, %p207
      %s209 = ssub.s32 %s29, %s41
      %p210 = scmp.eq.s32.totalorder %s209, 0
      %s212 = sadd.s32 %s211, 1
      %s213 = scalar_select %p210, %s211, %s212
      %p216 = pneg %p210
      %p217 = scmp.eq.s32.totalorder %s22, 1
      %p218 = por %p216, %p217
      %p219 = scmp.ne.s32.totalorder %s211, %s214
      %p220 = scmp.eq.s32.totalorder %s22, 0
      %p221 = por %p219, %p220
      %p222 = scmp.ne.s32.totalorder %s211, %s214
      %p223 = scmp.eq.s32.totalorder %s27, 1
      %p224 = por %p222, %p223
      %p225 = scmp.ne.s32.totalorder %s214, %s215
      %p226 = scmp.eq.s32.totalorder %s27, 0
      %p227 = por %p225, %p226
      %p228 = scmp.ne.s32.totalorder %s214, %s215
      %p229 = scmp.eq.s32.totalorder %s28, 1
      %p230 = por %p228, %p229
      %p232 = scmp.ne.s32.totalorder %s215, %s231
      %p233 = scmp.eq.s32.totalorder %s28, 0
      %p234 = por %p232, %p233
      %p235 = scmp.le.s32.totalorder 1, %s22
      %p236 = scmp.lt.s32.totalorder %s22, 3
      %p237 = pnand %p235, %p236
      %p238 = pneg %p237
      // Predicated region
      $region9: #{block_forward.3} parent=5 // pred_check
        _
      $region10: #{block_forward.3} parent=5 // pred_check_branch
        %240 = sbr.rel (%p237) target = $region12
      $region11: #{block_forward.3} parent=5 // pred_region
        %s241 = ssub.s32 %s22, 1
        // Predicated region
        $region13: #{block_forward.3} parent=11 // pred_check
          %p242 = pneg %p81
        $region14: #{block_forward.3} parent=11 // pred_check_branch
          %244 = sbr.rel (%p242) target = $region16
        $region15: #{block_forward.3} parent=11 // pred_region
          %s246 = ssub.s32 16, 16
          %247 = vsyncadd [#allocation8], %s246
          %s249 = sshll.u32 [#allocation7], 4
          %s250 = int_to_ptr.vmem [resolvable:$true] %s249
          %252 = dma.hbm_to_vmem [thread:$0]  %s1, 16, %s250, [#allocation8]
        $region16: #{block_forward.3} parent=11 // pred_fallthru
          _
        // Predicated region
        $region17: #{block_forward.3} parent=11 // pred_check
          %p253 = pneg %p102
        $region18: #{block_forward.3} parent=11 // pred_check_branch
          %255 = sbr.rel (%p253) target = $region20
        $region19: #{block_forward.3} parent=11 // pred_region
          %s257 = ssub.s32 16, 16
          %258 = vsyncadd [#allocation8], %s257
          %s260 = sshll.u32 [#allocation9], 4
          %s261 = int_to_ptr.vmem [resolvable:$true] %s260
          %263 = dma.hbm_to_vmem [thread:$0]  %s2, 16, %s261, [#allocation8]
        $region20: #{block_forward.3} parent=11 // pred_fallthru
          _
        // Predicated region
        $region21: #{block_forward.3} parent=11 // pred_check
          %p264 = pneg %p128
        $region22: #{block_forward.3} parent=11 // pred_check_branch
          %266 = sbr.rel (%p264) target = $region24
        $region23: #{block_forward.3} parent=11 // pred_region
          %s268 = ssub.s32 256, 256
          %269 = vsyncadd [#allocation11], %s268
          %s270 = smul.addr %s32, 64
          %s271 = scalar_lea.hbm %s3, %s270
          %s272 = sshll.u32 [#allocation10], 4
          %s273 = int_to_ptr.vmem [resolvable:$true] %s272
          %278 = dma.hbm_to_vmem [thread:$0]  %s271, 256, %s273, [#allocation11], 64, 64, 4
        $region24: #{block_forward.3} parent=11 // pred_fallthru
          _
        // Predicated region
        $region25: #{block_forward.3} parent=11 // pred_check
          %p279 = pneg %p154
        $region26: #{block_forward.3} parent=11 // pred_check_branch
          %281 = sbr.rel (%p279) target = $region28
        $region27: #{block_forward.3} parent=11 // pred_region
          %s283 = ssub.s32 16, 16
          %284 = vsyncadd [#allocation11], %s283
          %s285 = smul.addr %s32, 16
          %s286 = scalar_lea.hbm %s4, %s285
          %s288 = sshll.u32 [#allocation12], 4
          %s289 = int_to_ptr.vmem [resolvable:$true] %s288
          %291 = dma.hbm_to_vmem [thread:$0]  %s286, 16, %s289, [#allocation11]
        $region28: #{block_forward.3} parent=11 // pred_fallthru
          _
        // Predicated region
        $region29: #{block_forward.3} parent=11 // pred_check
          %p292 = pneg %p180
        $region30: #{block_forward.3} parent=11 // pred_check_branch
          %294 = sbr.rel (%p292) target = $region32
        $region31: #{block_forward.3} parent=11 // pred_region
          %s295 = smul.u32 16, %s32
          %s297 = ssub.s32 1024, 1024
          %298 = vsyncadd [#allocation14], %s297
          %s299 = smul.addr %s295, 64
          %s300 = scalar_lea.hbm %s5, %s299
          %s301 = sshll.u32 [#allocation13], 4
          %s302 = int_to_ptr.vmem [resolvable:$true] %s301
          %307 = dma.hbm_to_vmem [thread:$0]  %s300, 1024, %s302, [#allocation14], 64, 64, 4
        $region32: #{block_forward.3} parent=11 // pred_fallthru
          _
        // Predicated region
        $region33: #{block_forward.3} parent=11 // pred_check
          %p308 = pneg %p201
        $region34: #{block_forward.3} parent=11 // pred_check_branch
          %310 = sbr.rel (%p308) target = $region36
        $region35: #{block_forward.3} parent=11 // pred_region
          %s312 = ssub.s32 16, 16
          %313 = vsyncadd [#allocation14], %s312
          %s315 = sshll.u32 [#allocation15], 4
          %s316 = int_to_ptr.vmem [resolvable:$true] %s315
          %318 = dma.hbm_to_vmem [thread:$0]  %s6, 16, %s316, [#allocation14]
        $region36: #{block_forward.3} parent=11 // pred_fallthru
          _
      $region12: #{block_forward.3} parent=5 // pred_fallthru
        _
      %p319 = scmp.lt.s32.totalorder %s22, 2
      // Predicated region
      $region37: #{block_forward.3} parent=5 // pred_check
        %p320 = pneg %p319
      $region38: #{block_forward.3} parent=5 // pred_check_branch
        %322 = sbr.rel (%p320) target = $region40
      $region39: #{block_forward.3} parent=5 // pred_region
        // Predicated region
        $region41: #{block_forward.3} parent=39 // pred_check
          %p323 = pneg %p54
        $region42: #{block_forward.3} parent=39 // pred_check_branch
          %325 = sbr.rel (%p323) target = $region44
        $region43: #{block_forward.3} parent=39 // pred_region
          %s326 = sand.u32 %s44, 1
          %s327 = scalar_lea.sflag [#allocation5], %s326
          %s328 = sand.u32 %s44, 1
          %s329 = smul.addr %s328, 64
          %s330 = scalar_lea.vmem [#allocation4], %s329
          %s331 = smul.u32 8, %s29
          %s333 = ssub.s32 1024, 1024
          %334 = vsyncadd %s327, %s333
          %s335 = smul.addr %s331, 128
          %s336 = scalar_lea.hbm %s0, %s335
          %s337 = sshll.u32 %s330, 4
          %s338 = int_to_ptr.vmem [resolvable:$true] %s337
          %343 = dma.hbm_to_vmem [thread:$0]  %s336, 1024, %s338, %s327, 128, 128, 8
        $region44: #{block_forward.3} parent=39 // pred_fallthru
          _
      $region40: #{block_forward.3} parent=5 // pred_fallthru
        _
      %p344 = scmp.le.s32.totalorder 1, %s22
      %p345 = scmp.lt.s32.totalorder %s22, 3
      %p346 = pnand %p344, %p345
      %p347 = pneg %p346
      // Predicated region
      $region45: #{block_forward.3} parent=5 // pred_check
        _
      $region46: #{block_forward.3} parent=5 // pred_check_branch
        %349 = sbr.rel (%p346) target = $region48
      $region47: #{block_forward.3} parent=5 // pred_region
        %s350 = ssub.s32 %s22, 1
        %s351 = sand.u32 %s47, 1
        %s352 = scalar_lea.sflag [#allocation5], %s351
        %s353 = sand.u32 %s47, 1
        %s354 = smul.addr %s353, 64
        %s355 = scalar_lea.vmem [#allocation4], %s354
        // Predicated region
        $region49: #{block_forward.3} parent=47 // pred_check
          %p356 = pneg %p60
        $region50: #{block_forward.3} parent=47 // pred_check_branch
          %358 = sbr.rel (%p356) target = $region52
        $region51: #{block_forward.3} parent=47 // pred_region
          %359 = dma.done %s352, 1024
        $region52: #{block_forward.3} parent=47 // pred_fallthru
          _
        // Predicated region
        $region53: #{block_forward.3} parent=47 // pred_check
          %p360 = pneg %p81
        $region54: #{block_forward.3} parent=47 // pred_check_branch
          %362 = sbr.rel (%p360) target = $region56
        $region55: #{block_forward.3} parent=47 // pred_region
          %363 = dma.done [#allocation8], 16
        $region56: #{block_forward.3} parent=47 // pred_fallthru
          _
        // Predicated region
        $region57: #{block_forward.3} parent=47 // pred_check
          %p364 = pneg %p102
        $region58: #{block_forward.3} parent=47 // pred_check_branch
          %366 = sbr.rel (%p364) target = $region60
        $region59: #{block_forward.3} parent=47 // pred_region
          %367 = dma.done [#allocation8], 16
        $region60: #{block_forward.3} parent=47 // pred_fallthru
          _
        // Predicated region
        $region61: #{block_forward.3} parent=47 // pred_check
          %p368 = pneg %p128
        $region62: #{block_forward.3} parent=47 // pred_check_branch
          %370 = sbr.rel (%p368) target = $region64
        $region63: #{block_forward.3} parent=47 // pred_region
          %371 = dma.done [#allocation11], 256
        $region64: #{block_forward.3} parent=47 // pred_fallthru
          _
        // Predicated region
        $region65: #{block_forward.3} parent=47 // pred_check
          %p372 = pneg %p154
        $region66: #{block_forward.3} parent=47 // pred_check_branch
          %374 = sbr.rel (%p372) target = $region68
        $region67: #{block_forward.3} parent=47 // pred_region
          %375 = dma.done [#allocation11], 16
        $region68: #{block_forward.3} parent=47 // pred_fallthru
          _
        // Predicated region
        $region69: #{block_forward.3} parent=47 // pred_check
          %p376 = pneg %p180
        $region70: #{block_forward.3} parent=47 // pred_check_branch
          %378 = sbr.rel (%p376) target = $region72
        $region71: #{block_forward.3} parent=47 // pred_region
          %379 = dma.done [#allocation14], 1024
        $region72: #{block_forward.3} parent=47 // pred_fallthru
          _
        // Predicated region
        $region73: #{block_forward.3} parent=47 // pred_check
          %p380 = pneg %p201
        $region74: #{block_forward.3} parent=47 // pred_check_branch
          %382 = sbr.rel (%p380) target = $region76
        $region75: #{block_forward.3} parent=47 // pred_region
          %383 = dma.done [#allocation14], 16
        $region76: #{block_forward.3} parent=47 // pred_fallthru
          _
        %s384 = sand.u32 %s47, 1
        %s385 = scalar_lea.sflag [#allocation5], %s384
        %s386 = sand.u32 %s47, 1
        %s387 = smul.addr %s386, 64
        %s388 = scalar_lea.vmem [#allocation4], %s387
        %p389 = pneg %p60
        %p390 = pneg %p57
        %p391 = pneg %p81
        %p392 = pneg %p78
        %p393 = pneg %p102
        %p394 = pneg %p99
        %p395 = pneg %p128
        %p396 = pneg %p125
        %p397 = pneg %p154
        %p398 = pneg %p151
        %p399 = pneg %p180
        %p400 = pneg %p177
        %p401 = pneg %p201
        %p402 = pneg %p198
        %p403 = pneg %p227
        %p404 = pneg %p224
        %s405 = sand.u32 %s214, 1
        %s406 = scalar_lea.sflag [#allocation6], %s405
        %s407 = sand.u32 %s214, 1
        %s408 = smul.addr %s407, 64
        %s409 = scalar_lea.vmem [#allocation16], %s408
        %s410 = smul.u32 8, %s31
        %s411 = smul.u32 16, %s32
        %s412 = smul.u32 8, %s31
        %p414 = scmp.eq.s32.totalorder %s32, 0
        // Predicated region
        $region77: #{block_forward.3} parent=47 // pred_check
          %p415 = pneg %p414
        $region78: #{block_forward.3} parent=47 // pred_check_branch
          %417 = sbr.rel (%p415) target = $region80
        $region79: #{block_forward.3} parent=47 // pred_region
          %v418 = vld [vmem:[%s355] sm:$0xff]
          %v419 = vld [vmem:[%s355 + $0x8] sm:$0xff]
          %v420 = vld [vmem:[%s355 + $0x10] sm:$0xff]
          %v421 = vld [vmem:[%s355 + $0x18] sm:$0xff]
          %v422 = vld [vmem:[%s355 + $0x20] sm:$0xff]
          %v423 = vld [vmem:[%s355 + $0x28] sm:$0xff]
          %v424 = vld [vmem:[%s355 + $0x30] sm:$0xff]
          %v425 = vld [vmem:[%s355 + $0x38] sm:$0xff]
          %vm426 = vcmask 261120
          %v427 = vsel %vm426, %v418, 0.0
          %428 = vadd.xlane.f32.xlu0 %v427
          %v429 = vpop.xlane.xlu0 %428
          %v430 = vsel %vm426, %v419, 0.0
          %431 = vadd.xlane.f32.xlu0 %v430
          %v432 = vpop.xlane.xlu0 %431
          %v433 = vsel %vm426, %v420, 0.0
          %434 = vadd.xlane.f32.xlu0 %v433
          %v435 = vpop.xlane.xlu0 %434
          %v436 = vsel %vm426, %v421, 0.0
          %437 = vadd.xlane.f32.xlu0 %v436
          %v438 = vpop.xlane.xlu0 %437
          %v439 = vsel %vm426, %v422, 0.0
          %440 = vadd.xlane.f32.xlu0 %v439
          %v441 = vpop.xlane.xlu0 %440
          %v442 = vsel %vm426, %v423, 0.0
          %443 = vadd.xlane.f32.xlu0 %v442
          %v444 = vpop.xlane.xlu0 %443
          %v445 = vsel %vm426, %v424, 0.0
          %446 = vadd.xlane.f32.xlu0 %v445
          %v447 = vpop.xlane.xlu0 %446
          %v448 = vsel %vm426, %v425, 0.0
          %449 = vadd.xlane.f32.xlu0 %v448
          %v450 = vpop.xlane.xlu0 %449
          %v451 = vrcp.pop 32.0
          %v452 = vmul.f32 %v429, %v451
          %v453 = vmul.f32 %v432, %v451
          %v454 = vmul.f32 %v435, %v451
          %v455 = vmul.f32 %v438, %v451
          %v456 = vmul.f32 %v441, %v451
          %v457 = vmul.f32 %v444, %v451
          %v458 = vmul.f32 %v447, %v451
          %v459 = vmul.f32 %v450, %v451
          %v460 = vsub.f32 %v418, %v452
          %v461 = vsub.f32 %v419, %v453
          %v462 = vsub.f32 %v420, %v454
          %v463 = vsub.f32 %v421, %v455
          %v464 = vsub.f32 %v422, %v456
          %v465 = vsub.f32 %v423, %v457
          %v466 = vsub.f32 %v424, %v458
          %v467 = vsub.f32 %v425, %v459
          %v468 = vmul.f32 %v460, %v460
          %v469 = vmul.f32 %v461, %v461
          %v470 = vmul.f32 %v462, %v462
          %v471 = vmul.f32 %v463, %v463
          %v472 = vmul.f32 %v464, %v464
          %v473 = vmul.f32 %v465, %v465
          %v474 = vmul.f32 %v466, %v466
          %v475 = vmul.f32 %v467, %v467
          %v476 = vsel %vm426, %v468, 0.0
          %477 = vadd.xlane.f32.xlu0 %v476
          %v478 = vpop.xlane.xlu0 %477
          %v479 = vsel %vm426, %v469, 0.0
          %480 = vadd.xlane.f32.xlu0 %v479
          %v481 = vpop.xlane.xlu0 %480
          %v482 = vsel %vm426, %v470, 0.0
          %483 = vadd.xlane.f32.xlu0 %v482
          %v484 = vpop.xlane.xlu0 %483
          %v485 = vsel %vm426, %v471, 0.0
          %486 = vadd.xlane.f32.xlu0 %v485
          %v487 = vpop.xlane.xlu0 %486
          %v488 = vsel %vm426, %v472, 0.0
          %489 = vadd.xlane.f32.xlu0 %v488
          %v490 = vpop.xlane.xlu0 %489
          %v491 = vsel %vm426, %v473, 0.0
          %492 = vadd.xlane.f32.xlu0 %v491
          %v493 = vpop.xlane.xlu0 %492
          %v494 = vsel %vm426, %v474, 0.0
          %495 = vadd.xlane.f32.xlu0 %v494
          %v496 = vpop.xlane.xlu0 %495
          %v497 = vsel %vm426, %v475, 0.0
          %498 = vadd.xlane.f32.xlu0 %v497
          %v499 = vpop.xlane.xlu0 %498
          %v500 = vmul.f32 %v478, %v451
          %v501 = vmul.f32 %v481, %v451
          %v502 = vmul.f32 %v484, %v451
          %v503 = vmul.f32 %v487, %v451
          %v504 = vmul.f32 %v490, %v451
          %v505 = vmul.f32 %v493, %v451
          %v506 = vmul.f32 %v496, %v451
          %v507 = vmul.f32 %v499, %v451
          %v508 = vadd.f32 %v500, 1e-05
          %v509 = vadd.f32 %v501, 1e-05
          %v510 = vadd.f32 %v502, 1e-05
          %v511 = vadd.f32 %v503, 1e-05
          %v512 = vadd.f32 %v504, 1e-05
          %v513 = vadd.f32 %v505, 1e-05
          %v514 = vadd.f32 %v506, 1e-05
          %v515 = vadd.f32 %v507, 1e-05
          %v516 = vrsqrt.pop %v508
          %v517 = vrsqrt.pop %v509
          %v518 = vrsqrt.pop %v510
          %v519 = vrsqrt.pop %v511
          %v520 = vrsqrt.pop %v512
          %v521 = vrsqrt.pop %v513
          %v522 = vrsqrt.pop %v514
          %v523 = vrsqrt.pop %v515
          %v524 = vmul.f32 %v460, %v516
          %v525 = vmul.f32 %v461, %v517
          %v526 = vmul.f32 %v462, %v518
          %v527 = vmul.f32 %v463, %v519
          %v528 = vmul.f32 %v464, %v520
          %v529 = vmul.f32 %v465, %v521
          %v530 = vmul.f32 %v466, %v522
          %v531 = vmul.f32 %v467, %v523
          %v532 = vld [vmem:[#allocation7] sm:$0x1]
          %v534 = vlaneseq
          %v535 = vshrl.u32 %v534, 7
          %v536 = vsub.s32 0, %v535
          %v537 = vrot.slane %v532, %v536
          %v539 = vmul.f32 %v524, %v537
          %v540 = vmul.f32 %v525, %v537
          %v541 = vmul.f32 %v526, %v537
          %v542 = vmul.f32 %v527, %v537
          %v543 = vmul.f32 %v528, %v537
          %v544 = vmul.f32 %v529, %v537
          %v545 = vmul.f32 %v530, %v537
          %v546 = vmul.f32 %v531, %v537
          %v547 = vld [vmem:[#allocation9] sm:$0x1]
          %v549 = vlaneseq
          %v550 = vshrl.u32 %v549, 7
          %v551 = vsub.s32 0, %v550
          %v552 = vrot.slane %v547, %v551
          %v554 = vadd.f32 %v539, %v552
          %v555 = vadd.f32 %v540, %v552
          %v556 = vadd.f32 %v541, %v552
          %v557 = vadd.f32 %v542, %v552
          %v558 = vadd.f32 %v543, %v552
          %v559 = vadd.f32 %v544, %v552
          %v560 = vadd.f32 %v545, %v552
          %v561 = vadd.f32 %v546, %v552
          %v562 = vpack.c.bf16 %v555, %v554
          %v563 = vpack.c.bf16 %v557, %v556
          %v564 = vpack.c.bf16 %v559, %v558
          %v565 = vpack.c.bf16 %v561, %v560
          %566 = vst.msk [vmem:[#allocation2] sm:$0xff] %vm426, %v562
          %567 = vst.msk [vmem:[#allocation2 + $0x8] sm:$0xff] %vm426, %v563
          %568 = vst.msk [vmem:[#allocation2 + $0x10] sm:$0xff] %vm426, %v564
          %569 = vst.msk [vmem:[#allocation2 + $0x18] sm:$0xff] %vm426, %v565
          %570 = vst.msk [vmem:[#allocation3] sm:$0xff] %vm426, 0.0
          %571 = vst.msk [vmem:[#allocation3 + $0x8] sm:$0xff] %vm426, 0.0
          %572 = vst.msk [vmem:[#allocation3 + $0x10] sm:$0xff] %vm426, 0.0
          %573 = vst.msk [vmem:[#allocation3 + $0x18] sm:$0xff] %vm426, 0.0
          %574 = vst.msk [vmem:[#allocation3 + $0x20] sm:$0xff] %vm426, 0.0
          %575 = vst.msk [vmem:[#allocation3 + $0x28] sm:$0xff] %vm426, 0.0
          %576 = vst.msk [vmem:[#allocation3 + $0x30] sm:$0xff] %vm426, 0.0
          %577 = vst.msk [vmem:[#allocation3 + $0x38] sm:$0xff] %vm426, 0.0
        $region80: #{block_forward.3} parent=47 // pred_fallthru
          _
        %v578 = vld [vmem:[#allocation2] sm:$0xff]
        %v579 = vld [vmem:[#allocation2 + $0x8] sm:$0xff]
        %v580 = vld [vmem:[#allocation2 + $0x10] sm:$0xff]
        %v581 = vld [vmem:[#allocation2 + $0x18] sm:$0xff]
        %v582 = vld [vmem:[#allocation10] sm:$0xf]
        %v583 = vld [vmem:[#allocation10 + $0x4] sm:$0xf]
        %v584 = vld [vmem:[#allocation10 + $0x8] sm:$0xf]
        %v585 = vld [vmem:[#allocation10 + $0xc] sm:$0xf]
        %v586 = vld [vmem:[#allocation12] sm:$0x1]
        %v588 = vlaneseq
        %v589 = vshrl.u32 %v588, 7
        %v590 = vsub.s32 0, %v589
        %v591 = vrot.slane %v586, %v590
        %v597 = vunpack.c.l.b16 %v582
        %v598 = vunpack.c.l.b16 %v583
        %v599 = vunpack.c.l.b16 %v584
        %v600 = vunpack.c.l.b16 %v585
        %v601 = vpack.c.b16 %v598, %v597
        %v602 = vpack.c.b16 %v600, %v599
        %vm605 = vcmask 261120
        %v607 = vsel %vm605, %v578, 0
        %v610 = vsel %vm605, %v579, 0
        %v613 = vsel %vm605, %v580, 0
        %v616 = vsel %vm605, %v581, 0
        %618 = vmatprep.subr.bf16.mxu0 0
        %619 = vmatpush1.bf16.msra.mxu0 %v601
        %620 = vmatprep.subr.bf16.mxu0 0
        %621 = vmatpush1.bf16.msra.mxu0 %v602
        %622 = vmatprep.subr.bf16.mxu0 0
        %623 = vmatpush1.bf16.msra.mxu0 0
        %624 = vmatprep.subr.bf16.mxu0 0
        %625 = vmatpush1.bf16.msra.mxu0 0
        %626 = vmatprep.subr.bf16.mxu0 0
        %627 = vmatpush1.bf16.msra.mxu0 0
        %628 = vmatprep.subr.bf16.mxu0 0
        %629 = vmatpush1.bf16.msra.mxu0 0
        %630 = vmatprep.subr.bf16.mxu0 0
        %631 = vmatpush1.bf16.msra.mxu0 0
        %632 = vmatprep.subr.bf16.mxu0 0
        %633 = vmatpush1.bf16.msra.mxu0 0
        %634 = vmatprep.subr.bf16.mxu0 0
        %635 = vmatpush1.bf16.msra.mxu0 0
        %636 = vmatprep.subr.bf16.mxu0 0
        %637 = vmatpush1.bf16.msra.mxu0 0
        %638 = vmatprep.subr.bf16.mxu0 0
        %639 = vmatpush1.bf16.msra.mxu0 0
        %640 = vmatprep.subr.bf16.mxu0 0
        %641 = vmatpush1.bf16.msra.mxu0 0
        %642 = vmatprep.subr.bf16.mxu0 0
        %643 = vmatpush1.bf16.msra.mxu0 0
        %644 = vmatprep.subr.bf16.mxu0 0
        %645 = vmatpush1.bf16.msra.mxu0 0
        %646 = vmatprep.subr.bf16.mxu0 0
        %647 = vmatpush1.bf16.msra.mxu0 0
        %648 = vmatprep.subr.bf16.mxu0 0
        %649 = vmatpush1.bf16.msra.mxu0 0
        %650 = vmatprep.mubr.bf16.mxu0 0
        %651 = vmatmul.mubr.bf16.gmra.mrb[0].mxu0 %v607
        %v652 = vpop.f32.mrb[0].mxu0
        %v653 = vadd.f32 %v591, %v652
        %v654 = vpop.f32.mrb[0].mxu0
        %v655 = vpop.f32.mrb[0].mxu0
        %v656 = vadd.f32 %v591, %v655
        %v657 = vpop.f32.mrb[0].mxu0
        %658 = vmatprep.mubr.bf16.mxu0 0
        %659 = vmatmul.mubr.bf16.gmra.mrb[0].mxu0 %v610
        %v660 = vpop.f32.mrb[0].mxu0
        %v661 = vadd.f32 %v591, %v660
        %v662 = vpop.f32.mrb[0].mxu0
        %v663 = vpop.f32.mrb[0].mxu0
        %v664 = vadd.f32 %v591, %v663
        %v665 = vpop.f32.mrb[0].mxu0
        %666 = vmatprep.mubr.bf16.mxu0 0
        %667 = vmatmul.mubr.bf16.gmra.mrb[0].mxu0 %v613
        %v668 = vpop.f32.mrb[0].mxu0
        %v669 = vadd.f32 %v591, %v668
        %v670 = vpop.f32.mrb[0].mxu0
        %v671 = vpop.f32.mrb[0].mxu0
        %v672 = vadd.f32 %v591, %v671
        %v673 = vpop.f32.mrb[0].mxu0
        %674 = vmatprep.mubr.bf16.mxu0 0
        %675 = vmatmul.mubr.bf16.gmra.mrb[0].mxu0 %v616
        %v676 = vpop.f32.mrb[0].mxu0
        %v677 = vadd.f32 %v591, %v676
        %v678 = vpop.f32.mrb[0].mxu0
        %v679 = vpop.f32.mrb[0].mxu0
        %v680 = vadd.f32 %v591, %v679
        %v681 = vpop.f32.mrb[0].mxu0
        %682 = vdwg.mxu0
        %v683 = vmul.f32 %v653, 0.5
        %v684 = vmul.f32 %v656, 0.5
        %v685 = vmul.f32 %v661, 0.5
        %v686 = vmul.f32 %v664, 0.5
        %v687 = vmul.f32 %v669, 0.5
        %v688 = vmul.f32 %v672, 0.5
        %v689 = vmul.f32 %v677, 0.5
        %v690 = vmul.f32 %v680, 0.5
        %v691 = vmul.f32 %v653, 0.044715
        %v692 = vmul.f32 %v656, 0.044715
        %v693 = vmul.f32 %v661, 0.044715
        %v694 = vmul.f32 %v664, 0.044715
        %v695 = vmul.f32 %v669, 0.044715
        %v696 = vmul.f32 %v672, 0.044715
        %v697 = vmul.f32 %v677, 0.044715
        %v698 = vmul.f32 %v680, 0.044715
        %v699 = vmul.f32 %v691, %v653
        %v700 = vmul.f32 %v692, %v656
        %v701 = vmul.f32 %v693, %v661
        %v702 = vmul.f32 %v694, %v664
        %v703 = vmul.f32 %v695, %v669
        %v704 = vmul.f32 %v696, %v672
        %v705 = vmul.f32 %v697, %v677
        %v706 = vmul.f32 %v698, %v680
        %v707 = vmul.f32 %v699, %v653
        %v708 = vmul.f32 %v700, %v656
        %v709 = vmul.f32 %v701, %v661
        %v710 = vmul.f32 %v702, %v664
        %v711 = vmul.f32 %v703, %v669
        %v712 = vmul.f32 %v704, %v672
        %v713 = vmul.f32 %v705, %v677
        %v714 = vmul.f32 %v706, %v680
        %v715 = vadd.f32 %v653, %v707
        %v716 = vadd.f32 %v656, %v708
        %v717 = vadd.f32 %v661, %v709
        %v718 = vadd.f32 %v664, %v710
        %v719 = vadd.f32 %v669, %v711
        %v720 = vadd.f32 %v672, %v712
        %v721 = vadd.f32 %v677, %v713
        %v722 = vadd.f32 %v680, %v714
        %v723 = vmul.f32 %v715, 0.7978846
        %v724 = vmul.f32 %v716, 0.7978846
        %v725 = vmul.f32 %v717, 0.7978846
        %v726 = vmul.f32 %v718, 0.7978846
        %v727 = vmul.f32 %v719, 0.7978846
        %v728 = vmul.f32 %v720, 0.7978846
        %v729 = vmul.f32 %v721, 0.7978846
        %v730 = vmul.f32 %v722, 0.7978846
        %v731 = vtanh.pop %v723
        %v732 = vtanh.pop %v724
        %v733 = vtanh.pop %v725
        %v734 = vtanh.pop %v726
        %v735 = vtanh.pop %v727
        %v736 = vtanh.pop %v728
        %v737 = vtanh.pop %v729
        %v738 = vtanh.pop %v730
        %v739 = vadd.f32 %v731, 1.0
        %v740 = vadd.f32 %v732, 1.0
        %v741 = vadd.f32 %v733, 1.0
        %v742 = vadd.f32 %v734, 1.0
        %v743 = vadd.f32 %v735, 1.0
        %v744 = vadd.f32 %v736, 1.0
        %v745 = vadd.f32 %v737, 1.0
        %v746 = vadd.f32 %v738, 1.0
        %v747 = vmul.f32 %v683, %v739
        %v748 = vmul.f32 %v684, %v740
        %v749 = vmul.f32 %v685, %v741
        %v750 = vmul.f32 %v686, %v742
        %v751 = vmul.f32 %v687, %v743
        %v752 = vmul.f32 %v688, %v744
        %v753 = vmul.f32 %v689, %v745
        %v754 = vmul.f32 %v690, %v746
        %v755 = vld [vmem:[#allocation3] sm:$0xff]
        %v756 = vld [vmem:[#allocation3 + $0x8] sm:$0xff]
        %v757 = vld [vmem:[#allocation3 + $0x10] sm:$0xff]
        %v758 = vld [vmem:[#allocation3 + $0x18] sm:$0xff]
        %v759 = vld [vmem:[#allocation3 + $0x20] sm:$0xff]
        %v760 = vld [vmem:[#allocation3 + $0x28] sm:$0xff]
        %v761 = vld [vmem:[#allocation3 + $0x30] sm:$0xff]
        %v762 = vld [vmem:[#allocation3 + $0x38] sm:$0xff]
        %v763 = vpack.c.bf16 %v748, %v747
        %v764 = vpack.c.bf16 %v750, %v749
        %v765 = vpack.c.bf16 %v752, %v751
        %v766 = vpack.c.bf16 %v754, %v753
        %v767 = vld [vmem:[#allocation13] sm:$0xf]
        %v768 = vld [vmem:[#allocation13 + $0x4] sm:$0xf]
        %v769 = vld [vmem:[#allocation13 + $0x8] sm:$0xf]
        %v770 = vld [vmem:[#allocation13 + $0xc] sm:$0xf]
        %v771 = vld [vmem:[#allocation13 + $0x10] sm:$0xf]
        %v772 = vld [vmem:[#allocation13 + $0x14] sm:$0xf]
        %v773 = vld [vmem:[#allocation13 + $0x18] sm:$0xf]
        %v774 = vld [vmem:[#allocation13 + $0x1c] sm:$0xf]
        %v775 = vld [vmem:[#allocation13 + $0x20] sm:$0xf]
        %v776 = vld [vmem:[#allocation13 + $0x24] sm:$0xf]
        %v777 = vld [vmem:[#allocation13 + $0x28] sm:$0xf]
        %v778 = vld [vmem:[#allocation13 + $0x2c] sm:$0xf]
        %v779 = vld [vmem:[#allocation13 + $0x30] sm:$0xf]
        %v780 = vld [vmem:[#allocation13 + $0x34] sm:$0xf]
        %v781 = vld [vmem:[#allocation13 + $0x38] sm:$0xf]
        %v782 = vld [vmem:[#allocation13 + $0x3c] sm:$0xf]
        %v799 = vunpack.c.l.b16 %v767
        %v800 = vunpack.c.l.b16 %v768
        %v801 = vunpack.c.l.b16 %v769
        %v802 = vunpack.c.l.b16 %v770
        %v803 = vunpack.c.l.b16 %v771
        %v804 = vunpack.c.l.b16 %v772
        %v805 = vunpack.c.l.b16 %v773
        %v806 = vunpack.c.l.b16 %v774
        %v807 = vunpack.c.l.b16 %v775
        %v808 = vunpack.c.l.b16 %v776
        %v809 = vunpack.c.l.b16 %v777
        %v810 = vunpack.c.l.b16 %v778
        %v811 = vunpack.c.l.b16 %v779
        %v812 = vunpack.c.l.b16 %v780
        %v813 = vunpack.c.l.b16 %v781
        %v814 = vunpack.c.l.b16 %v782
        %v815 = vpack.c.b16 %v800, %v799
        %v816 = vpack.c.b16 %v802, %v801
        %v817 = vpack.c.b16 %v804, %v803
        %v818 = vpack.c.b16 %v806, %v805
        %v819 = vpack.c.b16 %v808, %v807
        %v820 = vpack.c.b16 %v810, %v809
        %v821 = vpack.c.b16 %v812, %v811
        %v822 = vpack.c.b16 %v814, %v813
        %831 = vmatprep.subr.bf16.mxu0 0
        %832 = vmatpush1.bf16.msra.mxu0 %v815
        %833 = vmatprep.subr.bf16.mxu0 0
        %834 = vmatpush1.bf16.msra.mxu0 %v816
        %835 = vmatprep.subr.bf16.mxu0 0
        %836 = vmatpush1.bf16.msra.mxu0 %v817
        %837 = vmatprep.subr.bf16.mxu0 0
        %838 = vmatpush1.bf16.msra.mxu0 %v818
        %839 = vmatprep.subr.bf16.mxu0 0
        %840 = vmatpush1.bf16.msra.mxu0 %v819
        %841 = vmatprep.subr.bf16.mxu0 0
        %842 = vmatpush1.bf16.msra.mxu0 %v820
        %843 = vmatprep.subr.bf16.mxu0 0
        %844 = vmatpush1.bf16.msra.mxu0 %v821
        %845 = vmatprep.subr.bf16.mxu0 0
        %846 = vmatpush1.bf16.msra.mxu0 %v822
        %847 = vmatprep.subr.bf16.mxu0 0
        %848 = vmatpush1.bf16.msra.mxu0 0
        %849 = vmatprep.subr.bf16.mxu0 0
        %850 = vmatpush1.bf16.msra.mxu0 0
        %851 = vmatprep.subr.bf16.mxu0 0
        %852 = vmatpush1.bf16.msra.mxu0 0
        %853 = vmatprep.subr.bf16.mxu0 0
        %854 = vmatpush1.bf16.msra.mxu0 0
        %855 = vmatprep.subr.bf16.mxu0 0
        %856 = vmatpush1.bf16.msra.mxu0 0
        %857 = vmatprep.subr.bf16.mxu0 0
        %858 = vmatpush1.bf16.msra.mxu0 0
        %859 = vmatprep.subr.bf16.mxu0 0
        %860 = vmatpush1.bf16.msra.mxu0 0
        %861 = vmatprep.subr.bf16.mxu0 0
        %862 = vmatpush1.bf16.msra.mxu0 0
        %863 = vmatprep.mubr.bf16.mxu0 0
        %864 = vmatmul.mubr.bf16.gmra.mrb[0].mxu0 %v763
        %v865 = vpop.f32.mrb[0].mxu0
        %v866 = vadd.f32 0.0, %v865
        %v867 = vpop.f32.mrb[0].mxu0
        %v868 = vpop.f32.mrb[0].mxu0
        %v869 = vadd.f32 0.0, %v868
        %v870 = vpop.f32.mrb[0].mxu0
        %871 = vmatprep.mubr.bf16.mxu0 0
        %872 = vmatmul.mubr.bf16.gmra.mrb[0].mxu0 %v764
        %v873 = vpop.f32.mrb[0].mxu0
        %v874 = vadd.f32 0.0, %v873
        %v875 = vpop.f32.mrb[0].mxu0
        %v876 = vpop.f32.mrb[0].mxu0
        %v877 = vadd.f32 0.0, %v876
        %v878 = vpop.f32.mrb[0].mxu0
        %879 = vmatprep.mubr.bf16.mxu0 0
        %880 = vmatmul.mubr.bf16.gmra.mrb[0].mxu0 %v765
        %v881 = vpop.f32.mrb[0].mxu0
        %v882 = vadd.f32 0.0, %v881
        %v883 = vpop.f32.mrb[0].mxu0
        %v884 = vpop.f32.mrb[0].mxu0
        %v885 = vadd.f32 0.0, %v884
        %v886 = vpop.f32.mrb[0].mxu0
        %887 = vmatprep.mubr.bf16.mxu0 0
        %888 = vmatmul.mubr.bf16.gmra.mrb[0].mxu0 %v766
        %v889 = vpop.f32.mrb[0].mxu0
        %v890 = vadd.f32 0.0, %v889
        %v891 = vpop.f32.mrb[0].mxu0
        %v892 = vpop.f32.mrb[0].mxu0
        %v893 = vadd.f32 0.0, %v892
        %v894 = vpop.f32.mrb[0].mxu0
        %895 = vdwg.mxu0
        %v896 = vadd.f32 %v755, %v866
        %v897 = vadd.f32 %v756, %v869
        %v898 = vadd.f32 %v757, %v874
        %v899 = vadd.f32 %v758, %v877
        %v900 = vadd.f32 %v759, %v882
        %v901 = vadd.f32 %v760, %v885
        %v902 = vadd.f32 %v761, %v890
        %v903 = vadd.f32 %v762, %v893
        %904 = vst.msk [vmem:[#allocation3] sm:$0xff] %vm605, %v896
        %905 = vst.msk [vmem:[#allocation3 + $0x8] sm:$0xff] %vm605, %v897
        %906 = vst.msk [vmem:[#allocation3 + $0x10] sm:$0xff] %vm605, %v898
        %907 = vst.msk [vmem:[#allocation3 + $0x18] sm:$0xff] %vm605, %v899
        %908 = vst.msk [vmem:[#allocation3 + $0x20] sm:$0xff] %vm605, %v900
        %909 = vst.msk [vmem:[#allocation3 + $0x28] sm:$0xff] %vm605, %v901
        %910 = vst.msk [vmem:[#allocation3 + $0x30] sm:$0xff] %vm605, %v902
        %911 = vst.msk [vmem:[#allocation3 + $0x38] sm:$0xff] %vm605, %v903
        // Predicated region
        $region81: #{block_forward.3} parent=47 // pred_check
          %p912 = pneg %p414
        $region82: #{block_forward.3} parent=47 // pred_check_branch
          %914 = sbr.rel (%p912) target = $region84
        $region83: #{block_forward.3} parent=47 // pred_region
          %v915 = vld [vmem:[%s355] sm:$0xff]
          %v916 = vld [vmem:[%s355 + $0x8] sm:$0xff]
          %v917 = vld [vmem:[%s355 + $0x10] sm:$0xff]
          %v918 = vld [vmem:[%s355 + $0x18] sm:$0xff]
          %v919 = vld [vmem:[%s355 + $0x20] sm:$0xff]
          %v920 = vld [vmem:[%s355 + $0x28] sm:$0xff]
          %v921 = vld [vmem:[%s355 + $0x30] sm:$0xff]
          %v922 = vld [vmem:[%s355 + $0x38] sm:$0xff]
          %v923 = vld [vmem:[#allocation3] sm:$0xff]
          %v924 = vld [vmem:[#allocation3 + $0x8] sm:$0xff]
          %v925 = vld [vmem:[#allocation3 + $0x10] sm:$0xff]
          %v926 = vld [vmem:[#allocation3 + $0x18] sm:$0xff]
          %v927 = vld [vmem:[#allocation3 + $0x20] sm:$0xff]
          %v928 = vld [vmem:[#allocation3 + $0x28] sm:$0xff]
          %v929 = vld [vmem:[#allocation3 + $0x30] sm:$0xff]
          %v930 = vld [vmem:[#allocation3 + $0x38] sm:$0xff]
          %v931 = vadd.f32 %v915, %v923
          %v932 = vadd.f32 %v916, %v924
          %v933 = vadd.f32 %v917, %v925
          %v934 = vadd.f32 %v918, %v926
          %v935 = vadd.f32 %v919, %v927
          %v936 = vadd.f32 %v920, %v928
          %v937 = vadd.f32 %v921, %v929
          %v938 = vadd.f32 %v922, %v930
          %v939 = vld [vmem:[#allocation15] sm:$0x1]
          %v941 = vlaneseq
          %v942 = vshrl.u32 %v941, 7
          %v943 = vsub.s32 0, %v942
          %v944 = vrot.slane %v939, %v943
          %v946 = vadd.f32 %v931, %v944
          %v947 = vadd.f32 %v932, %v944
          %v948 = vadd.f32 %v933, %v944
          %v949 = vadd.f32 %v934, %v944
          %v950 = vadd.f32 %v935, %v944
          %v951 = vadd.f32 %v936, %v944
          %v952 = vadd.f32 %v937, %v944
          %v953 = vadd.f32 %v938, %v944
          %954 = vst.msk [vmem:[%s409] sm:$0xff] %vm605, %v946
          %955 = vst.msk [vmem:[%s409 + $0x8] sm:$0xff] %vm605, %v947
          %956 = vst.msk [vmem:[%s409 + $0x10] sm:$0xff] %vm605, %v948
          %957 = vst.msk [vmem:[%s409 + $0x18] sm:$0xff] %vm605, %v949
          %958 = vst.msk [vmem:[%s409 + $0x20] sm:$0xff] %vm605, %v950
          %959 = vst.msk [vmem:[%s409 + $0x28] sm:$0xff] %vm605, %v951
          %960 = vst.msk [vmem:[%s409 + $0x30] sm:$0xff] %vm605, %v952
          %961 = vst.msk [vmem:[%s409 + $0x38] sm:$0xff] %vm605, %v953
        $region84: #{block_forward.3} parent=47 // pred_fallthru
          _
        %s962 = sand.u32 %s214, 1
        %s963 = scalar_lea.sflag [#allocation6], %s962
        %s964 = sand.u32 %s214, 1
        %s965 = smul.addr %s964, 64
        %s966 = scalar_lea.vmem [#allocation16], %s965
        // Predicated region
        $region85: #{block_forward.3} parent=47 // pred_check
          %p967 = pneg %p224
        $region86: #{block_forward.3} parent=47 // pred_check_branch
          %969 = sbr.rel (%p967) target = $region88
        $region87: #{block_forward.3} parent=47 // pred_region
          %s970 = smul.u32 8, %s31
          %s972 = ssub.s32 1024, 1024
          %973 = vsyncadd %s963, %s972
          %s974 = smul.addr %s970, 128
          %s975 = scalar_lea.hbm %s7, %s974
          %s976 = sshll.u32 %s966, 4
          %s977 = int_to_ptr.vmem [resolvable:$true] %s976
          %982 = dma.vmem_to_hbm [thread:$0]  %s977, 1024, %s975, %s963, 128, 128, 8
        $region88: #{block_forward.3} parent=47 // pred_fallthru
          _
      $region48: #{block_forward.3} parent=5 // pred_fallthru
        _
      %p983 = scmp.le.s32.totalorder 2, %s22
      // Predicated region
      $region89: #{block_forward.3} parent=5 // pred_check
        %p984 = pneg %p983
      $region90: #{block_forward.3} parent=5 // pred_check_branch
        %986 = sbr.rel (%p984) target = $region92
      $region91: #{block_forward.3} parent=5 // pred_region
        %s987 = ssub.s32 %s22, 2
        // Predicated region
        $region93: #{block_forward.3} parent=91 // pred_check
          %p988 = pneg %p230
        $region94: #{block_forward.3} parent=91 // pred_check_branch
          %990 = sbr.rel (%p988) target = $region96
        $region95: #{block_forward.3} parent=91 // pred_region
          %s991 = sand.u32 %s215, 1
          %s992 = scalar_lea.sflag [#allocation6], %s991
          %s993 = sand.u32 %s215, 1
          %s994 = smul.addr %s993, 64
          %s995 = scalar_lea.vmem [#allocation16], %s994
          %996 = dma.done %s992, 1024
        $region96: #{block_forward.3} parent=91 // pred_fallthru
          _
      $region92: #{block_forward.3} parent=5 // pred_fallthru
        _
    $region6: #{block_forward.3} parent=1 // loop_footer
      %s26 = sadd.s32 1, %s22
    $region7: #{block_forward.3} parent=1 // loop_footer_branch
      %21 = sbr.rel target = $region3
    $region8: #{block_forward.3} parent=1 // loop_exit
      _
    %997 = vsyncpa [#allocation5], 1
    %s998 = scalar_lea.sflag [#allocation5], 1
    %999 = vsyncpa %s998, 1
    %1000 = vsyncpa [#allocation8], 1
    %1001 = vsyncpa [#allocation11], 1
    %1002 = vsyncpa [#allocation14], 1
    %1003 = vsyncpa [#allocation6], 1
    %s1004 = scalar_lea.sflag [#allocation6], 1
    %1005 = vsyncpa %s1004, 1

// kernel: block_forward.2
$region0: #{block_forward.2}
  #allocation0 [shape = 'u32[]', space=smem, size = 0x4, offset = 0x4, fixed_abs, tag = 'smem constant byte address 0x4 - core index']
  #allocation1 [shape = 'u32[144,128]{1,0:T(1,128)}', space=vmem, size = 0x12000, scoped, tag = 'internal scratch']
  %s0 = inlined_call_operand.hbm [shape: f32[128,32], index: 0, kind: input, shape index: {}]
  %s1 = inlined_call_operand.hbm [shape: f32[1,32], index: 1, kind: input, shape index: {}]
  %s2 = inlined_call_operand.hbm [shape: f32[1,32], index: 2, kind: input, shape index: {}]
  %s3 = inlined_call_operand.hbm [shape: bf16[32,96], index: 3, kind: input, shape index: {}]
  %s4 = inlined_call_operand.hbm [shape: f32[1,96], index: 4, kind: input, shape index: {}]
  %s5 = inlined_call_operand.hbm [shape: f32[4,16,16], index: 5, kind: input, shape index: {}]
  %s6 = inlined_call_operand.hbm [shape: bf16[32,32], index: 6, kind: input, shape index: {}]
  %s7 = inlined_call_operand.hbm [shape: f32[1,32], index: 7, kind: input, shape index: {}]
  %s8 = inlined_call_operand.hbm [shape: f32[128,32], index: 8, kind: output, shape index: {}]
  %s9 = sld [smem:[#allocation0]]
  $region97: #{block_forward.2} parent=0
    _
  %s11 = ssub.s32 1, %s9
  %s12 = scalar_select 0, %s11, %s9
  $region1: #{block_forward.2} parent=0
    #allocation2 [shape = 'u8[65536]{0}', space=vmem, size = 0x10000, scoped, tag = 'input window, operand 0']
    #allocation3 [shape = 's32[2]{0}', space=sflag, size = 0x8, scoped, tag = 'scoped memory for block_forward.2']
    #allocation4 [shape = 's32[2]{0}', space=sflag, size = 0x8, scoped, tag = 'scoped memory for block_forward.2']
    #allocation5 [shape = 'u8[512]{0}', space=vmem, size = 0x400, scoped, tag = 'input window, operand 1, single buffered']
    #allocation6 [shape = 's32[1]{0}', space=sflag, size = 0x4, scoped, tag = 'scoped memory for block_forward.2']
    #allocation7 [shape = 'u8[512]{0}', space=vmem, size = 0x400, scoped, tag = 'input window, operand 2, single buffered']
    #allocation8 [shape = 'u8[8192]{0}', space=vmem, size = 0x2000, scoped, tag = 'input window, operand 3, single buffered']
    #allocation9 [shape = 's32[1]{0}', space=sflag, size = 0x4, scoped, tag = 'scoped memory for block_forward.2']
    #allocation10 [shape = 'u8[512]{0}', space=vmem, size = 0x400, scoped, tag = 'input window, operand 4, single buffered']
    #allocation11 [shape = 'u8[32768]{0}', space=vmem, size = 0x8000, scoped, tag = 'input window, operand 5, single buffered']
    #allocation12 [shape = 's32[1]{0}', space=sflag, size = 0x4, scoped, tag = 'scoped memory for block_forward.2']
    #allocation13 [shape = 'u8[8192]{0}', space=vmem, size = 0x2000, scoped, tag = 'input window, operand 6, single buffered']
    #allocation14 [shape = 'u8[512]{0}', space=vmem, size = 0x400, scoped, tag = 'input window, operand 7, single buffered']
    #allocation15 [shape = 's32[1]{0}', space=sflag, size = 0x4, scoped, tag = 'scoped memory for block_forward.2']
    #allocation16 [shape = 'u8[65536]{0}', space=vmem, size = 0x10000, scoped, tag = 'output window, operand 0']
    %13 = vsyncpa [#allocation3], 0
    %s14 = scalar_lea.sflag [#allocation3], 1
    %15 = vsyncpa %s14, 0
    %16 = vsyncpa [#allocation6], 0
    %17 = vsyncpa [#allocation9], 0
    %18 = vsyncpa [#allocation12], 0
    %19 = vsyncpa [#allocation15], 0
    %20 = vsyncpa [#allocation4], 0
    %s21 = scalar_lea.sflag [#allocation4], 1
    %22 = vsyncpa %s21, 0
    loop: start=0, step=1, limit=4
    $region2: #{block_forward.2} parent=1 // loop_pre_header
      _
    $region3: #{block_forward.2} parent=1 // loop_header
      %s24 = sphi 0, %s28
      %p25 = scmp.ge.s32.totalorder %s24, 4
      %s34 = sphi 0, %s36
      %s37 = sphi 0, %s34
      %s38 = sphi 0, %s37
      %s54 = sphi 0, %s38
      %s58 = sphi 0, %s58
      %s60 = sphi 0, %s58
      %s61 = sphi 0, %s60
      %s75 = sphi 0, %s61
      %s79 = sphi 0, %s79
      %s81 = sphi 0, %s79
      %s82 = sphi 0, %s81
      %s96 = sphi 0, %s82
      %s100 = sphi 0, %s100
      %s102 = sphi 0, %s100
      %s103 = sphi 0, %s102
      %s117 = sphi 0, %s103
      %s121 = sphi 0, %s121
      %s123 = sphi 0, %s121
      %s124 = sphi 0, %s123
      %s138 = sphi 0, %s124
      %s142 = sphi 0, %s142
      %s144 = sphi 0, %s142
      %s145 = sphi 0, %s144
      %s159 = sphi 0, %s145
      %s163 = sphi 0, %s163
      %s165 = sphi 0, %s163
      %s166 = sphi 0, %s165
      %s180 = sphi 0, %s166
      %s184 = sphi 0, %s184
      %s186 = sphi 0, %s184
      %s187 = sphi 0, %s186
      %s201 = sphi 0, %s187
      %s207 = sphi 0, %s209
      %s210 = sphi 0, %s207
      %s211 = sphi 0, %s210
      %s227 = sphi 0, %s211
    $region4: #{block_forward.2} parent=1 // loop_header_branch
      %27 = sbr.rel (%p25) target = $region8
    $region5: #{block_forward.2} parent=1 // loop_body
      %s29 = ssub.s32 %s24, 1
      %s30 = ssub.s32 %s24, 2
      %s31 = sadd.s32 %s24, 1
      %s32 = ssub.s32 %s24, %s31
      %p33 = scmp.eq.s32.totalorder %s32, 0
      %s35 = sadd.s32 %s34, 1
      %s36 = scalar_select %p33, %s34, %s35
      %p39 = pneg %p33
      %p40 = scmp.eq.s32.totalorder %s24, 1
      %p41 = por %p39, %p40
      %p42 = scmp.ne.s32.totalorder %s34, %s37
      %p43 = scmp.eq.s32.totalorder %s24, 0
      %p44 = por %p42, %p43
      %p45 = scmp.ne.s32.totalorder %s34, %s37
      %p46 = scmp.eq.s32.totalorder %s29, 1
      %p47 = por %p45, %p46
      %p48 = scmp.ne.s32.totalorder %s37, %s38
      %p49 = scmp.eq.s32.totalorder %s29, 0
      %p50 = por %p48, %p49
      %p51 = scmp.ne.s32.totalorder %s37, %s38
      %p52 = scmp.eq.s32.totalorder %s30, 1
      %p53 = por %p51, %p52
      %p55 = scmp.ne.s32.totalorder %s38, %s54
      %p56 = scmp.eq.s32.totalorder %s30, 0
      %p57 = por %p55, %p56
      %s59 = sadd.s32 %s58, 1
      %p62 = scmp.eq.s32.totalorder %s24, 1
      %p63 = scmp.ne.s32.totalorder %s58, %s60
      %p64 = scmp.eq.s32.totalorder %s24, 0
      %p65 = por %p63, %p64
      %p66 = scmp.ne.s32.totalorder %s58, %s60
      %p67 = scmp.eq.s32.totalorder %s29, 1
      %p68 = por %p66, %p67
      %p69 = scmp.ne.s32.totalorder %s60, %s61
      %p70 = scmp.eq.s32.totalorder %s29, 0
      %p71 = por %p69, %p70
      %p72 = scmp.ne.s32.totalorder %s60, %s61
      %p73 = scmp.eq.s32.totalorder %s30, 1
      %p74 = por %p72, %p73
      %p76 = scmp.ne.s32.totalorder %s61, %s75
      %p77 = scmp.eq.s32.totalorder %s30, 0
      %p78 = por %p76, %p77
      %s80 = sadd.s32 %s79, 1
      %p83 = scmp.eq.s32.totalorder %s24, 1
      %p84 = scmp.ne.s32.totalorder %s79, %s81
      %p85 = scmp.eq.s32.totalorder %s24, 0
      %p86 = por %p84, %p85
      %p87 = scmp.ne.s32.totalorder %s79, %s81
      %p88 = scmp.eq.s32.totalorder %s29, 1
      %p89 = por %p87, %p88
      %p90 = scmp.ne.s32.totalorder %s81, %s82
      %p91 = scmp.eq.s32.totalorder %s29, 0
      %p92 = por %p90, %p91
      %p93 = scmp.ne.s32.totalorder %s81, %s82
      %p94 = scmp.eq.s32.totalorder %s30, 1
      %p95 = por %p93, %p94
      %p97 = scmp.ne.s32.totalorder %s82, %s96
      %p98 = scmp.eq.s32.totalorder %s30, 0
      %p99 = por %p97, %p98
      %s101 = sadd.s32 %s100, 1
      %p104 = scmp.eq.s32.totalorder %s24, 1
      %p105 = scmp.ne.s32.totalorder %s100, %s102
      %p106 = scmp.eq.s32.totalorder %s24, 0
      %p107 = por %p105, %p106
      %p108 = scmp.ne.s32.totalorder %s100, %s102
      %p109 = scmp.eq.s32.totalorder %s29, 1
      %p110 = por %p108, %p109
      %p111 = scmp.ne.s32.totalorder %s102, %s103
      %p112 = scmp.eq.s32.totalorder %s29, 0
      %p113 = por %p111, %p112
      %p114 = scmp.ne.s32.totalorder %s102, %s103
      %p115 = scmp.eq.s32.totalorder %s30, 1
      %p116 = por %p114, %p115
      %p118 = scmp.ne.s32.totalorder %s103, %s117
      %p119 = scmp.eq.s32.totalorder %s30, 0
      %p120 = por %p118, %p119
      %s122 = sadd.s32 %s121, 1
      %p125 = scmp.eq.s32.totalorder %s24, 1
      %p126 = scmp.ne.s32.totalorder %s121, %s123
      %p127 = scmp.eq.s32.totalorder %s24, 0
      %p128 = por %p126, %p127
      %p129 = scmp.ne.s32.totalorder %s121, %s123
      %p130 = scmp.eq.s32.totalorder %s29, 1
      %p131 = por %p129, %p130
      %p132 = scmp.ne.s32.totalorder %s123, %s124
      %p133 = scmp.eq.s32.totalorder %s29, 0
      %p134 = por %p132, %p133
      %p135 = scmp.ne.s32.totalorder %s123, %s124
      %p136 = scmp.eq.s32.totalorder %s30, 1
      %p137 = por %p135, %p136
      %p139 = scmp.ne.s32.totalorder %s124, %s138
      %p140 = scmp.eq.s32.totalorder %s30, 0
      %p141 = por %p139, %p140
      %s143 = sadd.s32 %s142, 1
      %p146 = scmp.eq.s32.totalorder %s24, 1
      %p147 = scmp.ne.s32.totalorder %s142, %s144
      %p148 = scmp.eq.s32.totalorder %s24, 0
      %p149 = por %p147, %p148
      %p150 = scmp.ne.s32.totalorder %s142, %s144
      %p151 = scmp.eq.s32.totalorder %s29, 1
      %p152 = por %p150, %p151
      %p153 = scmp.ne.s32.totalorder %s144, %s145
      %p154 = scmp.eq.s32.totalorder %s29, 0
      %p155 = por %p153, %p154
      %p156 = scmp.ne.s32.totalorder %s144, %s145
      %p157 = scmp.eq.s32.totalorder %s30, 1
      %p158 = por %p156, %p157
      %p160 = scmp.ne.s32.totalorder %s145, %s159
      %p161 = scmp.eq.s32.totalorder %s30, 0
      %p162 = por %p160, %p161
      %s164 = sadd.s32 %s163, 1
      %p167 = scmp.eq.s32.totalorder %s24, 1
      %p168 = scmp.ne.s32.totalorder %s163, %s165
      %p169 = scmp.eq.s32.totalorder %s24, 0
      %p170 = por %p168, %p169
      %p171 = scmp.ne.s32.totalorder %s163, %s165
      %p172 = scmp.eq.s32.totalorder %s29, 1
      %p173 = por %p171, %p172
      %p174 = scmp.ne.s32.totalorder %s165, %s166
      %p175 = scmp.eq.s32.totalorder %s29, 0
      %p176 = por %p174, %p175
      %p177 = scmp.ne.s32.totalorder %s165, %s166
      %p178 = scmp.eq.s32.totalorder %s30, 1
      %p179 = por %p177, %p178
      %p181 = scmp.ne.s32.totalorder %s166, %s180
      %p182 = scmp.eq.s32.totalorder %s30, 0
      %p183 = por %p181, %p182
      %s185 = sadd.s32 %s184, 1
      %p188 = scmp.eq.s32.totalorder %s24, 1
      %p189 = scmp.ne.s32.totalorder %s184, %s186
      %p190 = scmp.eq.s32.totalorder %s24, 0
      %p191 = por %p189, %p190
      %p192 = scmp.ne.s32.totalorder %s184, %s186
      %p193 = scmp.eq.s32.totalorder %s29, 1
      %p194 = por %p192, %p193
      %p195 = scmp.ne.s32.totalorder %s186, %s187
      %p196 = scmp.eq.s32.totalorder %s29, 0
      %p197 = por %p195, %p196
      %p198 = scmp.ne.s32.totalorder %s186, %s187
      %p199 = scmp.eq.s32.totalorder %s30, 1
      %p200 = por %p198, %p199
      %p202 = scmp.ne.s32.totalorder %s187, %s201
      %p203 = scmp.eq.s32.totalorder %s30, 0
      %p204 = por %p202, %p203
      %s205 = ssub.s32 %s24, %s31
      %p206 = scmp.eq.s32.totalorder %s205, 0
      %s208 = sadd.s32 %s207, 1
      %s209 = scalar_select %p206, %s207, %s208
      %p212 = pneg %p206
      %p213 = scmp.eq.s32.totalorder %s24, 1
      %p214 = por %p212, %p213
      %p215 = scmp.ne.s32.totalorder %s207, %s210
      %p216 = scmp.eq.s32.totalorder %s24, 0
      %p217 = por %p215, %p216
      %p218 = scmp.ne.s32.totalorder %s207, %s210
      %p219 = scmp.eq.s32.totalorder %s29, 1
      %p220 = por %p218, %p219
      %p221 = scmp.ne.s32.totalorder %s210, %s211
      %p222 = scmp.eq.s32.totalorder %s29, 0
      %p223 = por %p221, %p222
      %p224 = scmp.ne.s32.totalorder %s210, %s211
      %p225 = scmp.eq.s32.totalorder %s30, 1
      %p226 = por %p224, %p225
      %p228 = scmp.ne.s32.totalorder %s211, %s227
      %p229 = scmp.eq.s32.totalorder %s30, 0
      %p230 = por %p228, %p229
      %p231 = scmp.le.s32.totalorder 1, %s24
      %p232 = scmp.lt.s32.totalorder %s24, 3
      %p233 = pnand %p231, %p232
      %p234 = pneg %p233
      // Predicated region
      $region9: #{block_forward.2} parent=5 // pred_check
        _
      $region10: #{block_forward.2} parent=5 // pred_check_branch
        %236 = sbr.rel (%p233) target = $region12
      $region11: #{block_forward.2} parent=5 // pred_region
        %s237 = ssub.s32 %s24, 1
        // Predicated region
        $region13: #{block_forward.2} parent=11 // pred_check
          %p238 = pneg %p71
        $region14: #{block_forward.2} parent=11 // pred_check_branch
          %240 = sbr.rel (%p238) target = $region16
        $region15: #{block_forward.2} parent=11 // pred_region
          %s242 = ssub.s32 16, 16
          %243 = vsyncadd [#allocation6], %s242
          %s245 = sshll.u32 [#allocation5], 4
          %s246 = int_to_ptr.vmem [resolvable:$true] %s245
          %248 = dma.hbm_to_vmem [thread:$0]  %s1, 16, %s246, [#allocation6]
        $region16: #{block_forward.2} parent=11 // pred_fallthru
          _
        // Predicated region
        $region17: #{block_forward.2} parent=11 // pred_check
          %p249 = pneg %p92
        $region18: #{block_forward.2} parent=11 // pred_check_branch
          %251 = sbr.rel (%p249) target = $region20
        $region19: #{block_forward.2} parent=11 // pred_region
          %s253 = ssub.s32 16, 16
          %254 = vsyncadd [#allocation6], %s253
          %s256 = sshll.u32 [#allocation7], 4
          %s257 = int_to_ptr.vmem [resolvable:$true] %s256
          %259 = dma.hbm_to_vmem [thread:$0]  %s2, 16, %s257, [#allocation6]
        $region20: #{block_forward.2} parent=11 // pred_fallthru
          _
        // Predicated region
        $region21: #{block_forward.2} parent=11 // pred_check
          %p260 = pneg %p113
        $region22: #{block_forward.2} parent=11 // pred_check_branch
          %262 = sbr.rel (%p260) target = $region24
        $region23: #{block_forward.2} parent=11 // pred_region
          %s264 = ssub.s32 256, 256
          %265 = vsyncadd [#allocation9], %s264
          %s266 = sshll.u32 [#allocation8], 4
          %s267 = int_to_ptr.vmem [resolvable:$true] %s266
          %272 = dma.hbm_to_vmem [thread:$0]  %s3, 256, %s267, [#allocation9], 64, 64, 4
        $region24: #{block_forward.2} parent=11 // pred_fallthru
          _
        // Predicated region
        $region25: #{block_forward.2} parent=11 // pred_check
          %p273 = pneg %p134
        $region26: #{block_forward.2} parent=11 // pred_check_branch
          %275 = sbr.rel (%p273) target = $region28
        $region27: #{block_forward.2} parent=11 // pred_region
          %s277 = ssub.s32 16, 16
          %278 = vsyncadd [#allocation9], %s277
          %s280 = sshll.u32 [#allocation10], 4
          %s281 = int_to_ptr.vmem [resolvable:$true] %s280
          %283 = dma.hbm_to_vmem [thread:$0]  %s4, 16, %s281, [#allocation9]
        $region28: #{block_forward.2} parent=11 // pred_fallthru
          _
        // Predicated region
        $region29: #{block_forward.2} parent=11 // pred_check
          %p284 = pneg %p155
        $region30: #{block_forward.2} parent=11 // pred_check_branch
          %286 = sbr.rel (%p284) target = $region32
        $region31: #{block_forward.2} parent=11 // pred_region
          %s288 = ssub.s32 1024, 1024
          %289 = vsyncadd [#allocation12], %s288
          %s290 = sshll.u32 [#allocation11], 4
          %s291 = int_to_ptr.vmem [resolvable:$true] %s290
          %296 = dma.hbm_to_vmem [thread:$0]  %s5, 1024, %s291, [#allocation12], 128, 128, 8
        $region32: #{block_forward.2} parent=11 // pred_fallthru
          _
        // Predicated region
        $region33: #{block_forward.2} parent=11 // pred_check
          %p297 = pneg %p176
        $region34: #{block_forward.2} parent=11 // pred_check_branch
          %299 = sbr.rel (%p297) target = $region36
        $region35: #{block_forward.2} parent=11 // pred_region
          %s301 = ssub.s32 256, 256
          %302 = vsyncadd [#allocation12], %s301
          %s303 = sshll.u32 [#allocation13], 4
          %s304 = int_to_ptr.vmem [resolvable:$true] %s303
          %309 = dma.hbm_to_vmem [thread:$0]  %s6, 256, %s304, [#allocation12], 64, 64, 4
        $region36: #{block_forward.2} parent=11 // pred_fallthru
          _
        // Predicated region
        $region37: #{block_forward.2} parent=11 // pred_check
          %p310 = pneg %p197
        $region38: #{block_forward.2} parent=11 // pred_check_branch
          %312 = sbr.rel (%p310) target = $region40
        $region39: #{block_forward.2} parent=11 // pred_region
          %s314 = ssub.s32 16, 16
          %315 = vsyncadd [#allocation15], %s314
          %s317 = sshll.u32 [#allocation14], 4
          %s318 = int_to_ptr.vmem [resolvable:$true] %s317
          %320 = dma.hbm_to_vmem [thread:$0]  %s7, 16, %s318, [#allocation15]
        $region40: #{block_forward.2} parent=11 // pred_fallthru
          _
      $region12: #{block_forward.2} parent=5 // pred_fallthru
        _
      %p321 = scmp.lt.s32.totalorder %s24, 2
      // Predicated region
      $region41: #{block_forward.2} parent=5 // pred_check
        %p322 = pneg %p321
      $region42: #{block_forward.2} parent=5 // pred_check_branch
        %324 = sbr.rel (%p322) target = $region44
      $region43: #{block_forward.2} parent=5 // pred_region
        // Predicated region
        $region45: #{block_forward.2} parent=43 // pred_check
          %p325 = pneg %p44
        $region46: #{block_forward.2} parent=43 // pred_check_branch
          %327 = sbr.rel (%p325) target = $region48
        $region47: #{block_forward.2} parent=43 // pred_region
          %s328 = sand.u32 %s34, 1
          %s329 = scalar_lea.sflag [#allocation3], %s328
          %s330 = sand.u32 %s34, 1
          %s331 = smul.addr %s330, 64
          %s332 = scalar_lea.vmem [#allocation2], %s331
          %s333 = smul.u32 8, %s24
          %s335 = ssub.s32 1024, 1024
          %336 = vsyncadd %s329, %s335
          %s337 = smul.addr %s333, 128
          %s338 = scalar_lea.hbm %s0, %s337
          %s339 = sshll.u32 %s332, 4
          %s340 = int_to_ptr.vmem [resolvable:$true] %s339
          %345 = dma.hbm_to_vmem [thread:$0]  %s338, 1024, %s340, %s329, 128, 128, 8
        $region48: #{block_forward.2} parent=43 // pred_fallthru
          _
      $region44: #{block_forward.2} parent=5 // pred_fallthru
        _
      %p346 = scmp.le.s32.totalorder 1, %s24
      %p347 = scmp.lt.s32.totalorder %s24, 3
      %p348 = pnand %p346, %p347
      %p349 = pneg %p348
      // Predicated region
      $region49: #{block_forward.2} parent=5 // pred_check
        _
      $region50: #{block_forward.2} parent=5 // pred_check_branch
        %351 = sbr.rel (%p348) target = $region52
      $region51: #{block_forward.2} parent=5 // pred_region
        %s352 = ssub.s32 %s24, 1
        %s353 = sand.u32 %s37, 1
        %s354 = scalar_lea.sflag [#allocation3], %s353
        %s355 = sand.u32 %s37, 1
        %s356 = smul.addr %s355, 64
        %s357 = scalar_lea.vmem [#allocation2], %s356
        // Predicated region
        $region53: #{block_forward.2} parent=51 // pred_check
          %p358 = pneg %p50
        $region54: #{block_forward.2} parent=51 // pred_check_branch
          %360 = sbr.rel (%p358) target = $region56
        $region55: #{block_forward.2} parent=51 // pred_region
          %361 = dma.done %s354, 1024
        $region56: #{block_forward.2} parent=51 // pred_fallthru
          _
        // Predicated region
        $region57: #{block_forward.2} parent=51 // pred_check
          %p362 = pneg %p71
        $region58: #{block_forward.2} parent=51 // pred_check_branch
          %364 = sbr.rel (%p362) target = $region60
        $region59: #{block_forward.2} parent=51 // pred_region
          %365 = dma.done [#allocation6], 16
        $region60: #{block_forward.2} parent=51 // pred_fallthru
          _
        // Predicated region
        $region61: #{block_forward.2} parent=51 // pred_check
          %p366 = pneg %p92
        $region62: #{block_forward.2} parent=51 // pred_check_branch
          %368 = sbr.rel (%p366) target = $region64
        $region63: #{block_forward.2} parent=51 // pred_region
          %369 = dma.done [#allocation6], 16
        $region64: #{block_forward.2} parent=51 // pred_fallthru
          _
        // Predicated region
        $region65: #{block_forward.2} parent=51 // pred_check
          %p370 = pneg %p113
        $region66: #{block_forward.2} parent=51 // pred_check_branch
          %372 = sbr.rel (%p370) target = $region68
        $region67: #{block_forward.2} parent=51 // pred_region
          %373 = dma.done [#allocation9], 256
        $region68: #{block_forward.2} parent=51 // pred_fallthru
          _
        // Predicated region
        $region69: #{block_forward.2} parent=51 // pred_check
          %p374 = pneg %p134
        $region70: #{block_forward.2} parent=51 // pred_check_branch
          %376 = sbr.rel (%p374) target = $region72
        $region71: #{block_forward.2} parent=51 // pred_region
          %377 = dma.done [#allocation9], 16
        $region72: #{block_forward.2} parent=51 // pred_fallthru
          _
        // Predicated region
        $region73: #{block_forward.2} parent=51 // pred_check
          %p378 = pneg %p155
        $region74: #{block_forward.2} parent=51 // pred_check_branch
          %380 = sbr.rel (%p378) target = $region76
        $region75: #{block_forward.2} parent=51 // pred_region
          %381 = dma.done [#allocation12], 1024
        $region76: #{block_forward.2} parent=51 // pred_fallthru
          _
        // Predicated region
        $region77: #{block_forward.2} parent=51 // pred_check
          %p382 = pneg %p176
        $region78: #{block_forward.2} parent=51 // pred_check_branch
          %384 = sbr.rel (%p382) target = $region80
        $region79: #{block_forward.2} parent=51 // pred_region
          %385 = dma.done [#allocation12], 256
        $region80: #{block_forward.2} parent=51 // pred_fallthru
          _
        // Predicated region
        $region81: #{block_forward.2} parent=51 // pred_check
          %p386 = pneg %p197
        $region82: #{block_forward.2} parent=51 // pred_check_branch
          %388 = sbr.rel (%p386) target = $region84
        $region83: #{block_forward.2} parent=51 // pred_region
          %389 = dma.done [#allocation15], 16
        $region84: #{block_forward.2} parent=51 // pred_fallthru
          _
        %s390 = sand.u32 %s37, 1
        %s391 = scalar_lea.sflag [#allocation3], %s390
        %s392 = sand.u32 %s37, 1
        %s393 = smul.addr %s392, 64
        %s394 = scalar_lea.vmem [#allocation2], %s393
        %p395 = pneg %p50
        %p396 = pneg %p47
        %p397 = pneg %p71
        %p398 = pneg %p68
        %p399 = pneg %p92
        %p400 = pneg %p89
        %p401 = pneg %p113
        %p402 = pneg %p110
        %p403 = pneg %p134
        %p404 = pneg %p131
        %p405 = pneg %p155
        %p406 = pneg %p152
        %p407 = pneg %p176
        %p408 = pneg %p173
        %p409 = pneg %p197
        %p410 = pneg %p194
        %p411 = pneg %p223
        %p412 = pneg %p220
        %s413 = sand.u32 %s210, 1
        %s414 = scalar_lea.sflag [#allocation4], %s413
        %s415 = sand.u32 %s210, 1
        %s416 = smul.addr %s415, 64
        %s417 = scalar_lea.vmem [#allocation16], %s416
        %s418 = smul.u32 8, %s29
        %s419 = smul.u32 8, %s29
        %v421 = vld [vmem:[%s357] sm:$0xff]
        %v422 = vld [vmem:[%s357 + $0x8] sm:$0xff]
        %v423 = vld [vmem:[%s357 + $0x10] sm:$0xff]
        %v424 = vld [vmem:[%s357 + $0x18] sm:$0xff]
        %v425 = vld [vmem:[%s357 + $0x20] sm:$0xff]
        %v426 = vld [vmem:[%s357 + $0x28] sm:$0xff]
        %v427 = vld [vmem:[%s357 + $0x30] sm:$0xff]
        %v428 = vld [vmem:[%s357 + $0x38] sm:$0xff]
        %vm429 = vcmask 261120
        %v430 = vsel %vm429, %v421, 0.0
        %431 = vadd.xlane.f32.xlu0 %v430
        %v432 = vpop.xlane.xlu0 %431
        %v433 = vsel %vm429, %v422, 0.0
        %434 = vadd.xlane.f32.xlu0 %v433
        %v435 = vpop.xlane.xlu0 %434
        %v436 = vsel %vm429, %v423, 0.0
        %437 = vadd.xlane.f32.xlu0 %v436
        %v438 = vpop.xlane.xlu0 %437
        %v439 = vsel %vm429, %v424, 0.0
        %440 = vadd.xlane.f32.xlu0 %v439
        %v441 = vpop.xlane.xlu0 %440
        %v442 = vsel %vm429, %v425, 0.0
        %443 = vadd.xlane.f32.xlu0 %v442
        %v444 = vpop.xlane.xlu0 %443
        %v445 = vsel %vm429, %v426, 0.0
        %446 = vadd.xlane.f32.xlu0 %v445
        %v447 = vpop.xlane.xlu0 %446
        %v448 = vsel %vm429, %v427, 0.0
        %449 = vadd.xlane.f32.xlu0 %v448
        %v450 = vpop.xlane.xlu0 %449
        %v451 = vsel %vm429, %v428, 0.0
        %452 = vadd.xlane.f32.xlu0 %v451
        %v453 = vpop.xlane.xlu0 %452
        %v454 = vrcp.pop 32.0
        %v455 = vmul.f32 %v432, %v454
        %v456 = vmul.f32 %v435, %v454
        %v457 = vmul.f32 %v438, %v454
        %v458 = vmul.f32 %v441, %v454
        %v459 = vmul.f32 %v444, %v454
        %v460 = vmul.f32 %v447, %v454
        %v461 = vmul.f32 %v450, %v454
        %v462 = vmul.f32 %v453, %v454
        %v463 = vsub.f32 %v421, %v455
        %v464 = vsub.f32 %v422, %v456
        %v465 = vsub.f32 %v423, %v457
        %v466 = vsub.f32 %v424, %v458
        %v467 = vsub.f32 %v425, %v459
        %v468 = vsub.f32 %v426, %v460
        %v469 = vsub.f32 %v427, %v461
        %v470 = vsub.f32 %v428, %v462
        %v471 = vmul.f32 %v463, %v463
        %v472 = vmul.f32 %v464, %v464
        %v473 = vmul.f32 %v465, %v465
        %v474 = vmul.f32 %v466, %v466
        %v475 = vmul.f32 %v467, %v467
        %v476 = vmul.f32 %v468, %v468
        %v477 = vmul.f32 %v469, %v469
        %v478 = vmul.f32 %v470, %v470
        %v479 = vsel %vm429, %v471, 0.0
        %480 = vadd.xlane.f32.xlu0 %v479
        %v481 = vpop.xlane.xlu0 %480
        %v482 = vsel %vm429, %v472, 0.0
        %483 = vadd.xlane.f32.xlu0 %v482
        %v484 = vpop.xlane.xlu0 %483
        %v485 = vsel %vm429, %v473, 0.0
        %486 = vadd.xlane.f32.xlu0 %v485
        %v487 = vpop.xlane.xlu0 %486
        %v488 = vsel %vm429, %v474, 0.0
        %489 = vadd.xlane.f32.xlu0 %v488
        %v490 = vpop.xlane.xlu0 %489
        %v491 = vsel %vm429, %v475, 0.0
        %492 = vadd.xlane.f32.xlu0 %v491
        %v493 = vpop.xlane.xlu0 %492
        %v494 = vsel %vm429, %v476, 0.0
        %495 = vadd.xlane.f32.xlu0 %v494
        %v496 = vpop.xlane.xlu0 %495
        %v497 = vsel %vm429, %v477, 0.0
        %498 = vadd.xlane.f32.xlu0 %v497
        %v499 = vpop.xlane.xlu0 %498
        %v500 = vsel %vm429, %v478, 0.0
        %501 = vadd.xlane.f32.xlu0 %v500
        %v502 = vpop.xlane.xlu0 %501
        %v503 = vmul.f32 %v481, %v454
        %v504 = vmul.f32 %v484, %v454
        %v505 = vmul.f32 %v487, %v454
        %v506 = vmul.f32 %v490, %v454
        %v507 = vmul.f32 %v493, %v454
        %v508 = vmul.f32 %v496, %v454
        %v509 = vmul.f32 %v499, %v454
        %v510 = vmul.f32 %v502, %v454
        %v511 = vadd.f32 %v503, 1e-05
        %v512 = vadd.f32 %v504, 1e-05
        %v513 = vadd.f32 %v505, 1e-05
        %v514 = vadd.f32 %v506, 1e-05
        %v515 = vadd.f32 %v507, 1e-05
        %v516 = vadd.f32 %v508, 1e-05
        %v517 = vadd.f32 %v509, 1e-05
        %v518 = vadd.f32 %v510, 1e-05
        %v519 = vrsqrt.pop %v511
        %v520 = vrsqrt.pop %v512
        %v521 = vrsqrt.pop %v513
        %v522 = vrsqrt.pop %v514
        %v523 = vrsqrt.pop %v515
        %v524 = vrsqrt.pop %v516
        %v525 = vrsqrt.pop %v517
        %v526 = vrsqrt.pop %v518
        %v527 = vmul.f32 %v463, %v519
        %v528 = vmul.f32 %v464, %v520
        %v529 = vmul.f32 %v465, %v521
        %v530 = vmul.f32 %v466, %v522
        %v531 = vmul.f32 %v467, %v523
        %v532 = vmul.f32 %v468, %v524
        %v533 = vmul.f32 %v469, %v525
        %v534 = vmul.f32 %v470, %v526
        %v535 = vld [vmem:[#allocation5] sm:$0x1]
        %v537 = vlaneseq
        %v538 = vshrl.u32 %v537, 7
        %v539 = vsub.s32 0, %v538
        %v540 = vrot.slane %v535, %v539
        %v542 = vmul.f32 %v527, %v540
        %v543 = vmul.f32 %v528, %v540
        %v544 = vmul.f32 %v529, %v540
        %v545 = vmul.f32 %v530, %v540
        %v546 = vmul.f32 %v531, %v540
        %v547 = vmul.f32 %v532, %v540
        %v548 = vmul.f32 %v533, %v540
        %v549 = vmul.f32 %v534, %v540
        %v550 = vld [vmem:[#allocation7] sm:$0x1]
        %v552 = vlaneseq
        %v553 = vshrl.u32 %v552, 7
        %v554 = vsub.s32 0, %v553
        %v555 = vrot.slane %v550, %v554
        %v557 = vadd.f32 %v542, %v555
        %v558 = vadd.f32 %v543, %v555
        %v559 = vadd.f32 %v544, %v555
        %v560 = vadd.f32 %v545, %v555
        %v561 = vadd.f32 %v546, %v555
        %v562 = vadd.f32 %v547, %v555
        %v563 = vadd.f32 %v548, %v555
        %v564 = vadd.f32 %v549, %v555
        %v565 = vpack.c.bf16 %v558, %v557
        %v566 = vpack.c.bf16 %v560, %v559
        %v567 = vpack.c.bf16 %v562, %v561
        %v568 = vpack.c.bf16 %v564, %v563
        %v569 = vld [vmem:[#allocation8] sm:$0xf]
        %v570 = vld [vmem:[#allocation8 + $0x4] sm:$0xf]
        %v571 = vld [vmem:[#allocation8 + $0x8] sm:$0xf]
        %v572 = vld [vmem:[#allocation8 + $0xc] sm:$0xf]
        %v573 = vld [vmem:[#allocation10] sm:$0x1]
        %v575 = vlaneseq
        %v576 = vshrl.u32 %v575, 7
        %v577 = vsub.s32 0, %v576
        %v578 = vrot.slane %v573, %v577
        %v584 = vunpack.c.l.b16 %v569
        %v585 = vunpack.c.l.b16 %v570
        %v586 = vunpack.c.l.b16 %v571
        %v587 = vunpack.c.l.b16 %v572
        %v588 = vpack.c.b16 %v585, %v584
        %v589 = vpack.c.b16 %v587, %v586
        %v593 = vsel %vm429, %v565, 0
        %v596 = vsel %vm429, %v566, 0
        %v599 = vsel %vm429, %v567, 0
        %v602 = vsel %vm429, %v568, 0
        %604 = vmatprep.subr.bf16.mxu0 0
        %605 = vmatpush1.bf16.msra.mxu0 %v588
        %606 = vmatprep.subr.bf16.mxu0 0
        %607 = vmatpush1.bf16.msra.mxu0 %v589
        %608 = vmatprep.subr.bf16.mxu0 0
        %609 = vmatpush1.bf16.msra.mxu0 0
        %610 = vmatprep.subr.bf16.mxu0 0
        %611 = vmatpush1.bf16.msra.mxu0 0
        %612 = vmatprep.subr.bf16.mxu0 0
        %613 = vmatpush1.bf16.msra.mxu0 0
        %614 = vmatprep.subr.bf16.mxu0 0
        %615 = vmatpush1.bf16.msra.mxu0 0
        %616 = vmatprep.subr.bf16.mxu0 0
        %617 = vmatpush1.bf16.msra.mxu0 0
        %618 = vmatprep.subr.bf16.mxu0 0
        %619 = vmatpush1.bf16.msra.mxu0 0
        %620 = vmatprep.subr.bf16.mxu0 0
        %621 = vmatpush1.bf16.msra.mxu0 0
        %622 = vmatprep.subr.bf16.mxu0 0
        %623 = vmatpush1.bf16.msra.mxu0 0
        %624 = vmatprep.subr.bf16.mxu0 0
        %625 = vmatpush1.bf16.msra.mxu0 0
        %626 = vmatprep.subr.bf16.mxu0 0
        %627 = vmatpush1.bf16.msra.mxu0 0
        %628 = vmatprep.subr.bf16.mxu0 0
        %629 = vmatpush1.bf16.msra.mxu0 0
        %630 = vmatprep.subr.bf16.mxu0 0
        %631 = vmatpush1.bf16.msra.mxu0 0
        %632 = vmatprep.subr.bf16.mxu0 0
        %633 = vmatpush1.bf16.msra.mxu0 0
        %634 = vmatprep.subr.bf16.mxu0 0
        %635 = vmatpush1.bf16.msra.mxu0 0
        %636 = vmatprep.mubr.bf16.mxu0 0
        %637 = vmatmul.mubr.bf16.gmra.mrb[0].mxu0 %v593
        %v638 = vpop.f32.mrb[0].mxu0
        %v639 = vadd.f32 %v578, %v638
        %v640 = vpop.f32.mrb[0].mxu0
        %v641 = vpop.f32.mrb[0].mxu0
        %v642 = vadd.f32 %v578, %v641
        %v643 = vpop.f32.mrb[0].mxu0
        %644 = vmatprep.mubr.bf16.mxu0 0
        %645 = vmatmul.mubr.bf16.gmra.mrb[0].mxu0 %v596
        %v646 = vpop.f32.mrb[0].mxu0
        %v647 = vadd.f32 %v578, %v646
        %v648 = vpop.f32.mrb[0].mxu0
        %v649 = vpop.f32.mrb[0].mxu0
        %v650 = vadd.f32 %v578, %v649
        %v651 = vpop.f32.mrb[0].mxu0
        %652 = vmatprep.mubr.bf16.mxu0 0
        %653 = vmatmul.mubr.bf16.gmra.mrb[0].mxu0 %v599
        %v654 = vpop.f32.mrb[0].mxu0
        %v655 = vadd.f32 %v578, %v654
        %v656 = vpop.f32.mrb[0].mxu0
        %v657 = vpop.f32.mrb[0].mxu0
        %v658 = vadd.f32 %v578, %v657
        %v659 = vpop.f32.mrb[0].mxu0
        %660 = vmatprep.mubr.bf16.mxu0 0
        %661 = vmatmul.mubr.bf16.gmra.mrb[0].mxu0 %v602
        %v662 = vpop.f32.mrb[0].mxu0
        %v663 = vadd.f32 %v578, %v662
        %v664 = vpop.f32.mrb[0].mxu0
        %v665 = vpop.f32.mrb[0].mxu0
        %v666 = vadd.f32 %v578, %v665
        %v667 = vpop.f32.mrb[0].mxu0
        %668 = vdwg.mxu0
        %677 = vrot.lane.b32.xlu0 %v639, 120
        %v678 = vpop.permute.xlu0 %677
        %679 = vrot.lane.b32.xlu0 %v642, 120
        %v680 = vpop.permute.xlu0 %679
        %681 = vrot.lane.b32.xlu0 %v647, 120
        %v682 = vpop.permute.xlu0 %681
        %683 = vrot.lane.b32.xlu0 %v650, 120
        %v684 = vpop.permute.xlu0 %683
        %685 = vrot.lane.b32.xlu0 %v655, 120
        %v686 = vpop.permute.xlu0 %685
        %687 = vrot.lane.b32.xlu0 %v658, 120
        %v688 = vpop.permute.xlu0 %687
        %689 = vrot.lane.b32.xlu0 %v663, 120
        %v690 = vpop.permute.xlu0 %689
        %691 = vrot.lane.b32.xlu0 %v666, 120
        %v692 = vpop.permute.xlu0 %691
        %701 = vrot.lane.b32.xlu0 %v639, 112
        %v702 = vpop.permute.xlu0 %701
        %703 = vrot.lane.b32.xlu0 %v642, 112
        %v704 = vpop.permute.xlu0 %703
        %705 = vrot.lane.b32.xlu0 %v647, 112
        %v706 = vpop.permute.xlu0 %705
        %707 = vrot.lane.b32.xlu0 %v650, 112
        %v708 = vpop.permute.xlu0 %707
        %709 = vrot.lane.b32.xlu0 %v655, 112
        %v710 = vpop.permute.xlu0 %709
        %711 = vrot.lane.b32.xlu0 %v658, 112
        %v712 = vpop.permute.xlu0 %711
        %713 = vrot.lane.b32.xlu0 %v663, 112
        %v714 = vpop.permute.xlu0 %713
        %715 = vrot.lane.b32.xlu0 %v666, 112
        %v716 = vpop.permute.xlu0 %715
        %725 = vrot.lane.b32.xlu0 %v639, 104
        %v726 = vpop.permute.xlu0 %725
        %727 = vrot.lane.b32.xlu0 %v642, 104
        %v728 = vpop.permute.xlu0 %727
        %729 = vrot.lane.b32.xlu0 %v647, 104
        %v730 = vpop.permute.xlu0 %729
        %731 = vrot.lane.b32.xlu0 %v650, 104
        %v732 = vpop.permute.xlu0 %731
        %733 = vrot.lane.b32.xlu0 %v655, 104
        %v734 = vpop.permute.xlu0 %733
        %735 = vrot.lane.b32.xlu0 %v658, 104
        %v736 = vpop.permute.xlu0 %735
        %737 = vrot.lane.b32.xlu0 %v663, 104
        %v738 = vpop.permute.xlu0 %737
        %739 = vrot.lane.b32.xlu0 %v666, 104
        %v740 = vpop.permute.xlu0 %739
        %v749 = vpack.c.bf16 %v642, %v639
        %v750 = vpack.c.bf16 %v650, %v647
        %v751 = vpack.c.bf16 %v658, %v655
        %v752 = vpack.c.bf16 %v666, %v663
        %v753 = vpack.c.bf16 %v680, %v678
        %v754 = vpack.c.bf16 %v684, %v682
        %v755 = vpack.c.bf16 %v688, %v686
        %v756 = vpack.c.bf16 %v692, %v690
        %v757 = vpack.c.bf16 %v704, %v702
        %v758 = vpack.c.bf16 %v708, %v706
        %v759 = vpack.c.bf16 %v712, %v710
        %v760 = vpack.c.bf16 %v716, %v714
        %v761 = vpack.c.bf16 %v728, %v726
        %v762 = vpack.c.bf16 %v732, %v730
        %v763 = vpack.c.bf16 %v736, %v734
        %v764 = vpack.c.bf16 %v740, %v738
        %766 = vrot.lane.b32.xlu0 %v749, 96
        %v767 = vpop.permute.xlu0 %766
        %vm768 = vcmask 64512
        %v770 = vsel %vm768, %v749, 0
        %v773 = vsel %vm768, %v767, 0
        %775 = vmatprep.subr.bf16.mxu0 0
        %776 = vmatpush1.bf16.xpose.msra.mxu0 %v773
        %777 = vmatprep.subr.bf16.mxu0 0
        %778 = vmatpush1.bf16.xpose.msra.mxu0 0
        %779 = vmatprep.subr.bf16.mxu0 0
        %780 = vmatpush1.bf16.xpose.msra.mxu0 0
        %781 = vmatprep.subr.bf16.mxu0 0
        %782 = vmatpush1.bf16.xpose.msra.mxu0 0
        %783 = vmatprep.subr.bf16.mxu0 0
        %784 = vmatpush1.bf16.xpose.msra.mxu0 0
        %785 = vmatprep.subr.bf16.mxu0 0
        %786 = vmatpush1.bf16.xpose.msra.mxu0 0
        %787 = vmatprep.subr.bf16.mxu0 0
        %788 = vmatpush1.bf16.xpose.msra.mxu0 0
        %789 = vmatprep.subr.bf16.mxu0 0
        %790 = vmatpush1.bf16.xpose.msra.mxu0 0
        %791 = vmatprep.subr.bf16.mxu0 0
        %792 = vmatpush1.bf16.xpose.msra.mxu0 0
        %793 = vmatprep.subr.bf16.mxu0 0
        %794 = vmatpush1.bf16.xpose.msra.mxu0 0
        %795 = vmatprep.subr.bf16.mxu0 0
        %796 = vmatpush1.bf16.xpose.msra.mxu0 0
        %797 = vmatprep.subr.bf16.mxu0 0
        %798 = vmatpush1.bf16.xpose.msra.mxu0 0
        %799 = vmatprep.subr.bf16.mxu0 0
        %800 = vmatpush1.bf16.xpose.msra.mxu0 0
        %801 = vmatprep.subr.bf16.mxu0 0
        %802 = vmatpush1.bf16.xpose.msra.mxu0 0
        %803 = vmatprep.subr.bf16.mxu0 0
        %804 = vmatpush1.bf16.xpose.msra.mxu0 0
        %805 = vmatprep.subr.bf16.mxu0 0
        %806 = vmatpush1.bf16.xpose.msra.mxu0 0
        %807 = vmatprep.mubr.bf16.mxu0 0
        %808 = vmatmul.mubr.bf16.gmra.mrb[0].mxu0 %v770
        %v809 = vpop.f32.mrb[0].mxu0
        %v810 = vadd.f32 0.0, %v809
        %v811 = vpop.f32.mrb[0].mxu0
        %v812 = vpop.f32.mrb[0].mxu0
        %v813 = vadd.f32 0.0, %v812
        %v814 = vpop.f32.mrb[0].mxu0
        %815 = vdwg.mxu0
        %817 = vrot.lane.b32.xlu0 %v750, 96
        %v818 = vpop.permute.xlu0 %817
        %v820 = vsel %vm768, %v750, 0
        %v823 = vsel %vm768, %v818, 0
        %825 = vmatprep.subr.bf16.mxu0 0
        %826 = vmatpush1.bf16.xpose.msra.mxu0 %v823
        %827 = vmatprep.subr.bf16.mxu0 0
        %828 = vmatpush1.bf16.xpose.msra.mxu0 0
        %829 = vmatprep.subr.bf16.mxu0 0
        %830 = vmatpush1.bf16.xpose.msra.mxu0 0
        %831 = vmatprep.subr.bf16.mxu0 0
        %832 = vmatpush1.bf16.xpose.msra.mxu0 0
        %833 = vmatprep.subr.bf16.mxu0 0
        %834 = vmatpush1.bf16.xpose.msra.mxu0 0
        %835 = vmatprep.subr.bf16.mxu0 0
        %836 = vmatpush1.bf16.xpose.msra.mxu0 0
        %837 = vmatprep.subr.bf16.mxu0 0
        %838 = vmatpush1.bf16.xpose.msra.mxu0 0
        %839 = vmatprep.subr.bf16.mxu0 0
        %840 = vmatpush1.bf16.xpose.msra.mxu0 0
        %841 = vmatprep.subr.bf16.mxu0 0
        %842 = vmatpush1.bf16.xpose.msra.mxu0 0
        %843 = vmatprep.subr.bf16.mxu0 0
        %844 = vmatpush1.bf16.xpose.msra.mxu0 0
        %845 = vmatprep.subr.bf16.mxu0 0
        %846 = vmatpush1.bf16.xpose.msra.mxu0 0
        %847 = vmatprep.subr.bf16.mxu0 0
        %848 = vmatpush1.bf16.xpose.msra.mxu0 0
        %849 = vmatprep.subr.bf16.mxu0 0
        %850 = vmatpush1.bf16.xpose.msra.mxu0 0
        %851 = vmatprep.subr.bf16.mxu0 0
        %852 = vmatpush1.bf16.xpose.msra.mxu0 0
        %853 = vmatprep.subr.bf16.mxu0 0
        %854 = vmatpush1.bf16.xpose.msra.mxu0 0
        %855 = vmatprep.subr.bf16.mxu0 0
        %856 = vmatpush1.bf16.xpose.msra.mxu0 0
        %857 = vmatprep.mubr.bf16.mxu0 0
        %858 = vmatmul.mubr.bf16.gmra.mrb[0].mxu0 %v820
        %v859 = vpop.f32.mrb[0].mxu0
        %v860 = vadd.f32 0.0, %v859
        %v861 = vpop.f32.mrb[0].mxu0
        %v862 = vpop.f32.mrb[0].mxu0
        %v863 = vadd.f32 0.0, %v862
        %v864 = vpop.f32.mrb[0].mxu0
        %865 = vdwg.mxu0
        %867 = vrot.lane.b32.xlu0 %v751, 96
        %v868 = vpop.permute.xlu0 %867
        %v870 = vsel %vm768, %v751, 0
        %v873 = vsel %vm768, %v868, 0
        %875 = vmatprep.subr.bf16.mxu0 0
        %876 = vmatpush1.bf16.xpose.msra.mxu0 %v873
        %877 = vmatprep.subr.bf16.mxu0 0
        %878 = vmatpush1.bf16.xpose.msra.mxu0 0
        %879 = vmatprep.subr.bf16.mxu0 0
        %880 = vmatpush1.bf16.xpose.msra.mxu0 0
        %881 = vmatprep.subr.bf16.mxu0 0
        %882 = vmatpush1.bf16.xpose.msra.mxu0 0
        %883 = vmatprep.subr.bf16.mxu0 0
        %884 = vmatpush1.bf16.xpose.msra.mxu0 0
        %885 = vmatprep.subr.bf16.mxu0 0
        %886 = vmatpush1.bf16.xpose.msra.mxu0 0
        %887 = vmatprep.subr.bf16.mxu0 0
        %888 = vmatpush1.bf16.xpose.msra.mxu0 0
        %889 = vmatprep.subr.bf16.mxu0 0
        %890 = vmatpush1.bf16.xpose.msra.mxu0 0
        %891 = vmatprep.subr.bf16.mxu0 0
        %892 = vmatpush1.bf16.xpose.msra.mxu0 0
        %893 = vmatprep.subr.bf16.mxu0 0
        %894 = vmatpush1.bf16.xpose.msra.mxu0 0
        %895 = vmatprep.subr.bf16.mxu0 0
        %896 = vmatpush1.bf16.xpose.msra.mxu0 0
        %897 = vmatprep.subr.bf16.mxu0 0
        %898 = vmatpush1.bf16.xpose.msra.mxu0 0
        %899 = vmatprep.subr.bf16.mxu0 0
        %900 = vmatpush1.bf16.xpose.msra.mxu0 0
        %901 = vmatprep.subr.bf16.mxu0 0
        %902 = vmatpush1.bf16.xpose.msra.mxu0 0
        %903 = vmatprep.subr.bf16.mxu0 0
        %904 = vmatpush1.bf16.xpose.msra.mxu0 0
        %905 = vmatprep.subr.bf16.mxu0 0
        %906 = vmatpush1.bf16.xpose.msra.mxu0 0
        %907 = vmatprep.mubr.bf16.mxu0 0
        %908 = vmatmul.mubr.bf16.gmra.mrb[0].mxu0 %v870
        %v909 = vpop.f32.mrb[0].mxu0
        %v910 = vadd.f32 0.0, %v909
        %v911 = vpop.f32.mrb[0].mxu0
        %v912 = vpop.f32.mrb[0].mxu0
        %v913 = vadd.f32 0.0, %v912
        %v914 = vpop.f32.mrb[0].mxu0
        %915 = vdwg.mxu0
        %917 = vrot.lane.b32.xlu0 %v752, 96
        %v918 = vpop.permute.xlu0 %917
        %v920 = vsel %vm768, %v752, 0
        %v923 = vsel %vm768, %v918, 0
        %925 = vmatprep.subr.bf16.mxu0 0
        %926 = vmatpush1.bf16.xpose.msra.mxu0 %v923
        %927 = vmatprep.subr.bf16.mxu0 0
        %928 = vmatpush1.bf16.xpose.msra.mxu0 0
        %929 = vmatprep.subr.bf16.mxu0 0
        %930 = vmatpush1.bf16.xpose.msra.mxu0 0
        %931 = vmatprep.subr.bf16.mxu0 0
        %932 = vmatpush1.bf16.xpose.msra.mxu0 0
        %933 = vmatprep.subr.bf16.mxu0 0
        %934 = vmatpush1.bf16.xpose.msra.mxu0 0
        %935 = vmatprep.subr.bf16.mxu0 0
        %936 = vmatpush1.bf16.xpose.msra.mxu0 0
        %937 = vmatprep.subr.bf16.mxu0 0
        %938 = vmatpush1.bf16.xpose.msra.mxu0 0
        %939 = vmatprep.subr.bf16.mxu0 0
        %940 = vmatpush1.bf16.xpose.msra.mxu0 0
        %941 = vmatprep.subr.bf16.mxu0 0
        %942 = vmatpush1.bf16.xpose.msra.mxu0 0
        %943 = vmatprep.subr.bf16.mxu0 0
        %944 = vmatpush1.bf16.xpose.msra.mxu0 0
        %945 = vmatprep.subr.bf16.mxu0 0
        %946 = vmatpush1.bf16.xpose.msra.mxu0 0
        %947 = vmatprep.subr.bf16.mxu0 0
        %948 = vmatpush1.bf16.xpose.msra.mxu0 0
        %949 = vmatprep.subr.bf16.mxu0 0
        %950 = vmatpush1.bf16.xpose.msra.mxu0 0
        %951 = vmatprep.subr.bf16.mxu0 0
        %952 = vmatpush1.bf16.xpose.msra.mxu0 0
        %953 = vmatprep.subr.bf16.mxu0 0
        %954 = vmatpush1.bf16.xpose.msra.mxu0 0
        %955 = vmatprep.subr.bf16.mxu0 0
        %956 = vmatpush1.bf16.xpose.msra.mxu0 0
        %957 = vmatprep.mubr.bf16.mxu0 0
        %958 = vmatmul.mubr.bf16.gmra.mrb[0].mxu0 %v920
        %v959 = vpop.f32.mrb[0].mxu0
        %v960 = vadd.f32 0.0, %v959
        %v961 = vpop.f32.mrb[0].mxu0
        %v962 = vpop.f32.mrb[0].mxu0
        %v963 = vadd.f32 0.0, %v962
        %v964 = vpop.f32.mrb[0].mxu0
        %965 = vdwg.mxu0
        %967 = vrot.lane.b32.xlu0 %v753, 96
        %v968 = vpop.permute.xlu0 %967
        %v970 = vsel %vm768, %v753, 0
        %v973 = vsel %vm768, %v968, 0
        %975 = vmatprep.subr.bf16.mxu0 0
        %976 = vmatpush1.bf16.xpose.msra.mxu0 %v973
        %977 = vmatprep.subr.bf16.mxu0 0
        %978 = vmatpush1.bf16.xpose.msra.mxu0 0
        %979 = vmatprep.subr.bf16.mxu0 0
        %980 = vmatpush1.bf16.xpose.msra.mxu0 0
        %981 = vmatprep.subr.bf16.mxu0 0
        %982 = vmatpush1.bf16.xpose.msra.mxu0 0
        %983 = vmatprep.subr.bf16.mxu0 0
        %984 = vmatpush1.bf16.xpose.msra.mxu0 0
        %985 = vmatprep.subr.bf16.mxu0 0
        %986 = vmatpush1.bf16.xpose.msra.mxu0 0
        %987 = vmatprep.subr.bf16.mxu0 0
        %988 = vmatpush1.bf16.xpose.msra.mxu0 0
        %989 = vmatprep.subr.bf16.mxu0 0
        %990 = vmatpush1.bf16.xpose.msra.mxu0 0
        %991 = vmatprep.subr.bf16.mxu0 0
        %992 = vmatpush1.bf16.xpose.msra.mxu0 0
        %993 = vmatprep.subr.bf16.mxu0 0
        %994 = vmatpush1.bf16.xpose.msra.mxu0 0
        %995 = vmatprep.subr.bf16.mxu0 0
        %996 = vmatpush1.bf16.xpose.msra.mxu0 0
        %997 = vmatprep.subr.bf16.mxu0 0
        %998 = vmatpush1.bf16.xpose.msra.mxu0 0
        %999 = vmatprep.subr.bf16.mxu0 0
        %1000 = vmatpush1.bf16.xpose.msra.mxu0 0
        %1001 = vmatprep.subr.bf16.mxu0 0
        %1002 = vmatpush1.bf16.xpose.msra.mxu0 0
        %1003 = vmatprep.subr.bf16.mxu0 0
        %1004 = vmatpush1.bf16.xpose.msra.mxu0 0
        %1005 = vmatprep.subr.bf16.mxu0 0
        %1006 = vmatpush1.bf16.xpose.msra.mxu0 0
        %1007 = vmatprep.mubr.bf16.mxu0 0
        %1008 = vmatmul.mubr.bf16.gmra.mrb[0].mxu0 %v970
        %v1009 = vpop.f32.mrb[0].mxu0
        %v1010 = vadd.f32 0.0, %v1009
        %v1011 = vpop.f32.mrb[0].mxu0
        %v1012 = vpop.f32.mrb[0].mxu0
        %v1013 = vadd.f32 0.0, %v1012
        %v1014 = vpop.f32.mrb[0].mxu0
        %1015 = vdwg.mxu0
        %1017 = vrot.lane.b32.xlu0 %v754, 96
        %v1018 = vpop.permute.xlu0 %1017
        %v1020 = vsel %vm768, %v754, 0
        %v1023 = vsel %vm768, %v1018, 0
        %1025 = vmatprep.subr.bf16.mxu0 0
        %1026 = vmatpush1.bf16.xpose.msra.mxu0 %v1023
        %1027 = vmatprep.subr.bf16.mxu0 0
        %1028 = vmatpush1.bf16.xpose.msra.mxu0 0
        %1029 = vmatprep.subr.bf16.mxu0 0
        %1030 = vmatpush1.bf16.xpose.msra.mxu0 0
        %1031 = vmatprep.subr.bf16.mxu0 0
        %1032 = vmatpush1.bf16.xpose.msra.mxu0 0
        %1033 = vmatprep.subr.bf16.mxu0 0
        %1034 = vmatpush1.bf16.xpose.msra.mxu0 0
        %1035 = vmatprep.subr.bf16.mxu0 0
        %1036 = vmatpush1.bf16.xpose.msra.mxu0 0
        %1037 = vmatprep.subr.bf16.mxu0 0
        %1038 = vmatpush1.bf16.xpose.msra.mxu0 0
        %1039 = vmatprep.subr.bf16.mxu0 0
        %1040 = vmatpush1.bf16.xpose.msra.mxu0 0
        %1041 = vmatprep.subr.bf16.mxu0 0
        %1042 = vmatpush1.bf16.xpose.msra.mxu0 0
        %1043 = vmatprep.subr.bf16.mxu0 0
        %1044 = vmatpush1.bf16.xpose.msra.mxu0 0
        %1045 = vmatprep.subr.bf16.mxu0 0
        %1046 = vmatpush1.bf16.xpose.msra.mxu0 0
        %1047 = vmatprep.subr.bf16.mxu0 0
        %1048 = vmatpush1.bf16.xpose.msra.mxu0 0
        %1049 = vmatprep.subr.bf16.mxu0 0
        %1050 = vmatpush1.bf16.xpose.msra.mxu0 0
        %1051 = vmatprep.subr.bf16.mxu0 0
        %1052 = vmatpush1.bf16.xpose.msra.mxu0 0
        %1053 = vmatprep.subr.bf16.mxu0 0
        %1054 = vmatpush1.bf16.xpose.msra.mxu0 0
        %1055 = vmatprep.subr.bf16.mxu0 0
        %1056 = vmatpush1.bf16.xpose.msra.mxu0 0
        %1057 = vmatprep.mubr.bf16.mxu0 0
        %1058 = vmatmul.mubr.bf16.gmra.mrb[0].mxu0 %v1020
        %v1059 = vpop.f32.mrb[0].mxu0
        %v1060 = vadd.f32 0.0, %v1059
        %v1061 = vpop.f32.mrb[0].mxu0
        %v1062 = vpop.f32.mrb[0].mxu0
        %v1063 = vadd.f32 0.0, %v1062
        %v1064 = vpop.f32.mrb[0].mxu0
        %1065 = vdwg.mxu0
        %1067 = vrot.lane.b32.xlu0 %v755, 96
        %v1068 = vpop.permute.xlu0 %1067
        %v1070 = vsel %vm768, %v755, 0
        %v1073 = vsel %vm768, %v1068, 0
        %1075 = vmatprep.subr.bf16.mxu0 0
        %1076 = vmatpush1.bf16.xpose.msra.mxu0 %v1073
        %1077 = vmatprep.subr.bf16.mxu0 0
        %1078 = vmatpush1.bf16.xpose.msra.mxu0 0
        %1079 = vmatprep.subr.bf16.mxu0 0
        %1080 = vmatpush1.bf16.xpose.msra.mxu0 0
        %1081 = vmatprep.subr.bf16.mxu0 0
        %1082 = vmatpush1.bf16.xpose.msra.mxu0 0
        %1083 = vmatprep.subr.bf16.mxu0 0
        %1084 = vmatpush1.bf16.xpose.msra.mxu0 0
        %1085 = vmatprep.subr.bf16.mxu0 0
        %1086 = vmatpush1.bf16.xpose.msra.mxu0 0
        %1087 = vmatprep.subr.bf16.mxu0 0
        %1088 = vmatpush1.bf16.xpose.msra.mxu0 0
        %1089 = vmatprep.subr.bf16.mxu0 0
        %1090 = vmatpush1.bf16.xpose.msra.mxu0 0
        %1091 = vmatprep.subr.bf16.mxu0 0
        %1092 = vmatpush1.bf16.xpose.msra.mxu0 0
        %1093 = vmatprep.subr.bf16.mxu0 0
        %1094 = vmatpush1.bf16.xpose.msra.mxu0 0
        %1095 = vmatprep.subr.bf16.mxu0 0
        %1096 = vmatpush1.bf16.xpose.msra.mxu0 0
        %1097 = vmatprep.subr.bf16.mxu0 0
        %1098 = vmatpush1.bf16.xpose.msra.mxu0 0
        %1099 = vmatprep.subr.bf16.mxu0 0
        %1100 = vmatpush1.bf16.xpose.msra.mxu0 0
        %1101 = vmatprep.subr.bf16.mxu0 0
        %1102 = vmatpush1.bf16.xpose.msra.mxu0 0
        %1103 = vmatprep.subr.bf16.mxu0 0
        %1104 = vmatpush1.bf16.xpose.msra.mxu0 0
        %1105 = vmatprep.subr.bf16.mxu0 0
        %1106 = vmatpush1.bf16.xpose.msra.mxu0 0
        %1107 = vmatprep.mubr.bf16.mxu0 0
        %1108 = vmatmul.mubr.bf16.gmra.mrb[0].mxu0 %v1070
        %v1109 = vpop.f32.mrb[0].mxu0
        %v1110 = vadd.f32 0.0, %v1109
        %v1111 = vpop.f32.mrb[0].mxu0
        %v1112 = vpop.f32.mrb[0].mxu0
        %v1113 = vadd.f32 0.0, %v1112
        %v1114 = vpop.f32.mrb[0].mxu0
        %1115 = vdwg.mxu0
        %1117 = vrot.lane.b32.xlu0 %v756, 96
        %v1118 = vpop.permute.xlu0 %1117
        %v1120 = vsel %vm768, %v756, 0
        %v1123 = vsel %vm768, %v1118, 0
        %1125 = vmatprep.subr.bf16.mxu0 0
        %1126 = vmatpush1.bf16.xpose.msra.mxu0 %v1123
        %1127 = vmatprep.subr.bf16.mxu0 0
        %1128 = vmatpush1.bf16.xpose.msra.mxu0 0
        %1129 = vmatprep.subr.bf16.mxu0 0
        %1130 = vmatpush1.bf16.xpose.msra.mxu0 0
        %1131 = vmatprep.subr.bf16.mxu0 0
        %1132 = vmatpush1.bf16.xpose.msra.mxu0 0
        %1133 = vmatprep.subr.bf16.mxu0 0
        %1134 = vmatpush1.bf16.xpose.msra.mxu0 0
        %1135 = vmatprep.subr.bf16.mxu0 0
        %1136 = vmatpush1.bf16.xpose.msra.mxu0 0
        %1137 = vmatprep.subr.bf16.mxu0 0
        %1138 = vmatpush1.bf16.xpose.msra.mxu0 0
        %1139 = vmatprep.subr.bf16.mxu0 0
        %1140 = vmatpush1.bf16.xpose.msra.mxu0 0
        %1141 = vmatprep.subr.bf16.mxu0 0
        %1142 = vmatpush1.bf16.xpose.msra.mxu0 0
        %1143 = vmatprep.subr.bf16.mxu0 0
        %1144 = vmatpush1.bf16.xpose.msra.mxu0 0
        %1145 = vmatprep.subr.bf16.mxu0 0
        %1146 = vmatpush1.bf16.xpose.msra.mxu0 0
        %1147 = vmatprep.subr.bf16.mxu0 0
        %1148 = vmatpush1.bf16.xpose.msra.mxu0 0
        %1149 = vmatprep.subr.bf16.mxu0 0
        %1150 = vmatpush1.bf16.xpose.msra.mxu0 0
        %1151 = vmatprep.subr.bf16.mxu0 0
        %1152 = vmatpush1.bf16.xpose.msra.mxu0 0
        %1153 = vmatprep.subr.bf16.mxu0 0
        %1154 = vmatpush1.bf16.xpose.msra.mxu0 0
        %1155 = vmatprep.subr.bf16.mxu0 0
        %1156 = vmatpush1.bf16.xpose.msra.mxu0 0
        %1157 = vmatprep.mubr.bf16.mxu0 0
        %1158 = vmatmul.mubr.bf16.gmra.mrb[0].mxu0 %v1120
        %v1159 = vpop.f32.mrb[0].mxu0
        %v1160 = vadd.f32 0.0, %v1159
        %v1161 = vpop.f32.mrb[0].mxu0
        %v1162 = vpop.f32.mrb[0].mxu0
        %v1163 = vadd.f32 0.0, %v1162
        %v1164 = vpop.f32.mrb[0].mxu0
        %1165 = vdwg.mxu0
        %1167 = vrot.lane.b32.xlu0 %v757, 96
        %v1168 = vpop.permute.xlu0 %1167
        %v1170 = vsel %vm768, %v757, 0
        %v1173 = vsel %vm768, %v1168, 0
        %1175 = vmatprep.subr.bf16.mxu0 0
        %1176 = vmatpush1.bf16.xpose.msra.mxu0 %v1173
        %1177 = vmatprep.subr.bf16.mxu0 0
        %1178 = vmatpush1.bf16.xpose.msra.mxu0 0
        %1179 = vmatprep.subr.bf16.mxu0 0
        %1180 = vmatpush1.bf16.xpose.msra.mxu0 0
        %1181 = vmatprep.subr.bf16.mxu0 0
        %1182 = vmatpush1.bf16.xpose.msra.mxu0 0
        %1183 = vmatprep.subr.bf16.mxu0 0
        %1184 = vmatpush1.bf16.xpose.msra.mxu0 0
        %1185 = vmatprep.subr.bf16.mxu0 0
        %1186 = vmatpush1.bf16.xpose.msra.mxu0 0
        %1187 = vmatprep.subr.bf16.mxu0 0
        %1188 = vmatpush1.bf16.xpose.msra.mxu0 0
        %1189 = vmatprep.subr.bf16.mxu0 0
        %1190 = vmatpush1.bf16.xpose.msra.mxu0 0
        %1191 = vmatprep.subr.bf16.mxu0 0
        %1192 = vmatpush1.bf16.xpose.msra.mxu0 0
        %1193 = vmatprep.subr.bf16.mxu0 0
        %1194 = vmatpush1.bf16.xpose.msra.mxu0 0
        %1195 = vmatprep.subr.bf16.mxu0 0
        %1196 = vmatpush1.bf16.xpose.msra.mxu0 0
        %1197 = vmatprep.subr.bf16.mxu0 0
        %1198 = vmatpush1.bf16.xpose.msra.mxu0 0
        %1199 = vmatprep.subr.bf16.mxu0 0
        %1200 = vmatpush1.bf16.xpose.msra.mxu0 0
        %1201 = vmatprep.subr.bf16.mxu0 0
        %1202 = vmatpush1.bf16.xpose.msra.mxu0 0
        %1203 = vmatprep.subr.bf16.mxu0 0
        %1204 = vmatpush1.bf16.xpose.msra.mxu0 0
        %1205 = vmatprep.subr.bf16.mxu0 0
        %1206 = vmatpush1.bf16.xpose.msra.mxu0 0
        %1207 = vmatprep.mubr.bf16.mxu0 0
        %1208 = vmatmul.mubr.bf16.gmra.mrb[0].mxu0 %v1170
        %v1209 = vpop.f32.mrb[0].mxu0
        %v1210 = vadd.f32 0.0, %v1209
        %v1211 = vpop.f32.mrb[0].mxu0
        %v1212 = vpop.f32.mrb[0].mxu0
        %v1213 = vadd.f32 0.0, %v1212
        %v1214 = vpop.f32.mrb[0].mxu0
        %1215 = vdwg.mxu0
        %1217 = vrot.lane.b32.xlu0 %v758, 96
        %v1218 = vpop.permute.xlu0 %1217
        %v1220 = vsel %vm768, %v758, 0
        %v1223 = vsel %vm768, %v1218, 0
        %1225 = vmatprep.subr.bf16.mxu0 0
        %1226 = vmatpush1.bf16.xpose.msra.mxu0 %v1223
        %1227 = vmatprep.subr.bf16.mxu0 0
        %1228 = vmatpush1.bf16.xpose.msra.mxu0 0
        %1229 = vmatprep.subr.bf16.mxu0 0
        %1230 = vmatpush1.bf16.xpose.msra.mxu0 0
        %1231 = vmatprep.subr.bf16.mxu0 0
        %1232 = vmatpush1.bf16.xpose.msra.mxu0 0
        %1233 = vmatprep.subr.bf16.mxu0 0
        %1234 = vmatpush1.bf16.xpose.msra.mxu0 0
        %1235 = vmatprep.subr.bf16.mxu0 0
        %1236 = vmatpush1.bf16.xpose.msra.mxu0 0
        %1237 = vmatprep.subr.bf16.mxu0 0
        %1238 = vmatpush1.bf16.xpose.msra.mxu0 0
        %1239 = vmatprep.subr.bf16.mxu0 0
        %1240 = vmatpush1.bf16.xpose.msra.mxu0 0
        %1241 = vmatprep.subr.bf16.mxu0 0
        %1242 = vmatpush1.bf16.xpose.msra.mxu0 0
        %1243 = vmatprep.subr.bf16.mxu0 0
        %1244 = vmatpush1.bf16.xpose.msra.mxu0 0
        %1245 = vmatprep.subr.bf16.mxu0 0
        %1246 = vmatpush1.bf16.xpose.msra.mxu0 0
        %1247 = vmatprep.subr.bf16.mxu0 0
        %1248 = vmatpush1.bf16.xpose.msra.mxu0 0
        %1249 = vmatprep.subr.bf16.mxu0 0
        %1250 = vmatpush1.bf16.xpose.msra.mxu0 0
        %1251 = vmatprep.subr.bf16.mxu0 0
        %1252 = vmatpush1.bf16.xpose.msra.mxu0 0
        %1253 = vmatprep.subr.bf16.mxu0 0
        %1254 = vmatpush1.bf16.xpose.msra.mxu0 0
        %1255 = vmatprep.subr.bf16.mxu0 0
        %1256 = vmatpush1.bf16.xpose.msra.mxu0 0
        %1257 = vmatprep.mubr.bf16.mxu0 0
        %1258 = vmatmul.mubr.bf16.gmra.mrb[0].mxu0 %v1220
        %v1259 = vpop.f32.mrb[0].mxu0
        %v1260 = vadd.f32 0.0, %v1259
        %v1261 = vpop.f32.mrb[0].mxu0
        %v1262 = vpop.f32.mrb[0].mxu0
        %v1263 = vadd.f32 0.0, %v1262
        %v1264 = vpop.f32.mrb[0].mxu0
        %1265 = vdwg.mxu0
        %1267 = vrot.lane.b32.xlu0 %v759, 96
        %v1268 = vpop.permute.xlu0 %1267
        %v1270 = vsel %vm768, %v759, 0
        %v1273 = vsel %vm768, %v1268, 0
        %1275 = vmatprep.subr.bf16.mxu0 0
        %1276 = vmatpush1.bf16.xpose.msra.mxu0 %v1273
        %1277 = vmatprep.subr.bf16.mxu0 0
        %1278 = vmatpush1.bf16.xpose.msra.mxu0 0
        %1279 = vmatprep.subr.bf16.mxu0 0
        %1280 = vmatpush1.bf16.xpose.msra.mxu0 0
        %1281 = vmatprep.subr.bf16.mxu0 0
        %1282 = vmatpush1.bf16.xpose.msra.mxu0 0
        %1283 = vmatprep.subr.bf16.mxu0 0
        %1284 = vmatpush1.bf16.xpose.msra.mxu0 0
        %1285 = vmatprep.subr.bf16.mxu0 0
        %1286 = vmatpush1.bf16.xpose.msra.mxu0 0
        %1287 = vmatprep.subr.bf16.mxu0 0
        %1288 = vmatpush1.bf16.xpose.msra.mxu0 0
        %1289 = vmatprep.subr.bf16.mxu0 0
        %1290 = vmatpush1.bf16.xpose.msra.mxu0 0
        %1291 = vmatprep.subr.bf16.mxu0 0
        %1292 = vmatpush1.bf16.xpose.msra.mxu0 0
        %1293 = vmatprep.subr.bf16.mxu0 0
        %1294 = vmatpush1.bf16.xpose.msra.mxu0 0
        %1295 = vmatprep.subr.bf16.mxu0 0
        %1296 = vmatpush1.bf16.xpose.msra.mxu0 0
        %1297 = vmatprep.subr.bf16.mxu0 0
        %1298 = vmatpush1.bf16.xpose.msra.mxu0 0
        %1299 = vmatprep.subr.bf16.mxu0 0
        %1300 = vmatpush1.bf16.xpose.msra.mxu0 0
        %1301 = vmatprep.subr.bf16.mxu0 0
        %1302 = vmatpush1.bf16.xpose.msra.mxu0 0
        %1303 = vmatprep.subr.bf16.mxu0 0
        %1304 = vmatpush1.bf16.xpose.msra.mxu0 0
        %1305 = vmatprep.subr.bf16.mxu0 0
        %1306 = vmatpush1.bf16.xpose.msra.mxu0 0
        %1307 = vmatprep.mubr.bf16.mxu0 0
        %1308 = vmatmul.mubr.bf16.gmra.mrb[0].mxu0 %v1270
        %v1309 = vpop.f32.mrb[0].mxu0
        %v1310 = vadd.f32 0.0, %v1309
        %v1311 = vpop.f32.mrb[0].mxu0
        %v1312 = vpop.f32.mrb[0].mxu0
        %v1313 = vadd.f32 0.0, %v1312
        %v1314 = vpop.f32.mrb[0].mxu0
        %1315 = vdwg.mxu0
        %1317 = vrot.lane.b32.xlu0 %v760, 96
        %v1318 = vpop.permute.xlu0 %1317
        %v1320 = vsel %vm768, %v760, 0
        %v1323 = vsel %vm768, %v1318, 0
        %1325 = vmatprep.subr.bf16.mxu0 0
        %1326 = vmatpush1.bf16.xpose.msra.mxu0 %v1323
        %1327 = vmatprep.subr.bf16.mxu0 0
        %1328 = vmatpush1.bf16.xpose.msra.mxu0 0
        %1329 = vmatprep.subr.bf16.mxu0 0
        %1330 = vmatpush1.bf16.xpose.msra.mxu0 0
        %1331 = vmatprep.subr.bf16.mxu0 0
        %1332 = vmatpush1.bf16.xpose.msra.mxu0 0
        %1333 = vmatprep.subr.bf16.mxu0 0
        %1334 = vmatpush1.bf16.xpose.msra.mxu0 0
        %1335 = vmatprep.subr.bf16.mxu0 0
        %1336 = vmatpush1.bf16.xpose.msra.mxu0 0
        %1337 = vmatprep.subr.bf16.mxu0 0
        %1338 = vmatpush1.bf16.xpose.msra.mxu0 0
        %1339 = vmatprep.subr.bf16.mxu0 0
        %1340 = vmatpush1.bf16.xpose.msra.mxu0 0
        %1341 = vmatprep.subr.bf16.mxu0 0
        %1342 = vmatpush1.bf16.xpose.msra.mxu0 0
        %1343 = vmatprep.subr.bf16.mxu0 0
        %1344 = vmatpush1.bf16.xpose.msra.mxu0 0
        %1345 = vmatprep.subr.bf16.mxu0 0
        %1346 = vmatpush1.bf16.xpose.msra.mxu0 0
        %1347 = vmatprep.subr.bf16.mxu0 0
        %1348 = vmatpush1.bf16.xpose.msra.mxu0 0
        %1349 = vmatprep.subr.bf16.mxu0 0
        %1350 = vmatpush1.bf16.xpose.msra.mxu0 0
        %1351 = vmatprep.subr.bf16.mxu0 0
        %1352 = vmatpush1.bf16.xpose.msra.mxu0 0
        %1353 = vmatprep.subr.bf16.mxu0 0
        %1354 = vmatpush1.bf16.xpose.msra.mxu0 0
        %1355 = vmatprep.subr.bf16.mxu0 0
        %1356 = vmatpush1.bf16.xpose.msra.mxu0 0
        %1357 = vmatprep.mubr.bf16.mxu0 0
        %1358 = vmatmul.mubr.bf16.gmra.mrb[0].mxu0 %v1320
        %v1359 = vpop.f32.mrb[0].mxu0
        %v1360 = vadd.f32 0.0, %v1359
        %v1361 = vpop.f32.mrb[0].mxu0
        %v1362 = vpop.f32.mrb[0].mxu0
        %v1363 = vadd.f32 0.0, %v1362
        %v1364 = vpop.f32.mrb[0].mxu0
        %1365 = vdwg.mxu0
        %1367 = vrot.lane.b32.xlu0 %v761, 96
        %v1368 = vpop.permute.xlu0 %1367
        %v1370 = vsel %vm768, %v761, 0
        %v1373 = vsel %vm768, %v1368, 0
        %1375 = vmatprep.subr.bf16.mxu0 0
        %1376 = vmatpush1.bf16.xpose.msra.mxu0 %v1373
        %1377 = vmatprep.subr.bf16.mxu0 0
        %1378 = vmatpush1.bf16.xpose.msra.mxu0 0
        %1379 = vmatprep.subr.bf16.mxu0 0
        %1380 = vmatpush1.bf16.xpose.msra.mxu0 0
        %1381 = vmatprep.subr.bf16.mxu0 0
        %1382 = vmatpush1.bf16.xpose.msra.mxu0 0
        %1383 = vmatprep.subr.bf16.mxu0 0
        %1384 = vmatpush1.bf16.xpose.msra.mxu0 0
        %1385 = vmatprep.subr.bf16.mxu0 0
        %1386 = vmatpush1.bf16.xpose.msra.mxu0 0
        %1387 = vmatprep.subr.bf16.mxu0 0
        %1388 = vmatpush1.bf16.xpose.msra.mxu0 0
        %1389 = vmatprep.subr.bf16.mxu0 0
        %1390 = vmatpush1.bf16.xpose.msra.mxu0 0
        %1391 = vmatprep.subr.bf16.mxu0 0
        %1392 = vmatpush1.bf16.xpose.msra.mxu0 0
        %1393 = vmatprep.subr.bf16.mxu0 0
        %1394 = vmatpush1.bf16.xpose.msra.mxu0 0
        %1395 = vmatprep.subr.bf16.mxu0 0
        %1396 = vmatpush1.bf16.xpose.msra.mxu0 0
        %1397 = vmatprep.subr.bf16.mxu0 0
        %1398 = vmatpush1.bf16.xpose.msra.mxu0 0
        %1399 = vmatprep.subr.bf16.mxu0 0
        %1400 = vmatpush1.bf16.xpose.msra.mxu0 0
        %1401 = vmatprep.subr.bf16.mxu0 0
        %1402 = vmatpush1.bf16.xpose.msra.mxu0 0
        %1403 = vmatprep.subr.bf16.mxu0 0
        %1404 = vmatpush1.bf16.xpose.msra.mxu0 0
        %1405 = vmatprep.subr.bf16.mxu0 0
        %1406 = vmatpush1.bf16.xpose.msra.mxu0 0
        %1407 = vmatprep.mubr.bf16.mxu0 0
        %1408 = vmatmul.mubr.bf16.gmra.mrb[0].mxu0 %v1370
        %v1409 = vpop.f32.mrb[0].mxu0
        %v1410 = vadd.f32 0.0, %v1409
        %v1411 = vpop.f32.mrb[0].mxu0
        %v1412 = vpop.f32.mrb[0].mxu0
        %v1413 = vadd.f32 0.0, %v1412
        %v1414 = vpop.f32.mrb[0].mxu0
        %1415 = vdwg.mxu0
        %1417 = vrot.lane.b32.xlu0 %v762, 96
        %v1418 = vpop.permute.xlu0 %1417
        %v1420 = vsel %vm768, %v762, 0
        %v1423 = vsel %vm768, %v1418, 0
        %1425 = vmatprep.subr.bf16.mxu0 0
        %1426 = vmatpush1.bf16.xpose.msra.mxu0 %v1423
        %1427 = vmatprep.subr.bf16.mxu0 0
        %1428 = vmatpush1.bf16.xpose.msra.mxu0 0
        %1429 = vmatprep.subr.bf16.mxu0 0
        %1430 = vmatpush1.bf16.xpose.msra.mxu0 0
        %1431 = vmatprep.subr.bf16.mxu0 0
        %1432 = vmatpush1.bf16.xpose.msra.mxu0 0
        %1433 = vmatprep.subr.bf16.mxu0 0
        %1434 = vmatpush1.bf16.xpose.msra.mxu0 0
        %1435 = vmatprep.subr.bf16.mxu0 0
        %1436 = vmatpush1.bf16.xpose.msra.mxu0 0
        %1437 = vmatprep.subr.bf16.mxu0 0
        %1438 = vmatpush1.bf16.xpose.msra.mxu0 0
        %1439 = vmatprep.subr.bf16.mxu0 0
        %1440 = vmatpush1.bf16.xpose.msra.mxu0 0
        %1441 = vmatprep.subr.bf16.mxu0 0
        %1442 = vmatpush1.bf16.xpose.msra.mxu0 0
        %1443 = vmatprep.subr.bf16.mxu0 0
        %1444 = vmatpush1.bf16.xpose.msra.mxu0 0
        %1445 = vmatprep.subr.bf16.mxu0 0
        %1446 = vmatpush1.bf16.xpose.msra.mxu0 0
        %1447 = vmatprep.subr.bf16.mxu0 0
        %1448 = vmatpush1.bf16.xpose.msra.mxu0 0
        %1449 = vmatprep.subr.bf16.mxu0 0
        %1450 = vmatpush1.bf16.xpose.msra.mxu0 0
        %1451 = vmatprep.subr.bf16.mxu0 0
        %1452 = vmatpush1.bf16.xpose.msra.mxu0 0
        %1453 = vmatprep.subr.bf16.mxu0 0
        %1454 = vmatpush1.bf16.xpose.msra.mxu0 0
        %1455 = vmatprep.subr.bf16.mxu0 0
        %1456 = vmatpush1.bf16.xpose.msra.mxu0 0
        %1457 = vmatprep.mubr.bf16.mxu0 0
        %1458 = vmatmul.mubr.bf16.gmra.mrb[0].mxu0 %v1420
        %v1459 = vpop.f32.mrb[0].mxu0
        %v1460 = vadd.f32 0.0, %v1459
        %v1461 = vpop.f32.mrb[0].mxu0
        %v1462 = vpop.f32.mrb[0].mxu0
        %v1463 = vadd.f32 0.0, %v1462
        %v1464 = vpop.f32.mrb[0].mxu0
        %1465 = vdwg.mxu0
        %1467 = vrot.lane.b32.xlu0 %v763, 96
        %v1468 = vpop.permute.xlu0 %1467
        %v1470 = vsel %vm768, %v763, 0
        %v1473 = vsel %vm768, %v1468, 0
        %1475 = vmatprep.subr.bf16.mxu0 0
        %1476 = vmatpush1.bf16.xpose.msra.mxu0 %v1473
        %1477 = vmatprep.subr.bf16.mxu0 0
        %1478 = vmatpush1.bf16.xpose.msra.mxu0 0
        %1479 = vmatprep.subr.bf16.mxu0 0
        %1480 = vmatpush1.bf16.xpose.msra.mxu0 0
        %1481 = vmatprep.subr.bf16.mxu0 0
        %1482 = vmatpush1.bf16.xpose.msra.mxu0 0
        %1483 = vmatprep.subr.bf16.mxu0 0
        %1484 = vmatpush1.bf16.xpose.msra.mxu0 0
        %1485 = vmatprep.subr.bf16.mxu0 0
        %1486 = vmatpush1.bf16.xpose.msra.mxu0 0
        %1487 = vmatprep.subr.bf16.mxu0 0
        %1488 = vmatpush1.bf16.xpose.msra.mxu0 0
        %1489 = vmatprep.subr.bf16.mxu0 0
        %1490 = vmatpush1.bf16.xpose.msra.mxu0 0
        %1491 = vmatprep.subr.bf16.mxu0 0
        %1492 = vmatpush1.bf16.xpose.msra.mxu0 0
        %1493 = vmatprep.subr.bf16.mxu0 0
        %1494 = vmatpush1.bf16.xpose.msra.mxu0 0
        %1495 = vmatprep.subr.bf16.mxu0 0
        %1496 = vmatpush1.bf16.xpose.msra.mxu0 0
        %1497 = vmatprep.subr.bf16.mxu0 0
        %1498 = vmatpush1.bf16.xpose.msra.mxu0 0
        %1499 = vmatprep.subr.bf16.mxu0 0
        %1500 = vmatpush1.bf16.xpose.msra.mxu0 0
        %1501 = vmatprep.subr.bf16.mxu0 0
        %1502 = vmatpush1.bf16.xpose.msra.mxu0 0
        %1503 = vmatprep.subr.bf16.mxu0 0
        %1504 = vmatpush1.bf16.xpose.msra.mxu0 0
        %1505 = vmatprep.subr.bf16.mxu0 0
        %1506 = vmatpush1.bf16.xpose.msra.mxu0 0
        %1507 = vmatprep.mubr.bf16.mxu0 0
        %1508 = vmatmul.mubr.bf16.gmra.mrb[0].mxu0 %v1470
        %v1509 = vpop.f32.mrb[0].mxu0
        %v1510 = vadd.f32 0.0, %v1509
        %v1511 = vpop.f32.mrb[0].mxu0
        %v1512 = vpop.f32.mrb[0].mxu0
        %v1513 = vadd.f32 0.0, %v1512
        %v1514 = vpop.f32.mrb[0].mxu0
        %1515 = vdwg.mxu0
        %1517 = vrot.lane.b32.xlu0 %v764, 96
        %v1518 = vpop.permute.xlu0 %1517
        %v1520 = vsel %vm768, %v764, 0
        %v1523 = vsel %vm768, %v1518, 0
        %1525 = vmatprep.subr.bf16.mxu0 0
        %1526 = vmatpush1.bf16.xpose.msra.mxu0 %v1523
        %1527 = vmatprep.subr.bf16.mxu0 0
        %1528 = vmatpush1.bf16.xpose.msra.mxu0 0
        %1529 = vmatprep.subr.bf16.mxu0 0
        %1530 = vmatpush1.bf16.xpose.msra.mxu0 0
        %1531 = vmatprep.subr.bf16.mxu0 0
        %1532 = vmatpush1.bf16.xpose.msra.mxu0 0
        %1533 = vmatprep.subr.bf16.mxu0 0
        %1534 = vmatpush1.bf16.xpose.msra.mxu0 0
        %1535 = vmatprep.subr.bf16.mxu0 0
        %1536 = vmatpush1.bf16.xpose.msra.mxu0 0
        %1537 = vmatprep.subr.bf16.mxu0 0
        %1538 = vmatpush1.bf16.xpose.msra.mxu0 0
        %1539 = vmatprep.subr.bf16.mxu0 0
        %1540 = vmatpush1.bf16.xpose.msra.mxu0 0
        %1541 = vmatprep.subr.bf16.mxu0 0
        %1542 = vmatpush1.bf16.xpose.msra.mxu0 0
        %1543 = vmatprep.subr.bf16.mxu0 0
        %1544 = vmatpush1.bf16.xpose.msra.mxu0 0
        %1545 = vmatprep.subr.bf16.mxu0 0
        %1546 = vmatpush1.bf16.xpose.msra.mxu0 0
        %1547 = vmatprep.subr.bf16.mxu0 0
        %1548 = vmatpush1.bf16.xpose.msra.mxu0 0
        %1549 = vmatprep.subr.bf16.mxu0 0
        %1550 = vmatpush1.bf16.xpose.msra.mxu0 0
        %1551 = vmatprep.subr.bf16.mxu0 0
        %1552 = vmatpush1.bf16.xpose.msra.mxu0 0
        %1553 = vmatprep.subr.bf16.mxu0 0
        %1554 = vmatpush1.bf16.xpose.msra.mxu0 0
        %1555 = vmatprep.subr.bf16.mxu0 0
        %1556 = vmatpush1.bf16.xpose.msra.mxu0 0
        %1557 = vmatprep.mubr.bf16.mxu0 0
        %1558 = vmatmul.mubr.bf16.gmra.mrb[0].mxu0 %v1520
        %v1559 = vpop.f32.mrb[0].mxu0
        %v1560 = vadd.f32 0.0, %v1559
        %v1561 = vpop.f32.mrb[0].mxu0
        %v1562 = vpop.f32.mrb[0].mxu0
        %v1563 = vadd.f32 0.0, %v1562
        %v1564 = vpop.f32.mrb[0].mxu0
        %1565 = vdwg.mxu0
        %v1566 = vmul.f32 %v810, 0.35355338
        %v1567 = vmul.f32 %v813, 0.35355338
        %v1568 = vmul.f32 %v860, 0.35355338
        %v1569 = vmul.f32 %v863, 0.35355338
        %v1570 = vmul.f32 %v910, 0.35355338
        %v1571 = vmul.f32 %v913, 0.35355338
        %v1572 = vmul.f32 %v960, 0.35355338
        %v1573 = vmul.f32 %v963, 0.35355338
        %v1574 = vmul.f32 %v1010, 0.35355338
        %v1575 = vmul.f32 %v1013, 0.35355338
        %v1576 = vmul.f32 %v1060, 0.35355338
        %v1577 = vmul.f32 %v1063, 0.35355338
        %v1578 = vmul.f32 %v1110, 0.35355338
        %v1579 = vmul.f32 %v1113, 0.35355338
        %v1580 = vmul.f32 %v1160, 0.35355338
        %v1581 = vmul.f32 %v1163, 0.35355338
        %v1582 = vmul.f32 %v1210, 0.35355338
        %v1583 = vmul.f32 %v1213, 0.35355338
        %v1584 = vmul.f32 %v1260, 0.35355338
        %v1585 = vmul.f32 %v1263, 0.35355338
        %v1586 = vmul.f32 %v1310, 0.35355338
        %v1587 = vmul.f32 %v1313, 0.35355338
        %v1588 = vmul.f32 %v1360, 0.35355338
        %v1589 = vmul.f32 %v1363, 0.35355338
        %v1590 = vmul.f32 %v1410, 0.35355338
        %v1591 = vmul.f32 %v1413, 0.35355338
        %v1592 = vmul.f32 %v1460, 0.35355338
        %v1593 = vmul.f32 %v1463, 0.35355338
        %v1594 = vmul.f32 %v1510, 0.35355338
        %v1595 = vmul.f32 %v1513, 0.35355338
        %v1596 = vmul.f32 %v1560, 0.35355338
        %v1597 = vmul.f32 %v1563, 0.35355338
        %v1598 = vld [vmem:[#allocation11] sm:$0xff]
        %v1599 = vld [vmem:[#allocation11 + $0x8] sm:$0xff]
        %v1600 = vld [vmem:[#allocation11 + $0x10] sm:$0xff]
        %v1601 = vld [vmem:[#allocation11 + $0x18] sm:$0xff]
        %v1602 = vld [vmem:[#allocation11 + $0x20] sm:$0xff]
        %v1603 = vld [vmem:[#allocation11 + $0x28] sm:$0xff]
        %v1604 = vld [vmem:[#allocation11 + $0x30] sm:$0xff]
        %v1605 = vld [vmem:[#allocation11 + $0x38] sm:$0xff]
        %v1606 = vadd.f32 %v1566, %v1598
        %v1607 = vadd.f32 %v1567, %v1599
        %v1608 = vadd.f32 %v1568, %v1598
        %v1609 = vadd.f32 %v1569, %v1599
        %v1610 = vadd.f32 %v1570, %v1598
        %v1611 = vadd.f32 %v1571, %v1599
        %v1612 = vadd.f32 %v1572, %v1598
        %v1613 = vadd.f32 %v1573, %v1599
        %v1614 = vadd.f32 %v1574, %v1600
        %v1615 = vadd.f32 %v1575, %v1601
        %v1616 = vadd.f32 %v1576, %v1600
        %v1617 = vadd.f32 %v1577, %v1601
        %v1618 = vadd.f32 %v1578, %v1600
        %v1619 = vadd.f32 %v1579, %v1601
        %v1620 = vadd.f32 %v1580, %v1600
        %v1621 = vadd.f32 %v1581, %v1601
        %v1622 = vadd.f32 %v1582, %v1602
        %v1623 = vadd.f32 %v1583, %v1603
        %v1624 = vadd.f32 %v1584, %v1602
        %v1625 = vadd.f32 %v1585, %v1603
        %v1626 = vadd.f32 %v1586, %v1602
        %v1627 = vadd.f32 %v1587, %v1603
        %v1628 = vadd.f32 %v1588, %v1602
        %v1629 = vadd.f32 %v1589, %v1603
        %v1630 = vadd.f32 %v1590, %v1604
        %v1631 = vadd.f32 %v1591, %v1605
        %v1632 = vadd.f32 %v1592, %v1604
        %v1633 = vadd.f32 %v1593, %v1605
        %v1634 = vadd.f32 %v1594, %v1604
        %v1635 = vadd.f32 %v1595, %v1605
        %v1636 = vadd.f32 %v1596, %v1604
        %v1637 = vadd.f32 %v1597, %v1605
        %vm1638 = vcmask 130048
        %v1639 = vsel %vm1638, %v1606, -inf
        %1640 = vmax.xlane.f32.xlu0 %v1639
        %v1641 = vpop.xlane.xlu0 %1640
        %v1642 = vsel %vm1638, %v1607, -inf
        %1643 = vmax.xlane.f32.xlu0 %v1642
        %v1644 = vpop.xlane.xlu0 %1643
        %v1645 = vsel %vm1638, %v1608, -inf
        %1646 = vmax.xlane.f32.xlu0 %v1645
        %v1647 = vpop.xlane.xlu0 %1646
        %v1648 = vsel %vm1638, %v1609, -inf
        %1649 = vmax.xlane.f32.xlu0 %v1648
        %v1650 = vpop.xlane.xlu0 %1649
        %v1651 = vsel %vm1638, %v1610, -inf
        %1652 = vmax.xlane.f32.xlu0 %v1651
        %v1653 = vpop.xlane.xlu0 %1652
        %v1654 = vsel %vm1638, %v1611, -inf
        %1655 = vmax.xlane.f32.xlu0 %v1654
        %v1656 = vpop.xlane.xlu0 %1655
        %v1657 = vsel %vm1638, %v1612, -inf
        %1658 = vmax.xlane.f32.xlu0 %v1657
        %v1659 = vpop.xlane.xlu0 %1658
        %v1660 = vsel %vm1638, %v1613, -inf
        %1661 = vmax.xlane.f32.xlu0 %v1660
        %v1662 = vpop.xlane.xlu0 %1661
        %v1663 = vsel %vm1638, %v1614, -inf
        %1664 = vmax.xlane.f32.xlu0 %v1663
        %v1665 = vpop.xlane.xlu0 %1664
        %v1666 = vsel %vm1638, %v1615, -inf
        %1667 = vmax.xlane.f32.xlu0 %v1666
        %v1668 = vpop.xlane.xlu0 %1667
        %v1669 = vsel %vm1638, %v1616, -inf
        %1670 = vmax.xlane.f32.xlu0 %v1669
        %v1671 = vpop.xlane.xlu0 %1670
        %v1672 = vsel %vm1638, %v1617, -inf
        %1673 = vmax.xlane.f32.xlu0 %v1672
        %v1674 = vpop.xlane.xlu0 %1673
        %v1675 = vsel %vm1638, %v1618, -inf
        %1676 = vmax.xlane.f32.xlu0 %v1675
        %v1677 = vpop.xlane.xlu0 %1676
        %v1678 = vsel %vm1638, %v1619, -inf
        %1679 = vmax.xlane.f32.xlu0 %v1678
        %v1680 = vpop.xlane.xlu0 %1679
        %v1681 = vsel %vm1638, %v1620, -inf
        %1682 = vmax.xlane.f32.xlu0 %v1681
        %v1683 = vpop.xlane.xlu0 %1682
        %v1684 = vsel %vm1638, %v1621, -inf
        %1685 = vmax.xlane.f32.xlu0 %v1684
        %v1686 = vpop.xlane.xlu0 %1685
        %v1687 = vsel %vm1638, %v1622, -inf
        %1688 = vmax.xlane.f32.xlu0 %v1687
        %v1689 = vpop.xlane.xlu0 %1688
        %v1690 = vsel %vm1638, %v1623, -inf
        %1691 = vmax.xlane.f32.xlu0 %v1690
        %v1692 = vpop.xlane.xlu0 %1691
        %v1693 = vsel %vm1638, %v1624, -inf
        %1694 = vmax.xlane.f32.xlu0 %v1693
        %v1695 = vpop.xlane.xlu0 %1694
        %v1696 = vsel %vm1638, %v1625, -inf
        %1697 = vmax.xlane.f32.xlu0 %v1696
        %v1698 = vpop.xlane.xlu0 %1697
        %v1699 = vsel %vm1638, %v1626, -inf
        %1700 = vmax.xlane.f32.xlu0 %v1699
        %v1701 = vpop.xlane.xlu0 %1700
        %v1702 = vsel %vm1638, %v1627, -inf
        %1703 = vmax.xlane.f32.xlu0 %v1702
        %v1704 = vpop.xlane.xlu0 %1703
        %v1705 = vsel %vm1638, %v1628, -inf
        %1706 = vmax.xlane.f32.xlu0 %v1705
        %v1707 = vpop.xlane.xlu0 %1706
        %v1708 = vsel %vm1638, %v1629, -inf
        %1709 = vmax.xlane.f32.xlu0 %v1708
        %v1710 = vpop.xlane.xlu0 %1709
        %v1711 = vsel %vm1638, %v1630, -inf
        %1712 = vmax.xlane.f32.xlu0 %v1711
        %v1713 = vpop.xlane.xlu0 %1712
        %v1714 = vsel %vm1638, %v1631, -inf
        %1715 = vmax.xlane.f32.xlu0 %v1714
        %v1716 = vpop.xlane.xlu0 %1715
        %v1717 = vsel %vm1638, %v1632, -inf
        %1718 = vmax.xlane.f32.xlu0 %v1717
        %v1719 = vpop.xlane.xlu0 %1718
        %v1720 = vsel %vm1638, %v1633, -inf
        %1721 = vmax.xlane.f32.xlu0 %v1720
        %v1722 = vpop.xlane.xlu0 %1721
        %v1723 = vsel %vm1638, %v1634, -inf
        %1724 = vmax.xlane.f32.xlu0 %v1723
        %v1725 = vpop.xlane.xlu0 %1724
        %v1726 = vsel %vm1638, %v1635, -inf
        %1727 = vmax.xlane.f32.xlu0 %v1726
        %v1728 = vpop.xlane.xlu0 %1727
        %v1729 = vsel %vm1638, %v1636, -inf
        %1730 = vmax.xlane.f32.xlu0 %v1729
        %v1731 = vpop.xlane.xlu0 %1730
        %v1732 = vsel %vm1638, %v1637, -inf
        %1733 = vmax.xlane.f32.xlu0 %v1732
        %v1734 = vpop.xlane.xlu0 %1733
        %v1735 = vsub.f32 %v1606, %v1641
        %v1736 = vsub.f32 %v1607, %v1644
        %v1737 = vsub.f32 %v1608, %v1647
        %v1738 = vsub.f32 %v1609, %v1650
        %v1739 = vsub.f32 %v1610, %v1653
        %v1740 = vsub.f32 %v1611, %v1656
        %v1741 = vsub.f32 %v1612, %v1659
        %v1742 = vsub.f32 %v1613, %v1662
        %v1743 = vsub.f32 %v1614, %v1665
        %v1744 = vsub.f32 %v1615, %v1668
        %v1745 = vsub.f32 %v1616, %v1671
        %v1746 = vsub.f32 %v1617, %v1674
        %v1747 = vsub.f32 %v1618, %v1677
        %v1748 = vsub.f32 %v1619, %v1680
        %v1749 = vsub.f32 %v1620, %v1683
        %v1750 = vsub.f32 %v1621, %v1686
        %v1751 = vsub.f32 %v1622, %v1689
        %v1752 = vsub.f32 %v1623, %v1692
        %v1753 = vsub.f32 %v1624, %v1695
        %v1754 = vsub.f32 %v1625, %v1698
        %v1755 = vsub.f32 %v1626, %v1701
        %v1756 = vsub.f32 %v1627, %v1704
        %v1757 = vsub.f32 %v1628, %v1707
        %v1758 = vsub.f32 %v1629, %v1710
        %v1759 = vsub.f32 %v1630, %v1713
        %v1760 = vsub.f32 %v1631, %v1716
        %v1761 = vsub.f32 %v1632, %v1719
        %v1762 = vsub.f32 %v1633, %v1722
        %v1763 = vsub.f32 %v1634, %v1725
        %v1764 = vsub.f32 %v1635, %v1728
        %v1765 = vsub.f32 %v1636, %v1731
        %v1766 = vsub.f32 %v1637, %v1734
        %v1767 = vmul.f32 %v1735, 1.442695
        %v1768 = vpow.pop %v1767
        %v1769 = vmul.f32 %v1736, 1.442695
        %v1770 = vpow.pop %v1769
        %v1771 = vmul.f32 %v1737, 1.442695
        %v1772 = vpow.pop %v1771
        %v1773 = vmul.f32 %v1738, 1.442695
        %v1774 = vpow.pop %v1773
        %v1775 = vmul.f32 %v1739, 1.442695
        %v1776 = vpow.pop %v1775
        %v1777 = vmul.f32 %v1740, 1.442695
        %v1778 = vpow.pop %v1777
        %v1779 = vmul.f32 %v1741, 1.442695
        %v1780 = vpow.pop %v1779
        %v1781 = vmul.f32 %v1742, 1.442695
        %v1782 = vpow.pop %v1781
        %v1783 = vmul.f32 %v1743, 1.442695
        %v1784 = vpow.pop %v1783
        %v1785 = vmul.f32 %v1744, 1.442695
        %v1786 = vpow.pop %v1785
        %v1787 = vmul.f32 %v1745, 1.442695
        %v1788 = vpow.pop %v1787
        %v1789 = vmul.f32 %v1746, 1.442695
        %v1790 = vpow.pop %v1789
        %v1791 = vmul.f32 %v1747, 1.442695
        %v1792 = vpow.pop %v1791
        %v1793 = vmul.f32 %v1748, 1.442695
        %v1794 = vpow.pop %v1793
        %v1795 = vmul.f32 %v1749, 1.442695
        %v1796 = vpow.pop %v1795
        %v1797 = vmul.f32 %v1750, 1.442695
        %v1798 = vpow.pop %v1797
        %v1799 = vmul.f32 %v1751, 1.442695
        %v1800 = vpow.pop %v1799
        %v1801 = vmul.f32 %v1752, 1.442695
        %v1802 = vpow.pop %v1801
        %v1803 = vmul.f32 %v1753, 1.442695
        %v1804 = vpow.pop %v1803
        %v1805 = vmul.f32 %v1754, 1.442695
        %v1806 = vpow.pop %v1805
        %v1807 = vmul.f32 %v1755, 1.442695
        %v1808 = vpow.pop %v1807
        %v1809 = vmul.f32 %v1756, 1.442695
        %v1810 = vpow.pop %v1809
        %v1811 = vmul.f32 %v1757, 1.442695
        %v1812 = vpow.pop %v1811
        %v1813 = vmul.f32 %v1758, 1.442695
        %v1814 = vpow.pop %v1813
        %v1815 = vmul.f32 %v1759, 1.442695
        %v1816 = vpow.pop %v1815
        %v1817 = vmul.f32 %v1760, 1.442695
        %v1818 = vpow.pop %v1817
        %v1819 = vmul.f32 %v1761, 1.442695
        %v1820 = vpow.pop %v1819
        %v1821 = vmul.f32 %v1762, 1.442695
        %v1822 = vpow.pop %v1821
        %v1823 = vmul.f32 %v1763, 1.442695
        %v1824 = vpow.pop %v1823
        %v1825 = vmul.f32 %v1764, 1.442695
        %v1826 = vpow.pop %v1825
        %v1827 = vmul.f32 %v1765, 1.442695
        %v1828 = vpow.pop %v1827
        %v1829 = vmul.f32 %v1766, 1.442695
        %v1830 = vpow.pop %v1829
        %v1831 = vsel %vm1638, %v1768, 0.0
        %1832 = vadd.xlane.f32.xlu0 %v1831
        %v1833 = vpop.xlane.xlu0 %1832
        %v1834 = vsel %vm1638, %v1770, 0.0
        %1835 = vadd.xlane.f32.xlu0 %v1834
        %v1836 = vpop.xlane.xlu0 %1835
        %v1837 = vsel %vm1638, %v1772, 0.0
        %1838 = vadd.xlane.f32.xlu0 %v1837
        %v1839 = vpop.xlane.xlu0 %1838
        %v1840 = vsel %vm1638, %v1774, 0.0
        %1841 = vadd.xlane.f32.xlu0 %v1840
        %v1842 = vpop.xlane.xlu0 %1841
        %v1843 = vsel %vm1638, %v1776, 0.0
        %1844 = vadd.xlane.f32.xlu0 %v1843
        %v1845 = vpop.xlane.xlu0 %1844
        %v1846 = vsel %vm1638, %v1778, 0.0
        %1847 = vadd.xlane.f32.xlu0 %v1846
        %v1848 = vpop.xlane.xlu0 %1847
        %v1849 = vsel %vm1638, %v1780, 0.0
        %1850 = vadd.xlane.f32.xlu0 %v1849
        %v1851 = vpop.xlane.xlu0 %1850
        %v1852 = vsel %vm1638, %v1782, 0.0
        %1853 = vadd.xlane.f32.xlu0 %v1852
        %v1854 = vpop.xlane.xlu0 %1853
        %v1855 = vsel %vm1638, %v1784, 0.0
        %1856 = vadd.xlane.f32.xlu0 %v1855
        %v1857 = vpop.xlane.xlu0 %1856
        %v1858 = vsel %vm1638, %v1786, 0.0
        %1859 = vadd.xlane.f32.xlu0 %v1858
        %v1860 = vpop.xlane.xlu0 %1859
        %v1861 = vsel %vm1638, %v1788, 0.0
        %1862 = vadd.xlane.f32.xlu0 %v1861
        %v1863 = vpop.xlane.xlu0 %1862
        %v1864 = vsel %vm1638, %v1790, 0.0
        %1865 = vadd.xlane.f32.xlu0 %v1864
        %v1866 = vpop.xlane.xlu0 %1865
        %v1867 = vsel %vm1638, %v1792, 0.0
        %1868 = vadd.xlane.f32.xlu0 %v1867
        %v1869 = vpop.xlane.xlu0 %1868
        %v1870 = vsel %vm1638, %v1794, 0.0
        %1871 = vadd.xlane.f32.xlu0 %v1870
        %v1872 = vpop.xlane.xlu0 %1871
        %v1873 = vsel %vm1638, %v1796, 0.0
        %1874 = vadd.xlane.f32.xlu0 %v1873
        %v1875 = vpop.xlane.xlu0 %1874
        %v1876 = vsel %vm1638, %v1798, 0.0
        %1877 = vadd.xlane.f32.xlu0 %v1876
        %v1878 = vpop.xlane.xlu0 %1877
        %v1879 = vsel %vm1638, %v1800, 0.0
        %1880 = vadd.xlane.f32.xlu0 %v1879
        %v1881 = vpop.xlane.xlu0 %1880
        %v1882 = vsel %vm1638, %v1802, 0.0
        %1883 = vadd.xlane.f32.xlu0 %v1882
        %v1884 = vpop.xlane.xlu0 %1883
        %v1885 = vsel %vm1638, %v1804, 0.0
        %1886 = vadd.xlane.f32.xlu0 %v1885
        %v1887 = vpop.xlane.xlu0 %1886
        %v1888 = vsel %vm1638, %v1806, 0.0
        %1889 = vadd.xlane.f32.xlu0 %v1888
        %v1890 = vpop.xlane.xlu0 %1889
        %v1891 = vsel %vm1638, %v1808, 0.0
        %1892 = vadd.xlane.f32.xlu0 %v1891
        %v1893 = vpop.xlane.xlu0 %1892
        %v1894 = vsel %vm1638, %v1810, 0.0
        %1895 = vadd.xlane.f32.xlu0 %v1894
        %v1896 = vpop.xlane.xlu0 %1895
        %v1897 = vsel %vm1638, %v1812, 0.0
        %1898 = vadd.xlane.f32.xlu0 %v1897
        %v1899 = vpop.xlane.xlu0 %1898
        %v1900 = vsel %vm1638, %v1814, 0.0
        %1901 = vadd.xlane.f32.xlu0 %v1900
        %v1902 = vpop.xlane.xlu0 %1901
        %v1903 = vsel %vm1638, %v1816, 0.0
        %1904 = vadd.xlane.f32.xlu0 %v1903
        %v1905 = vpop.xlane.xlu0 %1904
        %v1906 = vsel %vm1638, %v1818, 0.0
        %1907 = vadd.xlane.f32.xlu0 %v1906
        %v1908 = vpop.xlane.xlu0 %1907
        %v1909 = vsel %vm1638, %v1820, 0.0
        %1910 = vadd.xlane.f32.xlu0 %v1909
        %v1911 = vpop.xlane.xlu0 %1910
        %v1912 = vsel %vm1638, %v1822, 0.0
        %1913 = vadd.xlane.f32.xlu0 %v1912
        %v1914 = vpop.xlane.xlu0 %1913
        %v1915 = vsel %vm1638, %v1824, 0.0
        %1916 = vadd.xlane.f32.xlu0 %v1915
        %v1917 = vpop.xlane.xlu0 %1916
        %v1918 = vsel %vm1638, %v1826, 0.0
        %1919 = vadd.xlane.f32.xlu0 %v1918
        %v1920 = vpop.xlane.xlu0 %1919
        %v1921 = vsel %vm1638, %v1828, 0.0
        %1922 = vadd.xlane.f32.xlu0 %v1921
        %v1923 = vpop.xlane.xlu0 %1922
        %v1924 = vsel %vm1638, %v1830, 0.0
        %1925 = vadd.xlane.f32.xlu0 %v1924
        %v1926 = vpop.xlane.xlu0 %1925
        %v1927 = vrcp.pop %v1833
        %v1928 = vrcp.pop %v1836
        %v1929 = vrcp.pop %v1839
        %v1930 = vrcp.pop %v1842
        %v1931 = vrcp.pop %v1845
        %v1932 = vrcp.pop %v1848
        %v1933 = vrcp.pop %v1851
        %v1934 = vrcp.pop %v1854
        %v1935 = vrcp.pop %v1857
        %v1936 = vrcp.pop %v1860
        %v1937 = vrcp.pop %v1863
        %v1938 = vrcp.pop %v1866
        %v1939 = vrcp.pop %v1869
        %v1940 = vrcp.pop %v1872
        %v1941 = vrcp.pop %v1875
        %v1942 = vrcp.pop %v1878
        %v1943 = vrcp.pop %v1881
        %v1944 = vrcp.pop %v1884
        %v1945 = vrcp.pop %v1887
        %v1946 = vrcp.pop %v1890
        %v1947 = vrcp.pop %v1893
        %v1948 = vrcp.pop %v1896
        %v1949 = vrcp.pop %v1899
        %v1950 = vrcp.pop %v1902
        %v1951 = vrcp.pop %v1905
        %v1952 = vrcp.pop %v1908
        %v1953 = vrcp.pop %v1911
        %v1954 = vrcp.pop %v1914
        %v1955 = vrcp.pop %v1917
        %v1956 = vrcp.pop %v1920
        %v1957 = vrcp.pop %v1923
        %v1958 = vrcp.pop %v1926
        %v1959 = vmul.f32 %v1768, %v1927
        %v1960 = vmul.f32 %v1770, %v1928
        %v1961 = vmul.f32 %v1772, %v1929
        %v1962 = vmul.f32 %v1774, %v1930
        %v1963 = vmul.f32 %v1776, %v1931
        %v1964 = vmul.f32 %v1778, %v1932
        %v1965 = vmul.f32 %v1780, %v1933
        %v1966 = vmul.f32 %v1782, %v1934
        %v1967 = vmul.f32 %v1784, %v1935
        %v1968 = vmul.f32 %v1786, %v1936
        %v1969 = vmul.f32 %v1788, %v1937
        %v1970 = vmul.f32 %v1790, %v1938
        %v1971 = vmul.f32 %v1792, %v1939
        %v1972 = vmul.f32 %v1794, %v1940
        %v1973 = vmul.f32 %v1796, %v1941
        %v1974 = vmul.f32 %v1798, %v1942
        %v1975 = vmul.f32 %v1800, %v1943
        %v1976 = vmul.f32 %v1802, %v1944
        %v1977 = vmul.f32 %v1804, %v1945
        %v1978 = vmul.f32 %v1806, %v1946
        %v1979 = vmul.f32 %v1808, %v1947
        %v1980 = vmul.f32 %v1810, %v1948
        %v1981 = vmul.f32 %v1812, %v1949
        %v1982 = vmul.f32 %v1814, %v1950
        %v1983 = vmul.f32 %v1816, %v1951
        %v1984 = vmul.f32 %v1818, %v1952
        %v1985 = vmul.f32 %v1820, %v1953
        %v1986 = vmul.f32 %v1822, %v1954
        %v1987 = vmul.f32 %v1824, %v1955
        %v1988 = vmul.f32 %v1826, %v1956
        %v1989 = vmul.f32 %v1828, %v1957
        %v1990 = vmul.f32 %v1830, %v1958
        %v1991 = vpack.c.bf16 %v1960, %v1959
        %v1992 = vpack.c.bf16 %v1962, %v1961
        %v1993 = vpack.c.bf16 %v1964, %v1963
        %v1994 = vpack.c.bf16 %v1966, %v1965
        %v1995 = vpack.c.bf16 %v1968, %v1967
        %v1996 = vpack.c.bf16 %v1970, %v1969
        %v1997 = vpack.c.bf16 %v1972, %v1971
        %v1998 = vpack.c.bf16 %v1974, %v1973
        %v1999 = vpack.c.bf16 %v1976, %v1975
        %v2000 = vpack.c.bf16 %v1978, %v1977
        %v2001 = vpack.c.bf16 %v1980, %v1979
        %v2002 = vpack.c.bf16 %v1982, %v1981
        %v2003 = vpack.c.bf16 %v1984, %v1983
        %v2004 = vpack.c.bf16 %v1986, %v1985
        %v2005 = vpack.c.bf16 %v1988, %v1987
        %v2006 = vpack.c.bf16 %v1990, %v1989
        %2007 = vrot.lane.b32.xlu0 %v749, 64
        %v2008 = vpop.permute.xlu0 %2007
        %v2011 = vsel %vm1638, %v1991, 0
        %2013 = vmatprep.subr.bf16.mxu0 0
        %2014 = vmatpush1.bf16.msra.mxu0 %v2008
        %2015 = vmatprep.subr.bf16.mxu0 0
        %2016 = vmatpush1.bf16.msra.mxu0 0
        %2017 = vmatprep.subr.bf16.mxu0 0
        %2018 = vmatpush1.bf16.msra.mxu0 0
        %2019 = vmatprep.subr.bf16.mxu0 0
        %2020 = vmatpush1.bf16.msra.mxu0 0
        %2021 = vmatprep.subr.bf16.mxu0 0
        %2022 = vmatpush1.bf16.msra.mxu0 0
        %2023 = vmatprep.subr.bf16.mxu0 0
        %2024 = vmatpush1.bf16.msra.mxu0 0
        %2025 = vmatprep.subr.bf16.mxu0 0
        %2026 = vmatpush1.bf16.msra.mxu0 0
        %2027 = vmatprep.subr.bf16.mxu0 0
        %2028 = vmatpush1.bf16.msra.mxu0 0
        %2029 = vmatprep.subr.bf16.mxu0 0
        %2030 = vmatpush1.bf16.msra.mxu0 0
        %2031 = vmatprep.subr.bf16.mxu0 0
        %2032 = vmatpush1.bf16.msra.mxu0 0
        %2033 = vmatprep.subr.bf16.mxu0 0
        %2034 = vmatpush1.bf16.msra.mxu0 0
        %2035 = vmatprep.subr.bf16.mxu0 0
        %2036 = vmatpush1.bf16.msra.mxu0 0
        %2037 = vmatprep.subr.bf16.mxu0 0
        %2038 = vmatpush1.bf16.msra.mxu0 0
        %2039 = vmatprep.subr.bf16.mxu0 0
        %2040 = vmatpush1.bf16.msra.mxu0 0
        %2041 = vmatprep.subr.bf16.mxu0 0
        %2042 = vmatpush1.bf16.msra.mxu0 0
        %2043 = vmatprep.subr.bf16.mxu0 0
        %2044 = vmatpush1.bf16.msra.mxu0 0
        %2045 = vmatprep.mubr.bf16.mxu0 0
        %2046 = vmatmul.mubr.bf16.gmra.mrb[0].mxu0 %v2011
        %v2047 = vpop.f32.mrb[0].mxu0
        %v2048 = vadd.f32 0.0, %v2047
        %v2049 = vpop.f32.mrb[0].mxu0
        %v2050 = vpop.f32.mrb[0].mxu0
        %v2051 = vadd.f32 0.0, %v2050
        %v2052 = vpop.f32.mrb[0].mxu0
        %2053 = vdwg.mxu0
        %2054 = vrot.lane.b32.xlu0 %v750, 64
        %v2055 = vpop.permute.xlu0 %2054
        %v2058 = vsel %vm1638, %v1992, 0
        %2060 = vmatprep.subr.bf16.mxu0 0
        %2061 = vmatpush1.bf16.msra.mxu0 %v2055
        %2062 = vmatprep.subr.bf16.mxu0 0
        %2063 = vmatpush1.bf16.msra.mxu0 0
        %2064 = vmatprep.subr.bf16.mxu0 0
        %2065 = vmatpush1.bf16.msra.mxu0 0
        %2066 = vmatprep.subr.bf16.mxu0 0
        %2067 = vmatpush1.bf16.msra.mxu0 0
        %2068 = vmatprep.subr.bf16.mxu0 0
        %2069 = vmatpush1.bf16.msra.mxu0 0
        %2070 = vmatprep.subr.bf16.mxu0 0
        %2071 = vmatpush1.bf16.msra.mxu0 0
        %2072 = vmatprep.subr.bf16.mxu0 0
        %2073 = vmatpush1.bf16.msra.mxu0 0
        %2074 = vmatprep.subr.bf16.mxu0 0
        %2075 = vmatpush1.bf16.msra.mxu0 0
        %2076 = vmatprep.subr.bf16.mxu0 0
        %2077 = vmatpush1.bf16.msra.mxu0 0
        %2078 = vmatprep.subr.bf16.mxu0 0
        %2079 = vmatpush1.bf16.msra.mxu0 0
        %2080 = vmatprep.subr.bf16.mxu0 0
        %2081 = vmatpush1.bf16.msra.mxu0 0
        %2082 = vmatprep.subr.bf16.mxu0 0
        %2083 = vmatpush1.bf16.msra.mxu0 0
        %2084 = vmatprep.subr.bf16.mxu0 0
        %2085 = vmatpush1.bf16.msra.mxu0 0
        %2086 = vmatprep.subr.bf16.mxu0 0
        %2087 = vmatpush1.bf16.msra.mxu0 0
        %2088 = vmatprep.subr.bf16.mxu0 0
        %2089 = vmatpush1.bf16.msra.mxu0 0
        %2090 = vmatprep.subr.bf16.mxu0 0
        %2091 = vmatpush1.bf16.msra.mxu0 0
        %2092 = vmatprep.mubr.bf16.mxu0 0
        %2093 = vmatmul.mubr.bf16.gmra.mrb[0].mxu0 %v2058
        %v2094 = vpop.f32.mrb[0].mxu0
        %v2095 = vadd.f32 0.0, %v2094
        %v2096 = vpop.f32.mrb[0].mxu0
        %v2097 = vpop.f32.mrb[0].mxu0
        %v2098 = vadd.f32 0.0, %v2097
        %v2099 = vpop.f32.mrb[0].mxu0
        %2100 = vdwg.mxu0
        %2101 = vrot.lane.b32.xlu0 %v751, 64
        %v2102 = vpop.permute.xlu0 %2101
        %v2105 = vsel %vm1638, %v1993, 0
        %2107 = vmatprep.subr.bf16.mxu0 0
        %2108 = vmatpush1.bf16.msra.mxu0 %v2102
        %2109 = vmatprep.subr.bf16.mxu0 0
        %2110 = vmatpush1.bf16.msra.mxu0 0
        %2111 = vmatprep.subr.bf16.mxu0 0
        %2112 = vmatpush1.bf16.msra.mxu0 0
        %2113 = vmatprep.subr.bf16.mxu0 0
        %2114 = vmatpush1.bf16.msra.mxu0 0
        %2115 = vmatprep.subr.bf16.mxu0 0
        %2116 = vmatpush1.bf16.msra.mxu0 0
        %2117 = vmatprep.subr.bf16.mxu0 0
        %2118 = vmatpush1.bf16.msra.mxu0 0
        %2119 = vmatprep.subr.bf16.mxu0 0
        %2120 = vmatpush1.bf16.msra.mxu0 0
        %2121 = vmatprep.subr.bf16.mxu0 0
        %2122 = vmatpush1.bf16.msra.mxu0 0
        %2123 = vmatprep.subr.bf16.mxu0 0
        %2124 = vmatpush1.bf16.msra.mxu0 0
        %2125 = vmatprep.subr.bf16.mxu0 0
        %2126 = vmatpush1.bf16.msra.mxu0 0
        %2127 = vmatprep.subr.bf16.mxu0 0
        %2128 = vmatpush1.bf16.msra.mxu0 0
        %2129 = vmatprep.subr.bf16.mxu0 0
        %2130 = vmatpush1.bf16.msra.mxu0 0
        %2131 = vmatprep.subr.bf16.mxu0 0
        %2132 = vmatpush1.bf16.msra.mxu0 0
        %2133 = vmatprep.subr.bf16.mxu0 0
        %2134 = vmatpush1.bf16.msra.mxu0 0
        %2135 = vmatprep.subr.bf16.mxu0 0
        %2136 = vmatpush1.bf16.msra.mxu0 0
        %2137 = vmatprep.subr.bf16.mxu0 0
        %2138 = vmatpush1.bf16.msra.mxu0 0
        %2139 = vmatprep.mubr.bf16.mxu0 0
        %2140 = vmatmul.mubr.bf16.gmra.mrb[0].mxu0 %v2105
        %v2141 = vpop.f32.mrb[0].mxu0
        %v2142 = vadd.f32 0.0, %v2141
        %v2143 = vpop.f32.mrb[0].mxu0
        %v2144 = vpop.f32.mrb[0].mxu0
        %v2145 = vadd.f32 0.0, %v2144
        %v2146 = vpop.f32.mrb[0].mxu0
        %2147 = vdwg.mxu0
        %2148 = vrot.lane.b32.xlu0 %v752, 64
        %v2149 = vpop.permute.xlu0 %2148
        %v2152 = vsel %vm1638, %v1994, 0
        %2154 = vmatprep.subr.bf16.mxu0 0
        %2155 = vmatpush1.bf16.msra.mxu0 %v2149
        %2156 = vmatprep.subr.bf16.mxu0 0
        %2157 = vmatpush1.bf16.msra.mxu0 0
        %2158 = vmatprep.subr.bf16.mxu0 0
        %2159 = vmatpush1.bf16.msra.mxu0 0
        %2160 = vmatprep.subr.bf16.mxu0 0
        %2161 = vmatpush1.bf16.msra.mxu0 0
        %2162 = vmatprep.subr.bf16.mxu0 0
        %2163 = vmatpush1.bf16.msra.mxu0 0
        %2164 = vmatprep.subr.bf16.mxu0 0
        %2165 = vmatpush1.bf16.msra.mxu0 0
        %2166 = vmatprep.subr.bf16.mxu0 0
        %2167 = vmatpush1.bf16.msra.mxu0 0
        %2168 = vmatprep.subr.bf16.mxu0 0
        %2169 = vmatpush1.bf16.msra.mxu0 0
        %2170 = vmatprep.subr.bf16.mxu0 0
        %2171 = vmatpush1.bf16.msra.mxu0 0
        %2172 = vmatprep.subr.bf16.mxu0 0
        %2173 = vmatpush1.bf16.msra.mxu0 0
        %2174 = vmatprep.subr.bf16.mxu0 0
        %2175 = vmatpush1.bf16.msra.mxu0 0
        %2176 = vmatprep.subr.bf16.mxu0 0
        %2177 = vmatpush1.bf16.msra.mxu0 0
        %2178 = vmatprep.subr.bf16.mxu0 0
        %2179 = vmatpush1.bf16.msra.mxu0 0
        %2180 = vmatprep.subr.bf16.mxu0 0
        %2181 = vmatpush1.bf16.msra.mxu0 0
        %2182 = vmatprep.subr.bf16.mxu0 0
        %2183 = vmatpush1.bf16.msra.mxu0 0
        %2184 = vmatprep.subr.bf16.mxu0 0
        %2185 = vmatpush1.bf16.msra.mxu0 0
        %2186 = vmatprep.mubr.bf16.mxu0 0
        %2187 = vmatmul.mubr.bf16.gmra.mrb[0].mxu0 %v2152
        %v2188 = vpop.f32.mrb[0].mxu0
        %v2189 = vadd.f32 0.0, %v2188
        %v2190 = vpop.f32.mrb[0].mxu0
        %v2191 = vpop.f32.mrb[0].mxu0
        %v2192 = vadd.f32 0.0, %v2191
        %v2193 = vpop.f32.mrb[0].mxu0
        %2194 = vdwg.mxu0
        %2195 = vrot.lane.b32.xlu0 %v753, 64
        %v2196 = vpop.permute.xlu0 %2195
        %v2199 = vsel %vm1638, %v1995, 0
        %2201 = vmatprep.subr.bf16.mxu0 0
        %2202 = vmatpush1.bf16.msra.mxu0 %v2196
        %2203 = vmatprep.subr.bf16.mxu0 0
        %2204 = vmatpush1.bf16.msra.mxu0 0
        %2205 = vmatprep.subr.bf16.mxu0 0
        %2206 = vmatpush1.bf16.msra.mxu0 0
        %2207 = vmatprep.subr.bf16.mxu0 0
        %2208 = vmatpush1.bf16.msra.mxu0 0
        %2209 = vmatprep.subr.bf16.mxu0 0
        %2210 = vmatpush1.bf16.msra.mxu0 0
        %2211 = vmatprep.subr.bf16.mxu0 0
        %2212 = vmatpush1.bf16.msra.mxu0 0
        %2213 = vmatprep.subr.bf16.mxu0 0
        %2214 = vmatpush1.bf16.msra.mxu0 0
        %2215 = vmatprep.subr.bf16.mxu0 0
        %2216 = vmatpush1.bf16.msra.mxu0 0
        %2217 = vmatprep.subr.bf16.mxu0 0
        %2218 = vmatpush1.bf16.msra.mxu0 0
        %2219 = vmatprep.subr.bf16.mxu0 0
        %2220 = vmatpush1.bf16.msra.mxu0 0
        %2221 = vmatprep.subr.bf16.mxu0 0
        %2222 = vmatpush1.bf16.msra.mxu0 0
        %2223 = vmatprep.subr.bf16.mxu0 0
        %2224 = vmatpush1.bf16.msra.mxu0 0
        %2225 = vmatprep.subr.bf16.mxu0 0
        %2226 = vmatpush1.bf16.msra.mxu0 0
        %2227 = vmatprep.subr.bf16.mxu0 0
        %2228 = vmatpush1.bf16.msra.mxu0 0
        %2229 = vmatprep.subr.bf16.mxu0 0
        %2230 = vmatpush1.bf16.msra.mxu0 0
        %2231 = vmatprep.subr.bf16.mxu0 0
        %2232 = vmatpush1.bf16.msra.mxu0 0
        %2233 = vmatprep.mubr.bf16.mxu0 0
        %2234 = vmatmul.mubr.bf16.gmra.mrb[0].mxu0 %v2199
        %v2235 = vpop.f32.mrb[0].mxu0
        %v2236 = vadd.f32 0.0, %v2235
        %v2237 = vpop.f32.mrb[0].mxu0
        %v2238 = vpop.f32.mrb[0].mxu0
        %v2239 = vadd.f32 0.0, %v2238
        %v2240 = vpop.f32.mrb[0].mxu0
        %2241 = vdwg.mxu0
        %2242 = vrot.lane.b32.xlu0 %v754, 64
        %v2243 = vpop.permute.xlu0 %2242
        %v2246 = vsel %vm1638, %v1996, 0
        %2248 = vmatprep.subr.bf16.mxu0 0
        %2249 = vmatpush1.bf16.msra.mxu0 %v2243
        %2250 = vmatprep.subr.bf16.mxu0 0
        %2251 = vmatpush1.bf16.msra.mxu0 0
        %2252 = vmatprep.subr.bf16.mxu0 0
        %2253 = vmatpush1.bf16.msra.mxu0 0
        %2254 = vmatprep.subr.bf16.mxu0 0
        %2255 = vmatpush1.bf16.msra.mxu0 0
        %2256 = vmatprep.subr.bf16.mxu0 0
        %2257 = vmatpush1.bf16.msra.mxu0 0
        %2258 = vmatprep.subr.bf16.mxu0 0
        %2259 = vmatpush1.bf16.msra.mxu0 0
        %2260 = vmatprep.subr.bf16.mxu0 0
        %2261 = vmatpush1.bf16.msra.mxu0 0
        %2262 = vmatprep.subr.bf16.mxu0 0
        %2263 = vmatpush1.bf16.msra.mxu0 0
        %2264 = vmatprep.subr.bf16.mxu0 0
        %2265 = vmatpush1.bf16.msra.mxu0 0
        %2266 = vmatprep.subr.bf16.mxu0 0
        %2267 = vmatpush1.bf16.msra.mxu0 0
        %2268 = vmatprep.subr.bf16.mxu0 0
        %2269 = vmatpush1.bf16.msra.mxu0 0
        %2270 = vmatprep.subr.bf16.mxu0 0
        %2271 = vmatpush1.bf16.msra.mxu0 0
        %2272 = vmatprep.subr.bf16.mxu0 0
        %2273 = vmatpush1.bf16.msra.mxu0 0
        %2274 = vmatprep.subr.bf16.mxu0 0
        %2275 = vmatpush1.bf16.msra.mxu0 0
        %2276 = vmatprep.subr.bf16.mxu0 0
        %2277 = vmatpush1.bf16.msra.mxu0 0
        %2278 = vmatprep.subr.bf16.mxu0 0
        %2279 = vmatpush1.bf16.msra.mxu0 0
        %2280 = vmatprep.mubr.bf16.mxu0 0
        %2281 = vmatmul.mubr.bf16.gmra.mrb[0].mxu0 %v2246
        %v2282 = vpop.f32.mrb[0].mxu0
        %v2283 = vadd.f32 0.0, %v2282
        %v2284 = vpop.f32.mrb[0].mxu0
        %v2285 = vpop.f32.mrb[0].mxu0
        %v2286 = vadd.f32 0.0, %v2285
        %v2287 = vpop.f32.mrb[0].mxu0
        %2288 = vdwg.mxu0
        %2289 = vrot.lane.b32.xlu0 %v755, 64
        %v2290 = vpop.permute.xlu0 %2289
        %v2293 = vsel %vm1638, %v1997, 0
        %2295 = vmatprep.subr.bf16.mxu0 0
        %2296 = vmatpush1.bf16.msra.mxu0 %v2290
        %2297 = vmatprep.subr.bf16.mxu0 0
        %2298 = vmatpush1.bf16.msra.mxu0 0
        %2299 = vmatprep.subr.bf16.mxu0 0
        %2300 = vmatpush1.bf16.msra.mxu0 0
        %2301 = vmatprep.subr.bf16.mxu0 0
        %2302 = vmatpush1.bf16.msra.mxu0 0
        %2303 = vmatprep.subr.bf16.mxu0 0
        %2304 = vmatpush1.bf16.msra.mxu0 0
        %2305 = vmatprep.subr.bf16.mxu0 0
        %2306 = vmatpush1.bf16.msra.mxu0 0
        %2307 = vmatprep.subr.bf16.mxu0 0
        %2308 = vmatpush1.bf16.msra.mxu0 0
        %2309 = vmatprep.subr.bf16.mxu0 0
        %2310 = vmatpush1.bf16.msra.mxu0 0
        %2311 = vmatprep.subr.bf16.mxu0 0
        %2312 = vmatpush1.bf16.msra.mxu0 0
        %2313 = vmatprep.subr.bf16.mxu0 0
        %2314 = vmatpush1.bf16.msra.mxu0 0
        %2315 = vmatprep.subr.bf16.mxu0 0
        %2316 = vmatpush1.bf16.msra.mxu0 0
        %2317 = vmatprep.subr.bf16.mxu0 0
        %2318 = vmatpush1.bf16.msra.mxu0 0
        %2319 = vmatprep.subr.bf16.mxu0 0
        %2320 = vmatpush1.bf16.msra.mxu0 0
        %2321 = vmatprep.subr.bf16.mxu0 0
        %2322 = vmatpush1.bf16.msra.mxu0 0
        %2323 = vmatprep.subr.bf16.mxu0 0
        %2324 = vmatpush1.bf16.msra.mxu0 0
        %2325 = vmatprep.subr.bf16.mxu0 0
        %2326 = vmatpush1.bf16.msra.mxu0 0
        %2327 = vmatprep.mubr.bf16.mxu0 0
        %2328 = vmatmul.mubr.bf16.gmra.mrb[0].mxu0 %v2293
        %v2329 = vpop.f32.mrb[0].mxu0
        %v2330 = vadd.f32 0.0, %v2329
        %v2331 = vpop.f32.mrb[0].mxu0
        %v2332 = vpop.f32.mrb[0].mxu0
        %v2333 = vadd.f32 0.0, %v2332
        %v2334 = vpop.f32.mrb[0].mxu0
        %2335 = vdwg.mxu0
        %2336 = vrot.lane.b32.xlu0 %v756, 64
        %v2337 = vpop.permute.xlu0 %2336
        %v2340 = vsel %vm1638, %v1998, 0
        %2342 = vmatprep.subr.bf16.mxu0 0
        %2343 = vmatpush1.bf16.msra.mxu0 %v2337
        %2344 = vmatprep.subr.bf16.mxu0 0
        %2345 = vmatpush1.bf16.msra.mxu0 0
        %2346 = vmatprep.subr.bf16.mxu0 0
        %2347 = vmatpush1.bf16.msra.mxu0 0
        %2348 = vmatprep.subr.bf16.mxu0 0
        %2349 = vmatpush1.bf16.msra.mxu0 0
        %2350 = vmatprep.subr.bf16.mxu0 0
        %2351 = vmatpush1.bf16.msra.mxu0 0
        %2352 = vmatprep.subr.bf16.mxu0 0
        %2353 = vmatpush1.bf16.msra.mxu0 0
        %2354 = vmatprep.subr.bf16.mxu0 0
        %2355 = vmatpush1.bf16.msra.mxu0 0
        %2356 = vmatprep.subr.bf16.mxu0 0
        %2357 = vmatpush1.bf16.msra.mxu0 0
        %2358 = vmatprep.subr.bf16.mxu0 0
        %2359 = vmatpush1.bf16.msra.mxu0 0
        %2360 = vmatprep.subr.bf16.mxu0 0
        %2361 = vmatpush1.bf16.msra.mxu0 0
        %2362 = vmatprep.subr.bf16.mxu0 0
        %2363 = vmatpush1.bf16.msra.mxu0 0
        %2364 = vmatprep.subr.bf16.mxu0 0
        %2365 = vmatpush1.bf16.msra.mxu0 0
        %2366 = vmatprep.subr.bf16.mxu0 0
        %2367 = vmatpush1.bf16.msra.mxu0 0
        %2368 = vmatprep.subr.bf16.mxu0 0
        %2369 = vmatpush1.bf16.msra.mxu0 0
        %2370 = vmatprep.subr.bf16.mxu0 0
        %2371 = vmatpush1.bf16.msra.mxu0 0
        %2372 = vmatprep.subr.bf16.mxu0 0
        %2373 = vmatpush1.bf16.msra.mxu0 0
        %2374 = vmatprep.mubr.bf16.mxu0 0
        %2375 = vmatmul.mubr.bf16.gmra.mrb[0].mxu0 %v2340
        %v2376 = vpop.f32.mrb[0].mxu0
        %v2377 = vadd.f32 0.0, %v2376
        %v2378 = vpop.f32.mrb[0].mxu0
        %v2379 = vpop.f32.mrb[0].mxu0
        %v2380 = vadd.f32 0.0, %v2379
        %v2381 = vpop.f32.mrb[0].mxu0
        %2382 = vdwg.mxu0
        %2383 = vrot.lane.b32.xlu0 %v757, 64
        %v2384 = vpop.permute.xlu0 %2383
        %v2387 = vsel %vm1638, %v1999, 0
        %2389 = vmatprep.subr.bf16.mxu0 0
        %2390 = vmatpush1.bf16.msra.mxu0 %v2384
        %2391 = vmatprep.subr.bf16.mxu0 0
        %2392 = vmatpush1.bf16.msra.mxu0 0
        %2393 = vmatprep.subr.bf16.mxu0 0
        %2394 = vmatpush1.bf16.msra.mxu0 0
        %2395 = vmatprep.subr.bf16.mxu0 0
        %2396 = vmatpush1.bf16.msra.mxu0 0
        %2397 = vmatprep.subr.bf16.mxu0 0
        %2398 = vmatpush1.bf16.msra.mxu0 0
        %2399 = vmatprep.subr.bf16.mxu0 0
        %2400 = vmatpush1.bf16.msra.mxu0 0
        %2401 = vmatprep.subr.bf16.mxu0 0
        %2402 = vmatpush1.bf16.msra.mxu0 0
        %2403 = vmatprep.subr.bf16.mxu0 0
        %2404 = vmatpush1.bf16.msra.mxu0 0
        %2405 = vmatprep.subr.bf16.mxu0 0
        %2406 = vmatpush1.bf16.msra.mxu0 0
        %2407 = vmatprep.subr.bf16.mxu0 0
        %2408 = vmatpush1.bf16.msra.mxu0 0
        %2409 = vmatprep.subr.bf16.mxu0 0
        %2410 = vmatpush1.bf16.msra.mxu0 0
        %2411 = vmatprep.subr.bf16.mxu0 0
        %2412 = vmatpush1.bf16.msra.mxu0 0
        %2413 = vmatprep.subr.bf16.mxu0 0
        %2414 = vmatpush1.bf16.msra.mxu0 0
        %2415 = vmatprep.subr.bf16.mxu0 0
        %2416 = vmatpush1.bf16.msra.mxu0 0
        %2417 = vmatprep.subr.bf16.mxu0 0
        %2418 = vmatpush1.bf16.msra.mxu0 0
        %2419 = vmatprep.subr.bf16.mxu0 0
        %2420 = vmatpush1.bf16.msra.mxu0 0
        %2421 = vmatprep.mubr.bf16.mxu0 0
        %2422 = vmatmul.mubr.bf16.gmra.mrb[0].mxu0 %v2387
        %v2423 = vpop.f32.mrb[0].mxu0
        %v2424 = vadd.f32 0.0, %v2423
        %v2425 = vpop.f32.mrb[0].mxu0
        %v2426 = vpop.f32.mrb[0].mxu0
        %v2427 = vadd.f32 0.0, %v2426
        %v2428 = vpop.f32.mrb[0].mxu0
        %2429 = vdwg.mxu0
        %2430 = vrot.lane.b32.xlu0 %v758, 64
        %v2431 = vpop.permute.xlu0 %2430
        %v2434 = vsel %vm1638, %v2000, 0
        %2436 = vmatprep.subr.bf16.mxu0 0
        %2437 = vmatpush1.bf16.msra.mxu0 %v2431
        %2438 = vmatprep.subr.bf16.mxu0 0
        %2439 = vmatpush1.bf16.msra.mxu0 0
        %2440 = vmatprep.subr.bf16.mxu0 0
        %2441 = vmatpush1.bf16.msra.mxu0 0
        %2442 = vmatprep.subr.bf16.mxu0 0
        %2443 = vmatpush1.bf16.msra.mxu0 0
        %2444 = vmatprep.subr.bf16.mxu0 0
        %2445 = vmatpush1.bf16.msra.mxu0 0
        %2446 = vmatprep.subr.bf16.mxu0 0
        %2447 = vmatpush1.bf16.msra.mxu0 0
        %2448 = vmatprep.subr.bf16.mxu0 0
        %2449 = vmatpush1.bf16.msra.mxu0 0
        %2450 = vmatprep.subr.bf16.mxu0 0
        %2451 = vmatpush1.bf16.msra.mxu0 0
        %2452 = vmatprep.subr.bf16.mxu0 0
        %2453 = vmatpush1.bf16.msra.mxu0 0
        %2454 = vmatprep.subr.bf16.mxu0 0
        %2455 = vmatpush1.bf16.msra.mxu0 0
        %2456 = vmatprep.subr.bf16.mxu0 0
        %2457 = vmatpush1.bf16.msra.mxu0 0
        %2458 = vmatprep.subr.bf16.mxu0 0
        %2459 = vmatpush1.bf16.msra.mxu0 0
        %2460 = vmatprep.subr.bf16.mxu0 0
        %2461 = vmatpush1.bf16.msra.mxu0 0
        %2462 = vmatprep.subr.bf16.mxu0 0
        %2463 = vmatpush1.bf16.msra.mxu0 0
        %2464 = vmatprep.subr.bf16.mxu0 0
        %2465 = vmatpush1.bf16.msra.mxu0 0
        %2466 = vmatprep.subr.bf16.mxu0 0
        %2467 = vmatpush1.bf16.msra.mxu0 0
        %2468 = vmatprep.mubr.bf16.mxu0 0
        %2469 = vmatmul.mubr.bf16.gmra.mrb[0].mxu0 %v2434
        %v2470 = vpop.f32.mrb[0].mxu0
        %v2471 = vadd.f32 0.0, %v2470
        %v2472 = vpop.f32.mrb[0].mxu0
        %v2473 = vpop.f32.mrb[0].mxu0
        %v2474 = vadd.f32 0.0, %v2473
        %v2475 = vpop.f32.mrb[0].mxu0
        %2476 = vdwg.mxu0
        %2477 = vrot.lane.b32.xlu0 %v759, 64
        %v2478 = vpop.permute.xlu0 %2477
        %v2481 = vsel %vm1638, %v2001, 0
        %2483 = vmatprep.subr.bf16.mxu0 0
        %2484 = vmatpush1.bf16.msra.mxu0 %v2478
        %2485 = vmatprep.subr.bf16.mxu0 0
        %2486 = vmatpush1.bf16.msra.mxu0 0
        %2487 = vmatprep.subr.bf16.mxu0 0
        %2488 = vmatpush1.bf16.msra.mxu0 0
        %2489 = vmatprep.subr.bf16.mxu0 0
        %2490 = vmatpush1.bf16.msra.mxu0 0
        %2491 = vmatprep.subr.bf16.mxu0 0
        %2492 = vmatpush1.bf16.msra.mxu0 0
        %2493 = vmatprep.subr.bf16.mxu0 0
        %2494 = vmatpush1.bf16.msra.mxu0 0
        %2495 = vmatprep.subr.bf16.mxu0 0
        %2496 = vmatpush1.bf16.msra.mxu0 0
        %2497 = vmatprep.subr.bf16.mxu0 0
        %2498 = vmatpush1.bf16.msra.mxu0 0
        %2499 = vmatprep.subr.bf16.mxu0 0
        %2500 = vmatpush1.bf16.msra.mxu0 0
        %2501 = vmatprep.subr.bf16.mxu0 0
        %2502 = vmatpush1.bf16.msra.mxu0 0
        %2503 = vmatprep.subr.bf16.mxu0 0
        %2504 = vmatpush1.bf16.msra.mxu0 0
        %2505 = vmatprep.subr.bf16.mxu0 0
        %2506 = vmatpush1.bf16.msra.mxu0 0
        %2507 = vmatprep.subr.bf16.mxu0 0
        %2508 = vmatpush1.bf16.msra.mxu0 0
        %2509 = vmatprep.subr.bf16.mxu0 0
        %2510 = vmatpush1.bf16.msra.mxu0 0
        %2511 = vmatprep.subr.bf16.mxu0 0
        %2512 = vmatpush1.bf16.msra.mxu0 0
        %2513 = vmatprep.subr.bf16.mxu0 0
        %2514 = vmatpush1.bf16.msra.mxu0 0
        %2515 = vmatprep.mubr.bf16.mxu0 0
        %2516 = vmatmul.mubr.bf16.gmra.mrb[0].mxu0 %v2481
        %v2517 = vpop.f32.mrb[0].mxu0
        %v2518 = vadd.f32 0.0, %v2517
        %v2519 = vpop.f32.mrb[0].mxu0
        %v2520 = vpop.f32.mrb[0].mxu0
        %v2521 = vadd.f32 0.0, %v2520
        %v2522 = vpop.f32.mrb[0].mxu0
        %2523 = vdwg.mxu0
        %2524 = vrot.lane.b32.xlu0 %v760, 64
        %v2525 = vpop.permute.xlu0 %2524
        %v2528 = vsel %vm1638, %v2002, 0
        %2530 = vmatprep.subr.bf16.mxu0 0
        %2531 = vmatpush1.bf16.msra.mxu0 %v2525
        %2532 = vmatprep.subr.bf16.mxu0 0
        %2533 = vmatpush1.bf16.msra.mxu0 0
        %2534 = vmatprep.subr.bf16.mxu0 0
        %2535 = vmatpush1.bf16.msra.mxu0 0
        %2536 = vmatprep.subr.bf16.mxu0 0
        %2537 = vmatpush1.bf16.msra.mxu0 0
        %2538 = vmatprep.subr.bf16.mxu0 0
        %2539 = vmatpush1.bf16.msra.mxu0 0
        %2540 = vmatprep.subr.bf16.mxu0 0
        %2541 = vmatpush1.bf16.msra.mxu0 0
        %2542 = vmatprep.subr.bf16.mxu0 0
        %2543 = vmatpush1.bf16.msra.mxu0 0
        %2544 = vmatprep.subr.bf16.mxu0 0
        %2545 = vmatpush1.bf16.msra.mxu0 0
        %2546 = vmatprep.subr.bf16.mxu0 0
        %2547 = vmatpush1.bf16.msra.mxu0 0
        %2548 = vmatprep.subr.bf16.mxu0 0
        %2549 = vmatpush1.bf16.msra.mxu0 0
        %2550 = vmatprep.subr.bf16.mxu0 0
        %2551 = vmatpush1.bf16.msra.mxu0 0
        %2552 = vmatprep.subr.bf16.mxu0 0
        %2553 = vmatpush1.bf16.msra.mxu0 0
        %2554 = vmatprep.subr.bf16.mxu0 0
        %2555 = vmatpush1.bf16.msra.mxu0 0
        %2556 = vmatprep.subr.bf16.mxu0 0
        %2557 = vmatpush1.bf16.msra.mxu0 0
        %2558 = vmatprep.subr.bf16.mxu0 0
        %2559 = vmatpush1.bf16.msra.mxu0 0
        %2560 = vmatprep.subr.bf16.mxu0 0
        %2561 = vmatpush1.bf16.msra.mxu0 0
        %2562 = vmatprep.mubr.bf16.mxu0 0
        %2563 = vmatmul.mubr.bf16.gmra.mrb[0].mxu0 %v2528
        %v2564 = vpop.f32.mrb[0].mxu0
        %v2565 = vadd.f32 0.0, %v2564
        %v2566 = vpop.f32.mrb[0].mxu0
        %v2567 = vpop.f32.mrb[0].mxu0
        %v2568 = vadd.f32 0.0, %v2567
        %v2569 = vpop.f32.mrb[0].mxu0
        %2570 = vdwg.mxu0
        %2571 = vrot.lane.b32.xlu0 %v761, 64
        %v2572 = vpop.permute.xlu0 %2571
        %v2575 = vsel %vm1638, %v2003, 0
        %2577 = vmatprep.subr.bf16.mxu0 0
        %2578 = vmatpush1.bf16.msra.mxu0 %v2572
        %2579 = vmatprep.subr.bf16.mxu0 0
        %2580 = vmatpush1.bf16.msra.mxu0 0
        %2581 = vmatprep.subr.bf16.mxu0 0
        %2582 = vmatpush1.bf16.msra.mxu0 0
        %2583 = vmatprep.subr.bf16.mxu0 0
        %2584 = vmatpush1.bf16.msra.mxu0 0
        %2585 = vmatprep.subr.bf16.mxu0 0
        %2586 = vmatpush1.bf16.msra.mxu0 0
        %2587 = vmatprep.subr.bf16.mxu0 0
        %2588 = vmatpush1.bf16.msra.mxu0 0
        %2589 = vmatprep.subr.bf16.mxu0 0
        %2590 = vmatpush1.bf16.msra.mxu0 0
        %2591 = vmatprep.subr.bf16.mxu0 0
        %2592 = vmatpush1.bf16.msra.mxu0 0
        %2593 = vmatprep.subr.bf16.mxu0 0
        %2594 = vmatpush1.bf16.msra.mxu0 0
        %2595 = vmatprep.subr.bf16.mxu0 0
        %2596 = vmatpush1.bf16.msra.mxu0 0
        %2597 = vmatprep.subr.bf16.mxu0 0
        %2598 = vmatpush1.bf16.msra.mxu0 0
        %2599 = vmatprep.subr.bf16.mxu0 0
        %2600 = vmatpush1.bf16.msra.mxu0 0
        %2601 = vmatprep.subr.bf16.mxu0 0
        %2602 = vmatpush1.bf16.msra.mxu0 0
        %2603 = vmatprep.subr.bf16.mxu0 0
        %2604 = vmatpush1.bf16.msra.mxu0 0
        %2605 = vmatprep.subr.bf16.mxu0 0
        %2606 = vmatpush1.bf16.msra.mxu0 0
        %2607 = vmatprep.subr.bf16.mxu0 0
        %2608 = vmatpush1.bf16.msra.mxu0 0
        %2609 = vmatprep.mubr.bf16.mxu0 0
        %2610 = vmatmul.mubr.bf16.gmra.mrb[0].mxu0 %v2575
        %v2611 = vpop.f32.mrb[0].mxu0
        %v2612 = vadd.f32 0.0, %v2611
        %v2613 = vpop.f32.mrb[0].mxu0
        %v2614 = vpop.f32.mrb[0].mxu0
        %v2615 = vadd.f32 0.0, %v2614
        %v2616 = vpop.f32.mrb[0].mxu0
        %2617 = vdwg.mxu0
        %2618 = vrot.lane.b32.xlu0 %v762, 64
        %v2619 = vpop.permute.xlu0 %2618
        %v2622 = vsel %vm1638, %v2004, 0
        %2624 = vmatprep.subr.bf16.mxu0 0
        %2625 = vmatpush1.bf16.msra.mxu0 %v2619
        %2626 = vmatprep.subr.bf16.mxu0 0
        %2627 = vmatpush1.bf16.msra.mxu0 0
        %2628 = vmatprep.subr.bf16.mxu0 0
        %2629 = vmatpush1.bf16.msra.mxu0 0
        %2630 = vmatprep.subr.bf16.mxu0 0
        %2631 = vmatpush1.bf16.msra.mxu0 0
        %2632 = vmatprep.subr.bf16.mxu0 0
        %2633 = vmatpush1.bf16.msra.mxu0 0
        %2634 = vmatprep.subr.bf16.mxu0 0
        %2635 = vmatpush1.bf16.msra.mxu0 0
        %2636 = vmatprep.subr.bf16.mxu0 0
        %2637 = vmatpush1.bf16.msra.mxu0 0
        %2638 = vmatprep.subr.bf16.mxu0 0
        %2639 = vmatpush1.bf16.msra.mxu0 0
        %2640 = vmatprep.subr.bf16.mxu0 0
        %2641 = vmatpush1.bf16.msra.mxu0 0
        %2642 = vmatprep.subr.bf16.mxu0 0
        %2643 = vmatpush1.bf16.msra.mxu0 0
        %2644 = vmatprep.subr.bf16.mxu0 0
        %2645 = vmatpush1.bf16.msra.mxu0 0
        %2646 = vmatprep.subr.bf16.mxu0 0
        %2647 = vmatpush1.bf16.msra.mxu0 0
        %2648 = vmatprep.subr.bf16.mxu0 0
        %2649 = vmatpush1.bf16.msra.mxu0 0
        %2650 = vmatprep.subr.bf16.mxu0 0
        %2651 = vmatpush1.bf16.msra.mxu0 0
        %2652 = vmatprep.subr.bf16.mxu0 0
        %2653 = vmatpush1.bf16.msra.mxu0 0
        %2654 = vmatprep.subr.bf16.mxu0 0
        %2655 = vmatpush1.bf16.msra.mxu0 0
        %2656 = vmatprep.mubr.bf16.mxu0 0
        %2657 = vmatmul.mubr.bf16.gmra.mrb[0].mxu0 %v2622
        %v2658 = vpop.f32.mrb[0].mxu0
        %v2659 = vadd.f32 0.0, %v2658
        %v2660 = vpop.f32.mrb[0].mxu0
        %v2661 = vpop.f32.mrb[0].mxu0
        %v2662 = vadd.f32 0.0, %v2661
        %v2663 = vpop.f32.mrb[0].mxu0
        %2664 = vdwg.mxu0
        %2665 = vrot.lane.b32.xlu0 %v763, 64
        %v2666 = vpop.permute.xlu0 %2665
        %v2669 = vsel %vm1638, %v2005, 0
        %2671 = vmatprep.subr.bf16.mxu0 0
        %2672 = vmatpush1.bf16.msra.mxu0 %v2666
        %2673 = vmatprep.subr.bf16.mxu0 0
        %2674 = vmatpush1.bf16.msra.mxu0 0
        %2675 = vmatprep.subr.bf16.mxu0 0
        %2676 = vmatpush1.bf16.msra.mxu0 0
        %2677 = vmatprep.subr.bf16.mxu0 0
        %2678 = vmatpush1.bf16.msra.mxu0 0
        %2679 = vmatprep.subr.bf16.mxu0 0
        %2680 = vmatpush1.bf16.msra.mxu0 0
        %2681 = vmatprep.subr.bf16.mxu0 0
        %2682 = vmatpush1.bf16.msra.mxu0 0
        %2683 = vmatprep.subr.bf16.mxu0 0
        %2684 = vmatpush1.bf16.msra.mxu0 0
        %2685 = vmatprep.subr.bf16.mxu0 0
        %2686 = vmatpush1.bf16.msra.mxu0 0
        %2687 = vmatprep.subr.bf16.mxu0 0
        %2688 = vmatpush1.bf16.msra.mxu0 0
        %2689 = vmatprep.subr.bf16.mxu0 0
        %2690 = vmatpush1.bf16.msra.mxu0 0
        %2691 = vmatprep.subr.bf16.mxu0 0
        %2692 = vmatpush1.bf16.msra.mxu0 0
        %2693 = vmatprep.subr.bf16.mxu0 0
        %2694 = vmatpush1.bf16.msra.mxu0 0
        %2695 = vmatprep.subr.bf16.mxu0 0
        %2696 = vmatpush1.bf16.msra.mxu0 0
        %2697 = vmatprep.subr.bf16.mxu0 0
        %2698 = vmatpush1.bf16.msra.mxu0 0
        %2699 = vmatprep.subr.bf16.mxu0 0
        %2700 = vmatpush1.bf16.msra.mxu0 0
        %2701 = vmatprep.subr.bf16.mxu0 0
        %2702 = vmatpush1.bf16.msra.mxu0 0
        %2703 = vmatprep.mubr.bf16.mxu0 0
        %2704 = vmatmul.mubr.bf16.gmra.mrb[0].mxu0 %v2669
        %v2705 = vpop.f32.mrb[0].mxu0
        %v2706 = vadd.f32 0.0, %v2705
        %v2707 = vpop.f32.mrb[0].mxu0
        %v2708 = vpop.f32.mrb[0].mxu0
        %v2709 = vadd.f32 0.0, %v2708
        %v2710 = vpop.f32.mrb[0].mxu0
        %2711 = vdwg.mxu0
        %2712 = vrot.lane.b32.xlu0 %v764, 64
        %v2713 = vpop.permute.xlu0 %2712
        %v2716 = vsel %vm1638, %v2006, 0
        %2718 = vmatprep.subr.bf16.mxu0 0
        %2719 = vmatpush1.bf16.msra.mxu0 %v2713
        %2720 = vmatprep.subr.bf16.mxu0 0
        %2721 = vmatpush1.bf16.msra.mxu0 0
        %2722 = vmatprep.subr.bf16.mxu0 0
        %2723 = vmatpush1.bf16.msra.mxu0 0
        %2724 = vmatprep.subr.bf16.mxu0 0
        %2725 = vmatpush1.bf16.msra.mxu0 0
        %2726 = vmatprep.subr.bf16.mxu0 0
        %2727 = vmatpush1.bf16.msra.mxu0 0
        %2728 = vmatprep.subr.bf16.mxu0 0
        %2729 = vmatpush1.bf16.msra.mxu0 0
        %2730 = vmatprep.subr.bf16.mxu0 0
        %2731 = vmatpush1.bf16.msra.mxu0 0
        %2732 = vmatprep.subr.bf16.mxu0 0
        %2733 = vmatpush1.bf16.msra.mxu0 0
        %2734 = vmatprep.subr.bf16.mxu0 0
        %2735 = vmatpush1.bf16.msra.mxu0 0
        %2736 = vmatprep.subr.bf16.mxu0 0
        %2737 = vmatpush1.bf16.msra.mxu0 0
        %2738 = vmatprep.subr.bf16.mxu0 0
        %2739 = vmatpush1.bf16.msra.mxu0 0
        %2740 = vmatprep.subr.bf16.mxu0 0
        %2741 = vmatpush1.bf16.msra.mxu0 0
        %2742 = vmatprep.subr.bf16.mxu0 0
        %2743 = vmatpush1.bf16.msra.mxu0 0
        %2744 = vmatprep.subr.bf16.mxu0 0
        %2745 = vmatpush1.bf16.msra.mxu0 0
        %2746 = vmatprep.subr.bf16.mxu0 0
        %2747 = vmatpush1.bf16.msra.mxu0 0
        %2748 = vmatprep.subr.bf16.mxu0 0
        %2749 = vmatpush1.bf16.msra.mxu0 0
        %2750 = vmatprep.mubr.bf16.mxu0 0
        %2751 = vmatmul.mubr.bf16.gmra.mrb[0].mxu0 %v2716
        %v2752 = vpop.f32.mrb[0].mxu0
        %v2753 = vadd.f32 0.0, %v2752
        %v2754 = vpop.f32.mrb[0].mxu0
        %v2755 = vpop.f32.mrb[0].mxu0
        %v2756 = vadd.f32 0.0, %v2755
        %v2757 = vpop.f32.mrb[0].mxu0
        %2758 = vdwg.mxu0
        %2767 = vrot.lane.b32.xlu0 %v2236, 8
        %v2768 = vpop.permute.xlu0 %2767
        %2769 = vrot.lane.b32.xlu0 %v2239, 8
        %v2770 = vpop.permute.xlu0 %2769
        %2771 = vrot.lane.b32.xlu0 %v2283, 8
        %v2772 = vpop.permute.xlu0 %2771
        %2773 = vrot.lane.b32.xlu0 %v2286, 8
        %v2774 = vpop.permute.xlu0 %2773
        %2775 = vrot.lane.b32.xlu0 %v2330, 8
        %v2776 = vpop.permute.xlu0 %2775
        %2777 = vrot.lane.b32.xlu0 %v2333, 8
        %v2778 = vpop.permute.xlu0 %2777
        %2779 = vrot.lane.b32.xlu0 %v2377, 8
        %v2780 = vpop.permute.xlu0 %2779
        %2781 = vrot.lane.b32.xlu0 %v2380, 8
        %v2782 = vpop.permute.xlu0 %2781
        %2799 = vrot.lane.b32.xlu0 %v2424, 16
        %v2800 = vpop.permute.xlu0 %2799
        %2801 = vrot.lane.b32.xlu0 %v2427, 16
        %v2802 = vpop.permute.xlu0 %2801
        %2803 = vrot.lane.b32.xlu0 %v2471, 16
        %v2804 = vpop.permute.xlu0 %2803
        %2805 = vrot.lane.b32.xlu0 %v2474, 16
        %v2806 = vpop.permute.xlu0 %2805
        %2807 = vrot.lane.b32.xlu0 %v2518, 16
        %v2808 = vpop.permute.xlu0 %2807
        %2809 = vrot.lane.b32.xlu0 %v2521, 16
        %v2810 = vpop.permute.xlu0 %2809
        %2811 = vrot.lane.b32.xlu0 %v2565, 16
        %v2812 = vpop.permute.xlu0 %2811
        %2813 = vrot.lane.b32.xlu0 %v2568, 16
        %v2814 = vpop.permute.xlu0 %2813
        %2831 = vrot.lane.b32.xlu0 %v2612, 24
        %v2832 = vpop.permute.xlu0 %2831
        %2833 = vrot.lane.b32.xlu0 %v2615, 24
        %v2834 = vpop.permute.xlu0 %2833
        %2835 = vrot.lane.b32.xlu0 %v2659, 24
        %v2836 = vpop.permute.xlu0 %2835
        %2837 = vrot.lane.b32.xlu0 %v2662, 24
        %v2838 = vpop.permute.xlu0 %2837
        %2839 = vrot.lane.b32.xlu0 %v2706, 24
        %v2840 = vpop.permute.xlu0 %2839
        %2841 = vrot.lane.b32.xlu0 %v2709, 24
        %v2842 = vpop.permute.xlu0 %2841
        %2843 = vrot.lane.b32.xlu0 %v2753, 24
        %v2844 = vpop.permute.xlu0 %2843
        %2845 = vrot.lane.b32.xlu0 %v2756, 24
        %v2846 = vpop.permute.xlu0 %2845
        %v2855 = vsel %vm768, %v2048, %v2768
        %v2856 = vsel %vm768, %v2051, %v2770
        %v2857 = vsel %vm768, %v2095, %v2772
        %v2858 = vsel %vm768, %v2098, %v2774
        %v2859 = vsel %vm768, %v2142, %v2776
        %v2860 = vsel %vm768, %v2145, %v2778
        %v2861 = vsel %vm768, %v2189, %v2780
        %v2862 = vsel %vm768, %v2192, %v2782
        %v2863 = vsel %vm1638, %v2855, %v2800
        %v2864 = vsel %vm1638, %v2856, %v2802
        %v2865 = vsel %vm1638, %v2857, %v2804
        %v2866 = vsel %vm1638, %v2858, %v2806
        %v2867 = vsel %vm1638, %v2859, %v2808
        %v2868 = vsel %vm1638, %v2860, %v2810
        %v2869 = vsel %vm1638, %v2861, %v2812
        %v2870 = vsel %vm1638, %v2862, %v2814
        %vm2871 = vcmask 195584
        %v2872 = vsel %vm2871, %v2863, %v2832
        %v2873 = vsel %vm2871, %v2864, %v2834
        %v2874 = vsel %vm2871, %v2865, %v2836
        %v2875 = vsel %vm2871, %v2866, %v2838
        %v2876 = vsel %vm2871, %v2867, %v2840
        %v2877 = vsel %vm2871, %v2868, %v2842
        %v2878 = vsel %vm2871, %v2869, %v2844
        %v2879 = vsel %vm2871, %v2870, %v2846
        %v2880 = vpack.c.bf16 %v2873, %v2872
        %v2881 = vpack.c.bf16 %v2875, %v2874
        %v2882 = vpack.c.bf16 %v2877, %v2876
        %v2883 = vpack.c.bf16 %v2879, %v2878
        %v2884 = vld [vmem:[#allocation13] sm:$0xf]
        %v2885 = vld [vmem:[#allocation13 + $0x4] sm:$0xf]
        %v2886 = vld [vmem:[#allocation13 + $0x8] sm:$0xf]
        %v2887 = vld [vmem:[#allocation13 + $0xc] sm:$0xf]
        %v2888 = vld [vmem:[#allocation14] sm:$0x1]
        %v2890 = vlaneseq
        %v2891 = vshrl.u32 %v2890, 7
        %v2892 = vsub.s32 0, %v2891
        %v2893 = vrot.slane %v2888, %v2892
        %v2899 = vunpack.c.l.b16 %v2884
        %v2900 = vunpack.c.l.b16 %v2885
        %v2901 = vunpack.c.l.b16 %v2886
        %v2902 = vunpack.c.l.b16 %v2887
        %v2903 = vpack.c.b16 %v2900, %v2899
        %v2904 = vpack.c.b16 %v2902, %v2901
        %v2908 = vsel %vm429, %v2880, 0
        %v2911 = vsel %vm429, %v2881, 0
        %v2914 = vsel %vm429, %v2882, 0
        %v2917 = vsel %vm429, %v2883, 0
        %2919 = vmatprep.subr.bf16.mxu0 0
        %2920 = vmatpush1.bf16.msra.mxu0 %v2903
        %2921 = vmatprep.subr.bf16.mxu0 0
        %2922 = vmatpush1.bf16.msra.mxu0 %v2904
        %2923 = vmatprep.subr.bf16.mxu0 0
        %2924 = vmatpush1.bf16.msra.mxu0 0
        %2925 = vmatprep.subr.bf16.mxu0 0
        %2926 = vmatpush1.bf16.msra.mxu0 0
        %2927 = vmatprep.subr.bf16.mxu0 0
        %2928 = vmatpush1.bf16.msra.mxu0 0
        %2929 = vmatprep.subr.bf16.mxu0 0
        %2930 = vmatpush1.bf16.msra.mxu0 0
        %2931 = vmatprep.subr.bf16.mxu0 0
        %2932 = vmatpush1.bf16.msra.mxu0 0
        %2933 = vmatprep.subr.bf16.mxu0 0
        %2934 = vmatpush1.bf16.msra.mxu0 0
        %2935 = vmatprep.subr.bf16.mxu0 0
        %2936 = vmatpush1.bf16.msra.mxu0 0
        %2937 = vmatprep.subr.bf16.mxu0 0
        %2938 = vmatpush1.bf16.msra.mxu0 0
        %2939 = vmatprep.subr.bf16.mxu0 0
        %2940 = vmatpush1.bf16.msra.mxu0 0
        %2941 = vmatprep.subr.bf16.mxu0 0
        %2942 = vmatpush1.bf16.msra.mxu0 0
        %2943 = vmatprep.subr.bf16.mxu0 0
        %2944 = vmatpush1.bf16.msra.mxu0 0
        %2945 = vmatprep.subr.bf16.mxu0 0
        %2946 = vmatpush1.bf16.msra.mxu0 0
        %2947 = vmatprep.subr.bf16.mxu0 0
        %2948 = vmatpush1.bf16.msra.mxu0 0
        %2949 = vmatprep.subr.bf16.mxu0 0
        %2950 = vmatpush1.bf16.msra.mxu0 0
        %2951 = vmatprep.mubr.bf16.mxu0 0
        %2952 = vmatmul.mubr.bf16.gmra.mrb[0].mxu0 %v2908
        %v2953 = vpop.f32.mrb[0].mxu0
        %v2954 = vadd.f32 %v2893, %v2953
        %v2955 = vpop.f32.mrb[0].mxu0
        %v2956 = vpop.f32.mrb[0].mxu0
        %v2957 = vadd.f32 %v2893, %v2956
        %v2958 = vpop.f32.mrb[0].mxu0
        %2959 = vmatprep.mubr.bf16.mxu0 0
        %2960 = vmatmul.mubr.bf16.gmra.mrb[0].mxu0 %v2911
        %v2961 = vpop.f32.mrb[0].mxu0
        %v2962 = vadd.f32 %v2893, %v2961
        %v2963 = vpop.f32.mrb[0].mxu0
        %v2964 = vpop.f32.mrb[0].mxu0
        %v2965 = vadd.f32 %v2893, %v2964
        %v2966 = vpop.f32.mrb[0].mxu0
        %2967 = vmatprep.mubr.bf16.mxu0 0
        %2968 = vmatmul.mubr.bf16.gmra.mrb[0].mxu0 %v2914
        %v2969 = vpop.f32.mrb[0].mxu0
        %v2970 = vadd.f32 %v2893, %v2969
        %v2971 = vpop.f32.mrb[0].mxu0
        %v2972 = vpop.f32.mrb[0].mxu0
        %v2973 = vadd.f32 %v2893, %v2972
        %v2974 = vpop.f32.mrb[0].mxu0
        %2975 = vmatprep.mubr.bf16.mxu0 0
        %2976 = vmatmul.mubr.bf16.gmra.mrb[0].mxu0 %v2917
        %v2977 = vpop.f32.mrb[0].mxu0
        %v2978 = vadd.f32 %v2893, %v2977
        %v2979 = vpop.f32.mrb[0].mxu0
        %v2980 = vpop.f32.mrb[0].mxu0
        %v2981 = vadd.f32 %v2893, %v2980
        %v2982 = vpop.f32.mrb[0].mxu0
        %2983 = vdwg.mxu0
        %v2984 = vadd.f32 %v421, %v2954
        %v2985 = vadd.f32 %v422, %v2957
        %v2986 = vadd.f32 %v423, %v2962
        %v2987 = vadd.f32 %v424, %v2965
        %v2988 = vadd.f32 %v425, %v2970
        %v2989 = vadd.f32 %v426, %v2973
        %v2990 = vadd.f32 %v427, %v2978
        %v2991 = vadd.f32 %v428, %v2981
        %2992 = vst.msk [vmem:[%s417] sm:$0xff] %vm429, %v2984
        %2993 = vst.msk [vmem:[%s417 + $0x8] sm:$0xff] %vm429, %v2985
        %2994 = vst.msk [vmem:[%s417 + $0x10] sm:$0xff] %vm429, %v2986
        %2995 = vst.msk [vmem:[%s417 + $0x18] sm:$0xff] %vm429, %v2987
        %2996 = vst.msk [vmem:[%s417 + $0x20] sm:$0xff] %vm429, %v2988
        %2997 = vst.msk [vmem:[%s417 + $0x28] sm:$0xff] %vm429, %v2989
        %2998 = vst.msk [vmem:[%s417 + $0x30] sm:$0xff] %vm429, %v2990
        %2999 = vst.msk [vmem:[%s417 + $0x38] sm:$0xff] %vm429, %v2991
        %s3000 = sand.u32 %s210, 1
        %s3001 = scalar_lea.sflag [#allocation4], %s3000
        %s3002 = sand.u32 %s210, 1
        %s3003 = smul.addr %s3002, 64
        %s3004 = scalar_lea.vmem [#allocation16], %s3003
        // Predicated region
        $region85: #{block_forward.2} parent=51 // pred_check
          %p3005 = pneg %p220
        $region86: #{block_forward.2} parent=51 // pred_check_branch
          %3007 = sbr.rel (%p3005) target = $region88
        $region87: #{block_forward.2} parent=51 // pred_region
          %s3008 = smul.u32 8, %s29
          %s3010 = ssub.s32 1024, 1024
          %3011 = vsyncadd %s3001, %s3010
          %s3012 = smul.addr %s3008, 128
          %s3013 = scalar_lea.hbm %s8, %s3012
          %s3014 = sshll.u32 %s3004, 4
          %s3015 = int_to_ptr.vmem [resolvable:$true] %s3014
          %3020 = dma.vmem_to_hbm [thread:$0]  %s3015, 1024, %s3013, %s3001, 128, 128, 8
        $region88: #{block_forward.2} parent=51 // pred_fallthru
          _
      $region52: #{block_forward.2} parent=5 // pred_fallthru
        _
      %p3021 = scmp.le.s32.totalorder 2, %s24
      // Predicated region
      $region89: #{block_forward.2} parent=5 // pred_check
        %p3022 = pneg %p3021
      $region90: #{block_forward.2} parent=5 // pred_check_branch
        %3024 = sbr.rel (%p3022) target = $region92
      $region91: #{block_forward.2} parent=5 // pred_region
        %s3025 = ssub.s32 %s24, 2
        // Predicated region
        $region93: #{block_forward.2} parent=91 // pred_check
          %p3026 = pneg %p226
        $region94: #{block_forward.2} parent=91 // pred_check_branch
          %3028 = sbr.rel (%p3026) target = $region96
        $region95: #{block_forward.2} parent=91 // pred_region
          %s3029 = sand.u32 %s211, 1
          %s3030 = scalar_lea.sflag [#allocation4], %s3029
          %s3031 = sand.u32 %s211, 1
          %s3032 = smul.addr %s3031, 64
          %s3033 = scalar_lea.vmem [#allocation16], %s3032
          %3034 = dma.done %s3030, 1024
        $region96: #{block_forward.2} parent=91 // pred_fallthru
          _
      $region92: #{block_forward.2} parent=5 // pred_fallthru
        _
    $region6: #{block_forward.2} parent=1 // loop_footer
      %s28 = sadd.s32 1, %s24
    $region7: #{block_forward.2} parent=1 // loop_footer_branch
      %23 = sbr.rel target = $region3
    $region8: #{block_forward.2} parent=1 // loop_exit
      _
    %3035 = vsyncpa [#allocation3], 1
    %s3036 = scalar_lea.sflag [#allocation3], 1
    %3037 = vsyncpa %s3036, 1
    %3038 = vsyncpa [#allocation6], 1
    %3039 = vsyncpa [#allocation9], 1
    %3040 = vsyncpa [#allocation12], 1
    %3041 = vsyncpa [#allocation15], 1
    %3042 = vsyncpa [#allocation4], 1
    %s3043 = scalar_lea.sflag [#allocation4], 1
    %3044 = vsyncpa %s3043, 1

</llo_original>
